<compile_context>
chip_gen: v6e
topology: v6e:2x2x1
jax: 0.10.0
libtpu: 0.0.40
codegen_flags: <defaults>
</compile_context>

<pallas_src>
import math
from functools import partial

import jax
import jax.numpy as jnp
from jax.experimental import pallas as pl
from jax.experimental.pallas import tpu as pltpu


def _round_up(x, m):
    return (x + m - 1) // m * m


def _bottleneck_kernel(H, W,
                       x_ref, w1_ref, b1_ref, w2_ref, b2_ref, w3_ref, b3_ref,
                       out_ref, pad_ref):
    # One image. x_ref: (H*W, Cp) bf16; out_ref: (H*W, Cp) bf16.
    # All channel dims are padded to multiples of 128; BN scales are pre-folded into
    # the weight columns, so only bias + relu epilogues remain here.
    HW = H * W
    Wp = w1_ref.shape[1]                    # padded bottleneck width

    x = x_ref[...]                          # (HW, Cp) bf16

    # ---- conv1 (1x1, BN-folded) + bias + relu ----
    h1 = jnp.dot(x, w1_ref[...], preferred_element_type=jnp.float32)
    h1 = jnp.maximum(h1 + b1_ref[...], 0.0)
    h1_img = h1.astype(jnp.bfloat16).reshape(H, W, Wp)

    # ---- stage h1 into the zero-padded (H+2, W+2, Wp) VMEM scratch with a single
    #      contiguous, unmasked full-slab store (halo built in registers) ----
    zrow = jnp.zeros((1, W + 2, Wp), jnp.bfloat16)
    zcol = jnp.zeros((H, 1, Wp), jnp.bfloat16)
    mid = jnp.concatenate([zcol, h1_img, zcol], axis=1)          # (H, W+2, Wp)
    pad_ref[...] = jnp.concatenate([zrow, mid, zrow], axis=0)    # (H+2, W+2, Wp)

    # ---- conv2 (3x3, padding=1, BN-folded): 9 accumulated MXU dots, no im2col ----
    acc = None
    for t in range(9):
        ky, kx = t // 3, t % 3
        lhs = pad_ref[ky:ky + H, kx:kx + W, :].reshape(HW, Wp)   # shifted window
        d = jnp.dot(lhs, w2_ref[t], preferred_element_type=jnp.float32)
        acc = d if acc is None else acc + d
    h2 = jnp.maximum(acc + b2_ref[...], 0.0)

    # F.dropout(p=0.1, training=False) -> identity in eval mode.

    # ---- conv3 (1x1, BN-folded) + bias ----
    h3 = jnp.dot(h2.astype(jnp.bfloat16), w3_ref[...],
                 preferred_element_type=jnp.float32)
    h3 = h3 + b3_ref[...]

    # ---- identity residual + relu; bf16 lane-dense output ----
    out_ref[...] = jnp.maximum(h3 + x.astype(jnp.float32), 0.0).astype(out_ref.dtype)


def resnet_bottleneck_forward_nhwc(x_nhwc, params):
    """x_nhwc: (N, H, W, Cin) float. Returns (N, H, W, Cout) bfloat16."""
    N, H, W, Cin = x_nhwc.shape
    Cout = params["cout"]
    assert Cin == params["cin"]
    assert Cout == Cin, "identity residual requires inplanes == planes * expansion"
    Cin_pad, Wp = params["w1"].shape
    Cout_pad = params["w3"].shape[1]
    HW = H * W

    # Zero-pad the input channels to the lane-dense width (padded lanes stay zero).
    x_flat = x_nhwc.astype(jnp.bfloat16).reshape(N, HW, Cin)
    x_flat = jnp.pad(x_flat, ((0, 0), (0, 0), (0, Cin_pad - Cin)))

    def _resident(arr):  # constant block index -> stays VMEM-resident across grid steps
        if arr.ndim == 2:
            return pl.BlockSpec(arr.shape, lambda n: (0, 0))
        return pl.BlockSpec(arr.shape, lambda n: (0, 0, 0))

    # VMEM budget derived from actual tile sizes (double-buffered I/O + weights +
    # halo scratch + f32 working set), with headroom; capped at v7x's 64 MiB/TC.
    bf = 2
    need = (2 * HW * Cin_pad * bf                                  # x (2 bufs)
            + 2 * HW * Cout_pad * bf                               # out (2 bufs)
            + 2 * (Cin_pad * Wp + 9 * Wp * Wp + Wp * Cout_pad) * bf  # weights (2 bufs)
            + 2 * (2 * Wp + Cout_pad) * 4                          # biases
            + (H + 2) * (W + 2) * Wp * bf                          # halo scratch
            + 4 * HW * Wp * 4)                                     # f32 live values
    vmem_limit = min(max(2 * need, 32 * 1024 * 1024), 64 * 1024 * 1024)

    kernel = partial(_bottleneck_kernel, H, W)
    out_flat = pl.pallas_call(
        kernel,
        out_shape=jax.ShapeDtypeStruct((N, HW, Cout_pad), jnp.bfloat16),
        grid=(N,),
        in_specs=[
            pl.BlockSpec((None, HW, Cin_pad), lambda n: (n, 0, 0)),
            _resident(params["w1"]), _resident(params["b1"]),
            _resident(params["w2"]), _resident(params["b2"]),
            _resident(params["w3"]), _resident(params["b3"]),
        ],
        out_specs=pl.BlockSpec((None, HW, Cout_pad), lambda n: (n, 0, 0)),
        scratch_shapes=[pltpu.VMEM((H + 2, W + 2, Wp), jnp.bfloat16)],
        compiler_params=pltpu.CompilerParams(
            dimension_semantics=("parallel",),
            vmem_limit_bytes=vmem_limit,
        ),
    )(x_flat, params["w1"], params["b1"], params["w2"], params["b2"],
      params["w3"], params["b3"])

    return out_flat.reshape(N, H, W, Cout_pad)[:, :, :, :Cout]


def resnet_bottleneck_forward(x_nchw, params):
    """PyTorch-parity NCHW entry point (layout round-trip only; output is bf16)."""
    x_nhwc = jnp.transpose(x_nchw, (0, 2, 3, 1))
    out_nhwc = resnet_bottleneck_forward_nhwc(x_nhwc, params)
    return jnp.transpose(out_nhwc, (0, 3, 1, 2))


def reference_forward(x_nchw, params):
    """Pure-JAX reference using the SAME folded-BN bf16 weights / rounding points."""
    N, Cin, H, W = x_nchw.shape
    width, Cout = params["width"], params["cout"]
    w1 = params["w1"][:Cin, :width]
    w2 = params["w2"][:, :width, :width].reshape(3, 3, width, width)   # HWIO
    w3 = params["w3"][:width, :Cout]
    b1 = params["b1"][:, :width]
    b2 = params["b2"][:, :width]
    b3 = params["b3"][:, :Cout]

    x = jnp.transpose(x_nchw, (0, 2, 3, 1)).astype(jnp.bfloat16)       # NHWC
    h1 = jnp.dot(x.reshape(-1, Cin), w1, preferred_element_type=jnp.float32)
    h1 = jnp.maximum(h1 + b1, 0.0).astype(jnp.bfloat16).reshape(N, H, W, width)

    h2 = jax.lax.conv_general_dilated(
        h1, w2, window_strides=(1, 1), padding="SAME",
        dimension_numbers=("NHWC", "HWIO", "NHWC"),
        preferred_element_type=jnp.float32)
    h2 = jnp.maximum(h2.reshape(-1, width) + b2, 0.0)

    h3 = jnp.dot(h2.astype(jnp.bfloat16), w3, preferred_element_type=jnp.float32) + b3
    out = jnp.maximum(h3 + x.reshape(-1, Cin).astype(jnp.float32), 0.0)
    return jnp.transpose(out.reshape(N, H, W, Cout), (0, 3, 1, 2))


def init_params(key, inplanes, planes, base_width=64, groups=1, nontrivial_bn=False):
    width = int(planes * (base_width / 64.0)) * groups
    outc = planes * 4  # expansion = 4
    keys = jax.random.split(key, 16)

    def xavier(k, out_ch, in_ch, kh, kw):
        # matches nn.init.xavier_uniform_ fan computation for Conv2d weights
        a = math.sqrt(6.0 / (in_ch * kh * kw + out_ch * kh * kw))
        return jax.random.uniform(k, (out_ch, in_ch, kh, kw), jnp.float32, -a, a)

    w1_oihw = xavier(keys[0], width, inplanes, 1, 1)   # conv1 (O,I,1,1)
    w2_oihw = xavier(keys[1], width, width, 3, 3)      # conv2 (O,I,3,3)
    w3_oihw = xavier(keys[2], outc, width, 1, 1)       # conv3 (O,I,1,1)

    eps = 1e-5

    def bn_fold(c, kidx, gamma_const):
        if nontrivial_bn:
            gamma = jax.random.uniform(keys[kidx], (c,), jnp.float32, 0.5, 1.5)
            beta = 0.1 * jax.random.normal(keys[kidx + 1], (c,), jnp.float32)
            mean = 0.1 * jax.random.normal(keys[kidx + 2], (c,), jnp.float32)
            var = jax.random.uniform(keys[kidx + 3], (c,), jnp.float32, 0.5, 1.5)
        else:
            gamma = jnp.full((c,), gamma_const, jnp.float32)
            beta = jnp.zeros((c,), jnp.float32)
            mean = jnp.zeros((c,), jnp.float32)
            var = jnp.ones((c,), jnp.float32)
        scale = gamma / jnp.sqrt(var + eps)
        bias = beta - mean * scale
        return scale, bias

    s1, b1 = bn_fold(width, 3, 1.0)
    s2, b2 = bn_fold(width, 7, 1.0)
    # init_weights(): nn.init.constant_(bn3.weight, 0) -> gamma3 = 0
    s3, b3 = bn_fold(outc, 11, 0.0)

    # Lane-dense padded dims (multiples of 128); BN scales folded into weight columns
    # in f32, then cast to bf16, then zero-padded (padded bias lanes are zero).
    cin_p = _round_up(inplanes, 128)
    wid_p = _round_up(width, 128)
    out_p = _round_up(outc, 128)

    def pad_to(a, shape):
        return jnp.pad(a, [(0, t - s) for s, t in zip(a.shape, shape)])

    w1 = pad_to((w1_oihw[:, :, 0, 0].T * s1[None, :]).astype(jnp.bfloat16),
                (cin_p, wid_p))                                       # (Cin_p, Wp)
    w2_hwio = jnp.transpose(w2_oihw, (2, 3, 1, 0)) * s2[None, None, None, :]
    w2 = pad_to(w2_hwio.astype(jnp.bfloat16).reshape(9, width, width),
                (9, wid_p, wid_p))                                    # (9, Wp, Wp)
    w3 = pad_to((w3_oihw[:, :, 0, 0].T * s3[None, :]).astype(jnp.bfloat16),
                (wid_p, out_p))                                       # (Wp, Cout_p)

    b1p = pad_to(b1.reshape(1, width), (1, wid_p))
    b2p = pad_to(b2.reshape(1, width), (1, wid_p))
    b3p = pad_to(b3.reshape(1, outc), (1, out_p))

    return dict(w1=w1, b1=b1p, w2=w2, b2=b2p, w3=w3, b3=b3p,
                cin=inplanes, width=width, cout=outc)


if __name__ == "__main__":
    key = jax.random.PRNGKey(0)
    kx, kp, kv = jax.random.split(key, 3)

    # planes * expansion == inplanes so the identity residual add is valid
    inplanes, planes = 32, 8
    N, H, W = 2, 16, 16

    x = jax.random.normal(kx, (N, inplanes, H, W), jnp.float32)

    # Correctness check with NON-trivial BN folds (module-default gamma3=0 zeroes the
    # main branch, which would make the check vacuous).
    params_chk = init_params(kv, inplanes, planes, nontrivial_bn=True)
    out_k = resnet_bottleneck_forward(x, params_chk).astype(jnp.float32)
    out_r = reference_forward(x, params_chk)
    max_err = float(jnp.max(jnp.abs(out_k - out_r)))
    assert out_k.shape == (N, planes * 4, H, W)
    assert max_err < 0.15, f"kernel vs reference mismatch: max abs err {max_err}"

    # Module-default init (matches PyTorch init_weights) — the "official" run.
    params = init_params(kp, inplanes, planes)
    out = jax.block_until_ready(resnet_bottleneck_forward(x, params))
    assert out.shape == (N, planes * 4, H, W)
    assert bool(jnp.all(jnp.isfinite(out.astype(jnp.float32))))
    print("KERNEL_OK")
</pallas_src>

<mosaic_0001>
module attributes {stable_mosaic.version = 11 : i64} {
  func.func @_bottleneck_kernel(%arg0: i32, %arg1: memref<1x256x128xbf16, #tpu.memory_space<vmem>>, %arg2: memref<128x128xbf16, #tpu.memory_space<vmem>>, %arg3: memref<1x128xf32, #tpu.memory_space<vmem>>, %arg4: memref<9x128x128xbf16, #tpu.memory_space<vmem>>, %arg5: memref<1x128xf32, #tpu.memory_space<vmem>>, %arg6: memref<128x128xbf16, #tpu.memory_space<vmem>>, %arg7: memref<1x128xf32, #tpu.memory_space<vmem>>, %arg8: memref<1x256x128xbf16, #tpu.memory_space<vmem>>, %arg9: memref<18x18x128xbf16, #tpu.memory_space<vmem>>) attributes {dimension_semantics = [#tpu.dimension_semantics<parallel>], iteration_bounds = array<i64: 2>, scalar_prefetch = 0 : i64, scratch_operands = 1 : i64, tpu.core_type = #tpu.core_type<tc>, window_params = [{transform_indices = @transform_0, window_bounds = array<i64: 1, 256, 128>}, {pipeline_mode = #tpu.pipeline_mode<synchronous>, transform_indices = @transform_1, window_bounds = array<i64: 128, 128>}, {pipeline_mode = #tpu.pipeline_mode<synchronous>, transform_indices = @transform_2, window_bounds = array<i64: 1, 128>}, {pipeline_mode = #tpu.pipeline_mode<synchronous>, transform_indices = @transform_3, window_bounds = array<i64: 9, 128, 128>}, {pipeline_mode = #tpu.pipeline_mode<synchronous>, transform_indices = @transform_4, window_bounds = array<i64: 1, 128>}, {pipeline_mode = #tpu.pipeline_mode<synchronous>, transform_indices = @transform_5, window_bounds = array<i64: 128, 128>}, {pipeline_mode = #tpu.pipeline_mode<synchronous>, transform_indices = @transform_6, window_bounds = array<i64: 1, 128>}, {transform_indices = @transform_7, window_bounds = array<i64: 1, 256, 128>}]} {
    %c0 = arith.constant 0 : index
    %c0_0 = arith.constant 0 : index
    %c0_1 = arith.constant 0 : index
    %0 = vector.load %arg1[%c0, %c0_0, %c0_1] : memref<1x256x128xbf16, #tpu.memory_space<vmem>>, vector<1x256x128xbf16>
    %1 = vector.shape_cast %0 : vector<1x256x128xbf16> to vector<256x128xbf16>
    %c0_2 = arith.constant 0 : index
    %c0_3 = arith.constant 0 : index
    %2 = vector.load %arg2[%c0_2, %c0_3] : memref<128x128xbf16, #tpu.memory_space<vmem>>, vector<128x128xbf16>
    %cst = arith.constant dense<0.000000e+00> : vector<256x128xf32>
    %3 = tpu.matmul %1, %2, %cst {dimension_numbers = #tpu.dot_dimension_numbers<[1], [0], [0], [1], [0, 0, 1, 1], [], []>} : vector<256x128xbf16>, vector<128x128xbf16>, vector<256x128xf32> -> vector<256x128xf32>
    %c0_4 = arith.constant 0 : index
    %c0_5 = arith.constant 0 : index
    %4 = vector.load %arg3[%c0_4, %c0_5] : memref<1x128xf32, #tpu.memory_space<vmem>>, vector<1x128xf32>
    %5 = vector.broadcast %4 : vector<1x128xf32> to vector<256x128xf32>
    %6 = arith.addf %3, %5 : vector<256x128xf32>
    %cst_6 = arith.constant 0.000000e+00 : f32
    %7 = vector.broadcast %cst_6 : f32 to vector<256x128xf32>
    %8 = arith.maximumf %6, %7 : vector<256x128xf32>
    %9 = arith.truncf %8 : vector<256x128xf32> to vector<256x128xbf16>
    %10 = vector.shape_cast %9 : vector<256x128xbf16> to vector<16x16x128xbf16>
    %cst_7 = arith.constant 0.000000e+00 : bf16
    %11 = vector.broadcast %cst_7 : bf16 to vector<1x18x128xbf16>
    %cst_8 = arith.constant 0.000000e+00 : bf16
    %12 = vector.broadcast %cst_8 : bf16 to vector<16x1x128xbf16>
    %13 = tpu.concatenate %12, %10, %12 in 1 : vector<16x1x128xbf16>, vector<16x16x128xbf16>, vector<16x1x128xbf16> -> vector<16x18x128xbf16>
    %14 = tpu.concatenate %11, %13, %11 in 0 : vector<1x18x128xbf16>, vector<16x18x128xbf16>, vector<1x18x128xbf16> -> vector<18x18x128xbf16>
    %c0_9 = arith.constant 0 : index
    %c0_10 = arith.constant 0 : index
    %c0_11 = arith.constant 0 : index
    %15 = vector.load %arg9[%c0_9, %c0_10, %c0_11] : memref<18x18x128xbf16, #tpu.memory_space<vmem>>, vector<18x18x128xbf16>
    tpu.vector_store %arg9[%c0_9, %c0_10, %c0_11], %14 {strides = array<i32>} : memref<18x18x128xbf16, #tpu.memory_space<vmem>>, vector<18x18x128xbf16>,
    %c0_12 = arith.constant 0 : index
    %c0_13 = arith.constant 0 : index
    %c0_14 = arith.constant 0 : index
    %16 = vector.load %arg9[%c0_12, %c0_13, %c0_14] : memref<18x18x128xbf16, #tpu.memory_space<vmem>>, vector<16x16x128xbf16>
    %17 = vector.shape_cast %16 : vector<16x16x128xbf16> to vector<256x128xbf16>
    %c0_15 = arith.constant 0 : index
    %c0_16 = arith.constant 0 : index
    %c0_17 = arith.constant 0 : index
    %18 = vector.load %arg4[%c0_15, %c0_16, %c0_17] : memref<9x128x128xbf16, #tpu.memory_space<vmem>>, vector<1x128x128xbf16>
    %19 = vector.shape_cast %18 : vector<1x128x128xbf16> to vector<128x128xbf16>
    %cst_18 = arith.constant dense<0.000000e+00> : vector<256x128xf32>
    %20 = tpu.matmul %17, %19, %cst_18 {dimension_numbers = #tpu.dot_dimension_numbers<[1], [0], [0], [1], [0, 0, 1, 1], [], []>} : vector<256x128xbf16>, vector<128x128xbf16>, vector<256x128xf32> -> vector<256x128xf32>
    %c0_19 = arith.constant 0 : index
    %c1 = arith.constant 1 : index
    %c0_20 = arith.constant 0 : index
    %21 = vector.load %arg9[%c0_19, %c1, %c0_20] : memref<18x18x128xbf16, #tpu.memory_space<vmem>>, vector<16x16x128xbf16>
    %22 = vector.shape_cast %21 : vector<16x16x128xbf16> to vector<256x128xbf16>
    %c1_21 = arith.constant 1 : index
    %c0_22 = arith.constant 0 : index
    %c0_23 = arith.constant 0 : index
    %23 = vector.load %arg4[%c1_21, %c0_22, %c0_23] : memref<9x128x128xbf16, #tpu.memory_space<vmem>>, vector<1x128x128xbf16>
    %24 = vector.shape_cast %23 : vector<1x128x128xbf16> to vector<128x128xbf16>
    %cst_24 = arith.constant dense<0.000000e+00> : vector<256x128xf32>
    %25 = tpu.matmul %22, %24, %cst_24 {dimension_numbers = #tpu.dot_dimension_numbers<[1], [0], [0], [1], [0, 0, 1, 1], [], []>} : vector<256x128xbf16>, vector<128x128xbf16>, vector<256x128xf32> -> vector<256x128xf32>
    %26 = arith.addf %20, %25 : vector<256x128xf32>
    %c0_25 = arith.constant 0 : index
    %c2 = arith.constant 2 : index
    %c0_26 = arith.constant 0 : index
    %27 = vector.load %arg9[%c0_25, %c2, %c0_26] : memref<18x18x128xbf16, #tpu.memory_space<vmem>>, vector<16x16x128xbf16>
    %28 = vector.shape_cast %27 : vector<16x16x128xbf16> to vector<256x128xbf16>
    %c2_27 = arith.constant 2 : index
    %c0_28 = arith.constant 0 : index
    %c0_29 = arith.constant 0 : index
    %29 = vector.load %arg4[%c2_27, %c0_28, %c0_29] : memref<9x128x128xbf16, #tpu.memory_space<vmem>>, vector<1x128x128xbf16>
    %30 = vector.shape_cast %29 : vector<1x128x128xbf16> to vector<128x128xbf16>
    %cst_30 = arith.constant dense<0.000000e+00> : vector<256x128xf32>
    %31 = tpu.matmul %28, %30, %cst_30 {dimension_numbers = #tpu.dot_dimension_numbers<[1], [0], [0], [1], [0, 0, 1, 1], [], []>} : vector<256x128xbf16>, vector<128x128xbf16>, vector<256x128xf32> -> vector<256x128xf32>
    %32 = arith.addf %26, %31 : vector<256x128xf32>
    %c1_31 = arith.constant 1 : index
    %c0_32 = arith.constant 0 : index
    %c0_33 = arith.constant 0 : index
    %33 = vector.load %arg9[%c1_31, %c0_32, %c0_33] : memref<18x18x128xbf16, #tpu.memory_space<vmem>>, vector<16x16x128xbf16>
    %34 = vector.shape_cast %33 : vector<16x16x128xbf16> to vector<256x128xbf16>
    %c3 = arith.constant 3 : index
    %c0_34 = arith.constant 0 : index
    %c0_35 = arith.constant 0 : index
    %35 = vector.load %arg4[%c3, %c0_34, %c0_35] : memref<9x128x128xbf16, #tpu.memory_space<vmem>>, vector<1x128x128xbf16>
    %36 = vector.shape_cast %35 : vector<1x128x128xbf16> to vector<128x128xbf16>
    %cst_36 = arith.constant dense<0.000000e+00> : vector<256x128xf32>
    %37 = tpu.matmul %34, %36, %cst_36 {dimension_numbers = #tpu.dot_dimension_numbers<[1], [0], [0], [1], [0, 0, 1, 1], [], []>} : vector<256x128xbf16>, vector<128x128xbf16>, vector<256x128xf32> -> vector<256x128xf32>
    %38 = arith.addf %32, %37 : vector<256x128xf32>
    %c1_37 = arith.constant 1 : index
    %c1_38 = arith.constant 1 : index
    %c0_39 = arith.constant 0 : index
    %39 = vector.load %arg9[%c1_37, %c1_38, %c0_39] : memref<18x18x128xbf16, #tpu.memory_space<vmem>>, vector<16x16x128xbf16>
    %40 = vector.shape_cast %39 : vector<16x16x128xbf16> to vector<256x128xbf16>
    %c4 = arith.constant 4 : index
    %c0_40 = arith.constant 0 : index
    %c0_41 = arith.constant 0 : index
    %41 = vector.load %arg4[%c4, %c0_40, %c0_41] : memref<9x128x128xbf16, #tpu.memory_space<vmem>>, vector<1x128x128xbf16>
    %42 = vector.shape_cast %41 : vector<1x128x128xbf16> to vector<128x128xbf16>
    %cst_42 = arith.constant dense<0.000000e+00> : vector<256x128xf32>
    %43 = tpu.matmul %40, %42, %cst_42 {dimension_numbers = #tpu.dot_dimension_numbers<[1], [0], [0], [1], [0, 0, 1, 1], [], []>} : vector<256x128xbf16>, vector<128x128xbf16>, vector<256x128xf32> -> vector<256x128xf32>
    %44 = arith.addf %38, %43 : vector<256x128xf32>
    %c1_43 = arith.constant 1 : index
    %c2_44 = arith.constant 2 : index
    %c0_45 = arith.constant 0 : index
    %45 = vector.load %arg9[%c1_43, %c2_44, %c0_45] : memref<18x18x128xbf16, #tpu.memory_space<vmem>>, vector<16x16x128xbf16>
    %46 = vector.shape_cast %45 : vector<16x16x128xbf16> to vector<256x128xbf16>
    %c5 = arith.constant 5 : index
    %c0_46 = arith.constant 0 : index
    %c0_47 = arith.constant 0 : index
    %47 = vector.load %arg4[%c5, %c0_46, %c0_47] : memref<9x128x128xbf16, #tpu.memory_space<vmem>>, vector<1x128x128xbf16>
    %48 = vector.shape_cast %47 : vector<1x128x128xbf16> to vector<128x128xbf16>
    %cst_48 = arith.constant dense<0.000000e+00> : vector<256x128xf32>
    %49 = tpu.matmul %46, %48, %cst_48 {dimension_numbers = #tpu.dot_dimension_numbers<[1], [0], [0], [1], [0, 0, 1, 1], [], []>} : vector<256x128xbf16>, vector<128x128xbf16>, vector<256x128xf32> -> vector<256x128xf32>
    %50 = arith.addf %44, %49 : vector<256x128xf32>
    %c2_49 = arith.constant 2 : index
    %c0_50 = arith.constant 0 : index
    %c0_51 = arith.constant 0 : index
    %51 = vector.load %arg9[%c2_49, %c0_50, %c0_51] : memref<18x18x128xbf16, #tpu.memory_space<vmem>>, vector<16x16x128xbf16>
    %52 = vector.shape_cast %51 : vector<16x16x128xbf16> to vector<256x128xbf16>
    %c6 = arith.constant 6 : index
    %c0_52 = arith.constant 0 : index
    %c0_53 = arith.constant 0 : index
    %53 = vector.load %arg4[%c6, %c0_52, %c0_53] : memref<9x128x128xbf16, #tpu.memory_space<vmem>>, vector<1x128x128xbf16>
    %54 = vector.shape_cast %53 : vector<1x128x128xbf16> to vector<128x128xbf16>
    %cst_54 = arith.constant dense<0.000000e+00> : vector<256x128xf32>
    %55 = tpu.matmul %52, %54, %cst_54 {dimension_numbers = #tpu.dot_dimension_numbers<[1], [0], [0], [1], [0, 0, 1, 1], [], []>} : vector<256x128xbf16>, vector<128x128xbf16>, vector<256x128xf32> -> vector<256x128xf32>
    %56 = arith.addf %50, %55 : vector<256x128xf32>
    %c2_55 = arith.constant 2 : index
    %c1_56 = arith.constant 1 : index
    %c0_57 = arith.constant 0 : index
    %57 = vector.load %arg9[%c2_55, %c1_56, %c0_57] : memref<18x18x128xbf16, #tpu.memory_space<vmem>>, vector<16x16x128xbf16>
    %58 = vector.shape_cast %57 : vector<16x16x128xbf16> to vector<256x128xbf16>
    %c7 = arith.constant 7 : index
    %c0_58 = arith.constant 0 : index
    %c0_59 = arith.constant 0 : index
    %59 = vector.load %arg4[%c7, %c0_58, %c0_59] : memref<9x128x128xbf16, #tpu.memory_space<vmem>>, vector<1x128x128xbf16>
    %60 = vector.shape_cast %59 : vector<1x128x128xbf16> to vector<128x128xbf16>
    %cst_60 = arith.constant dense<0.000000e+00> : vector<256x128xf32>
    %61 = tpu.matmul %58, %60, %cst_60 {dimension_numbers = #tpu.dot_dimension_numbers<[1], [0], [0], [1], [0, 0, 1, 1], [], []>} : vector<256x128xbf16>, vector<128x128xbf16>, vector<256x128xf32> -> vector<256x128xf32>
    %62 = arith.addf %56, %61 : vector<256x128xf32>
    %c2_61 = arith.constant 2 : index
    %c2_62 = arith.constant 2 : index
    %c0_63 = arith.constant 0 : index
    %63 = vector.load %arg9[%c2_61, %c2_62, %c0_63] : memref<18x18x128xbf16, #tpu.memory_space<vmem>>, vector<16x16x128xbf16>
    %64 = vector.shape_cast %63 : vector<16x16x128xbf16> to vector<256x128xbf16>
    %c8 = arith.constant 8 : index
    %c0_64 = arith.constant 0 : index
    %c0_65 = arith.constant 0 : index
    %65 = vector.load %arg4[%c8, %c0_64, %c0_65] : memref<9x128x128xbf16, #tpu.memory_space<vmem>>, vector<1x128x128xbf16>
    %66 = vector.shape_cast %65 : vector<1x128x128xbf16> to vector<128x128xbf16>
    %cst_66 = arith.constant dense<0.000000e+00> : vector<256x128xf32>
    %67 = tpu.matmul %64, %66, %cst_66 {dimension_numbers = #tpu.dot_dimension_numbers<[1], [0], [0], [1], [0, 0, 1, 1], [], []>} : vector<256x128xbf16>, vector<128x128xbf16>, vector<256x128xf32> -> vector<256x128xf32>
    %68 = arith.addf %62, %67 : vector<256x128xf32>
    %c0_67 = arith.constant 0 : index
    %c0_68 = arith.constant 0 : index
    %69 = vector.load %arg5[%c0_67, %c0_68] : memref<1x128xf32, #tpu.memory_space<vmem>>, vector<1x128xf32>
    %70 = vector.broadcast %69 : vector<1x128xf32> to vector<256x128xf32>
    %71 = arith.addf %68, %70 : vector<256x128xf32>
    %cst_69 = arith.constant 0.000000e+00 : f32
    %72 = vector.broadcast %cst_69 : f32 to vector<256x128xf32>
    %73 = arith.maximumf %71, %72 : vector<256x128xf32>
    %74 = arith.truncf %73 : vector<256x128xf32> to vector<256x128xbf16>
    %c0_70 = arith.constant 0 : index
    %c0_71 = arith.constant 0 : index
    %75 = vector.load %arg6[%c0_70, %c0_71] : memref<128x128xbf16, #tpu.memory_space<vmem>>, vector<128x128xbf16>
    %cst_72 = arith.constant dense<0.000000e+00> : vector<256x128xf32>
    %76 = tpu.matmul %74, %75, %cst_72 {dimension_numbers = #tpu.dot_dimension_numbers<[1], [0], [0], [1], [0, 0, 1, 1], [], []>} : vector<256x128xbf16>, vector<128x128xbf16>, vector<256x128xf32> -> vector<256x128xf32>
    %c0_73 = arith.constant 0 : index
    %c0_74 = arith.constant 0 : index
    %77 = vector.load %arg7[%c0_73, %c0_74] : memref<1x128xf32, #tpu.memory_space<vmem>>, vector<1x128xf32>
    %78 = vector.broadcast %77 : vector<1x128xf32> to vector<256x128xf32>
    %79 = arith.addf %76, %78 : vector<256x128xf32>
    %80 = arith.extf %1 : vector<256x128xbf16> to vector<256x128xf32>
    %81 = arith.addf %79, %80 : vector<256x128xf32>
    %cst_75 = arith.constant 0.000000e+00 : f32
    %82 = vector.broadcast %cst_75 : f32 to vector<256x128xf32>
    %83 = arith.maximumf %81, %82 : vector<256x128xf32>
    %84 = arith.truncf %83 : vector<256x128xf32> to vector<256x128xbf16>
    %c0_76 = arith.constant 0 : index
    %c0_77 = arith.constant 0 : index
    %c0_78 = arith.constant 0 : index
    %85 = vector.load %arg8[%c0_76, %c0_77, %c0_78] : memref<1x256x128xbf16, #tpu.memory_space<vmem>>, vector<1x256x128xbf16>
    %86 = vector.shape_cast %85 : vector<1x256x128xbf16> to vector<256x128xbf16>
    %87 = vector.shape_cast %84 : vector<256x128xbf16> to vector<1x256x128xbf16>
    tpu.vector_store %arg8[%c0_76, %c0_77, %c0_78], %87 {strides = array<i32>} : memref<1x256x128xbf16, #tpu.memory_space<vmem>>, vector<1x256x128xbf16>,
    return
  }
  func.func @transform_0(%arg0: i32) -> (i32, i32, i32) {
    %c0_i32 = arith.constant 0 : i32
    %c0_i32_0 = arith.constant 0 : i32
    %c0_i32_1 = arith.constant 0 : i32
    return %arg0, %c0_i32, %c0_i32_0 : i32, i32, i32
  }
  func.func @transform_1(%arg0: i32) -> (i32, i32) {
    %c0_i32 = arith.constant 0 : i32
    %c0_i32_0 = arith.constant 0 : i32
    %c0_i32_1 = arith.constant 0 : i32
    return %c0_i32, %c0_i32_0 : i32, i32
  }
  func.func @transform_2(%arg0: i32) -> (i32, i32) {
    %c0_i32 = arith.constant 0 : i32
    %c0_i32_0 = arith.constant 0 : i32
    %c0_i32_1 = arith.constant 0 : i32
    return %c0_i32, %c0_i32_0 : i32, i32
  }
  func.func @transform_3(%arg0: i32) -> (i32, i32, i32) {
    %c0_i32 = arith.constant 0 : i32
    %c0_i32_0 = arith.constant 0 : i32
    %c0_i32_1 = arith.constant 0 : i32
    %c0_i32_2 = arith.constant 0 : i32
    return %c0_i32, %c0_i32_0, %c0_i32_1 : i32, i32, i32
  }
  func.func @transform_4(%arg0: i32) -> (i32, i32) {
    %c0_i32 = arith.constant 0 : i32
    %c0_i32_0 = arith.constant 0 : i32
    %c0_i32_1 = arith.constant 0 : i32
    return %c0_i32, %c0_i32_0 : i32, i32
  }
  func.func @transform_5(%arg0: i32) -> (i32, i32) {
    %c0_i32 = arith.constant 0 : i32
    %c0_i32_0 = arith.constant 0 : i32
    %c0_i32_1 = arith.constant 0 : i32
    return %c0_i32, %c0_i32_0 : i32, i32
  }
  func.func @transform_6(%arg0: i32) -> (i32, i32) {
    %c0_i32 = arith.constant 0 : i32
    %c0_i32_0 = arith.constant 0 : i32
    %c0_i32_1 = arith.constant 0 : i32
    return %c0_i32, %c0_i32_0 : i32, i32
  }
  func.func @transform_7(%arg0: i32) -> (i32, i32, i32) {
    %c0_i32 = arith.constant 0 : i32
    %c0_i32_0 = arith.constant 0 : i32
    %c0_i32_1 = arith.constant 0 : i32
    return %arg0, %c0_i32, %c0_i32_0 : i32, i32, i32
  }
}

</mosaic_0001>

<llo_original>
// kernel: tpu_custom_call.1
$region0: #{tpu_custom_call.1}
  #allocation0 [shape = 'u32[]', space=smem, size = 0x4, offset = 0x4, fixed_abs, tag = 'smem constant byte address 0x4 - core index']
  #allocation1 [shape = 'u32[144,128]{1,0:T(1,128)}', space=vmem, size = 0x12000, scoped, tag = 'internal scratch']
  #allocation2 [shape = 'bf16[18,18,128]{2,1,0:T(8,128)(2,1)}', space=vmem, size = 0x1b000, scoped, tag = 'scratch operand']
  %s0 = inlined_call_operand.hbm [shape: bf16[2,256,128], index: 0, kind: input, shape index: {}]
  %s1 = inlined_call_operand.hbm [shape: bf16[128,128], index: 1, kind: input, shape index: {}]
  %s2 = inlined_call_operand.vmem [shape: f32[1,128], index: 2, kind: input, shape index: {}]
  %s3 = inlined_call_operand.hbm [shape: bf16[9,128,128], index: 3, kind: input, shape index: {}]
  %s4 = inlined_call_operand.vmem [shape: f32[1,128], index: 4, kind: input, shape index: {}]
  %s5 = inlined_call_operand.hbm [shape: bf16[128,128], index: 5, kind: input, shape index: {}]
  %s6 = inlined_call_operand.vmem [shape: f32[1,128], index: 6, kind: input, shape index: {}]
  %s7 = inlined_call_operand.hbm [shape: bf16[2,256,128], index: 7, kind: output, shape index: {}]
  %s8 = sld [smem:[#allocation0]]
  $region77: #{tpu_custom_call.1} parent=0
    _
  %s10 = ssub.s32 1, %s8
  %s11 = scalar_select 0, %s10, %s8
  $region1: #{tpu_custom_call.1} parent=0
    #allocation3 [shape = 'u8[131072]{0}', space=vmem, size = 0x20000, scoped, tag = 'input window, operand 0']
    #allocation4 [shape = 's32[2]{0}', space=sflag, size = 0x8, scoped, tag = 'scoped memory for tpu_custom_call.1']
    #allocation5 [shape = 's32[2]{0}', space=sflag, size = 0x8, scoped, tag = 'scoped memory for tpu_custom_call.1']
    #allocation6 [shape = 'u8[32768]{0}', space=vmem, size = 0x8000, scoped, tag = 'input window, operand 1, single buffered']
    #allocation7 [shape = 's32[1]{0}', space=sflag, size = 0x4, scoped, tag = 'scoped memory for tpu_custom_call.1']
    #allocation8 [shape = 'u8[294912]{0}', space=vmem, size = 0x48000, scoped, tag = 'input window, operand 3, single buffered']
    #allocation9 [shape = 'u8[32768]{0}', space=vmem, size = 0x8000, scoped, tag = 'input window, operand 5, single buffered']
    #allocation10 [shape = 's32[1]{0}', space=sflag, size = 0x4, scoped, tag = 'scoped memory for tpu_custom_call.1']
    #allocation11 [shape = 'u8[131072]{0}', space=vmem, size = 0x20000, scoped, tag = 'output window, operand 0']
    %12 = vsyncpa [#allocation4], 0
    %s13 = scalar_lea.sflag [#allocation4], 1
    %14 = vsyncpa %s13, 0
    %15 = vsyncpa [#allocation7], 0
    %16 = vsyncpa [#allocation10], 0
    %17 = vsyncpa [#allocation5], 0
    %s18 = scalar_lea.sflag [#allocation5], 1
    %19 = vsyncpa %s18, 0
    loop: start=0, step=1, limit=4
    $region2: #{tpu_custom_call.1} parent=1 // loop_pre_header
      _
    $region3: #{tpu_custom_call.1} parent=1 // loop_header
      %s21 = sphi 0, %s25
      %p22 = scmp.ge.s32.totalorder %s21, 4
      %s31 = sphi 0, %s33
      %s34 = sphi 0, %s31
      %s35 = sphi 0, %s34
      %s51 = sphi 0, %s35
      %s55 = sphi 0, %s55
      %s57 = sphi 0, %s55
      %s58 = sphi 0, %s57
      %s72 = sphi 0, %s58
      %s76 = sphi 0, %s76
      %s78 = sphi 0, %s76
      %s79 = sphi 0, %s78
      %s93 = sphi 0, %s79
      %s97 = sphi 0, %s97
      %s99 = sphi 0, %s97
      %s100 = sphi 0, %s99
      %s114 = sphi 0, %s100
      %s118 = sphi 0, %s118
      %s120 = sphi 0, %s118
      %s121 = sphi 0, %s120
      %s135 = sphi 0, %s121
      %s139 = sphi 0, %s139
      %s141 = sphi 0, %s139
      %s142 = sphi 0, %s141
      %s156 = sphi 0, %s142
      %s160 = sphi 0, %s160
      %s162 = sphi 0, %s160
      %s163 = sphi 0, %s162
      %s177 = sphi 0, %s163
      %s183 = sphi 0, %s185
      %s186 = sphi 0, %s183
      %s187 = sphi 0, %s186
      %s203 = sphi 0, %s187
    $region4: #{tpu_custom_call.1} parent=1 // loop_header_branch
      %24 = sbr.rel (%p22) target = $region8
    $region5: #{tpu_custom_call.1} parent=1 // loop_body
      %s26 = ssub.s32 %s21, 1
      %s27 = ssub.s32 %s21, 2
      %s28 = sadd.s32 %s21, 1
      %s29 = ssub.s32 %s21, %s28
      %p30 = scmp.eq.s32.totalorder %s29, 0
      %s32 = sadd.s32 %s31, 1
      %s33 = scalar_select %p30, %s31, %s32
      %p36 = pneg %p30
      %p37 = scmp.eq.s32.totalorder %s21, 1
      %p38 = por %p36, %p37
      %p39 = scmp.ne.s32.totalorder %s31, %s34
      %p40 = scmp.eq.s32.totalorder %s21, 0
      %p41 = por %p39, %p40
      %p42 = scmp.ne.s32.totalorder %s31, %s34
      %p43 = scmp.eq.s32.totalorder %s26, 1
      %p44 = por %p42, %p43
      %p45 = scmp.ne.s32.totalorder %s34, %s35
      %p46 = scmp.eq.s32.totalorder %s26, 0
      %p47 = por %p45, %p46
      %p48 = scmp.ne.s32.totalorder %s34, %s35
      %p49 = scmp.eq.s32.totalorder %s27, 1
      %p50 = por %p48, %p49
      %p52 = scmp.ne.s32.totalorder %s35, %s51
      %p53 = scmp.eq.s32.totalorder %s27, 0
      %p54 = por %p52, %p53
      %s56 = sadd.s32 %s55, 1
      %p59 = scmp.eq.s32.totalorder %s21, 1
      %p60 = scmp.ne.s32.totalorder %s55, %s57
      %p61 = scmp.eq.s32.totalorder %s21, 0
      %p62 = por %p60, %p61
      %p63 = scmp.ne.s32.totalorder %s55, %s57
      %p64 = scmp.eq.s32.totalorder %s26, 1
      %p65 = por %p63, %p64
      %p66 = scmp.ne.s32.totalorder %s57, %s58
      %p67 = scmp.eq.s32.totalorder %s26, 0
      %p68 = por %p66, %p67
      %p69 = scmp.ne.s32.totalorder %s57, %s58
      %p70 = scmp.eq.s32.totalorder %s27, 1
      %p71 = por %p69, %p70
      %p73 = scmp.ne.s32.totalorder %s58, %s72
      %p74 = scmp.eq.s32.totalorder %s27, 0
      %p75 = por %p73, %p74
      %s77 = sadd.s32 %s76, 1
      %p80 = scmp.eq.s32.totalorder %s21, 1
      %p81 = scmp.ne.s32.totalorder %s76, %s78
      %p82 = scmp.eq.s32.totalorder %s21, 0
      %p83 = por %p81, %p82
      %p84 = scmp.ne.s32.totalorder %s76, %s78
      %p85 = scmp.eq.s32.totalorder %s26, 1
      %p86 = por %p84, %p85
      %p87 = scmp.ne.s32.totalorder %s78, %s79
      %p88 = scmp.eq.s32.totalorder %s26, 0
      %p89 = por %p87, %p88
      %p90 = scmp.ne.s32.totalorder %s78, %s79
      %p91 = scmp.eq.s32.totalorder %s27, 1
      %p92 = por %p90, %p91
      %p94 = scmp.ne.s32.totalorder %s79, %s93
      %p95 = scmp.eq.s32.totalorder %s27, 0
      %p96 = por %p94, %p95
      %s98 = sadd.s32 %s97, 1
      %p101 = scmp.eq.s32.totalorder %s21, 1
      %p102 = scmp.ne.s32.totalorder %s97, %s99
      %p103 = scmp.eq.s32.totalorder %s21, 0
      %p104 = por %p102, %p103
      %p105 = scmp.ne.s32.totalorder %s97, %s99
      %p106 = scmp.eq.s32.totalorder %s26, 1
      %p107 = por %p105, %p106
      %p108 = scmp.ne.s32.totalorder %s99, %s100
      %p109 = scmp.eq.s32.totalorder %s26, 0
      %p110 = por %p108, %p109
      %p111 = scmp.ne.s32.totalorder %s99, %s100
      %p112 = scmp.eq.s32.totalorder %s27, 1
      %p113 = por %p111, %p112
      %p115 = scmp.ne.s32.totalorder %s100, %s114
      %p116 = scmp.eq.s32.totalorder %s27, 0
      %p117 = por %p115, %p116
      %s119 = sadd.s32 %s118, 1
      %p122 = scmp.eq.s32.totalorder %s21, 1
      %p123 = scmp.ne.s32.totalorder %s118, %s120
      %p124 = scmp.eq.s32.totalorder %s21, 0
      %p125 = por %p123, %p124
      %p126 = scmp.ne.s32.totalorder %s118, %s120
      %p127 = scmp.eq.s32.totalorder %s26, 1
      %p128 = por %p126, %p127
      %p129 = scmp.ne.s32.totalorder %s120, %s121
      %p130 = scmp.eq.s32.totalorder %s26, 0
      %p131 = por %p129, %p130
      %p132 = scmp.ne.s32.totalorder %s120, %s121
      %p133 = scmp.eq.s32.totalorder %s27, 1
      %p134 = por %p132, %p133
      %p136 = scmp.ne.s32.totalorder %s121, %s135
      %p137 = scmp.eq.s32.totalorder %s27, 0
      %p138 = por %p136, %p137
      %s140 = sadd.s32 %s139, 1
      %p143 = scmp.eq.s32.totalorder %s21, 1
      %p144 = scmp.ne.s32.totalorder %s139, %s141
      %p145 = scmp.eq.s32.totalorder %s21, 0
      %p146 = por %p144, %p145
      %p147 = scmp.ne.s32.totalorder %s139, %s141
      %p148 = scmp.eq.s32.totalorder %s26, 1
      %p149 = por %p147, %p148
      %p150 = scmp.ne.s32.totalorder %s141, %s142
      %p151 = scmp.eq.s32.totalorder %s26, 0
      %p152 = por %p150, %p151
      %p153 = scmp.ne.s32.totalorder %s141, %s142
      %p154 = scmp.eq.s32.totalorder %s27, 1
      %p155 = por %p153, %p154
      %p157 = scmp.ne.s32.totalorder %s142, %s156
      %p158 = scmp.eq.s32.totalorder %s27, 0
      %p159 = por %p157, %p158
      %s161 = sadd.s32 %s160, 1
      %p164 = scmp.eq.s32.totalorder %s21, 1
      %p165 = scmp.ne.s32.totalorder %s160, %s162
      %p166 = scmp.eq.s32.totalorder %s21, 0
      %p167 = por %p165, %p166
      %p168 = scmp.ne.s32.totalorder %s160, %s162
      %p169 = scmp.eq.s32.totalorder %s26, 1
      %p170 = por %p168, %p169
      %p171 = scmp.ne.s32.totalorder %s162, %s163
      %p172 = scmp.eq.s32.totalorder %s26, 0
      %p173 = por %p171, %p172
      %p174 = scmp.ne.s32.totalorder %s162, %s163
      %p175 = scmp.eq.s32.totalorder %s27, 1
      %p176 = por %p174, %p175
      %p178 = scmp.ne.s32.totalorder %s163, %s177
      %p179 = scmp.eq.s32.totalorder %s27, 0
      %p180 = por %p178, %p179
      %s181 = ssub.s32 %s21, %s28
      %p182 = scmp.eq.s32.totalorder %s181, 0
      %s184 = sadd.s32 %s183, 1
      %s185 = scalar_select %p182, %s183, %s184
      %p188 = pneg %p182
      %p189 = scmp.eq.s32.totalorder %s21, 1
      %p190 = por %p188, %p189
      %p191 = scmp.ne.s32.totalorder %s183, %s186
      %p192 = scmp.eq.s32.totalorder %s21, 0
      %p193 = por %p191, %p192
      %p194 = scmp.ne.s32.totalorder %s183, %s186
      %p195 = scmp.eq.s32.totalorder %s26, 1
      %p196 = por %p194, %p195
      %p197 = scmp.ne.s32.totalorder %s186, %s187
      %p198 = scmp.eq.s32.totalorder %s26, 0
      %p199 = por %p197, %p198
      %p200 = scmp.ne.s32.totalorder %s186, %s187
      %p201 = scmp.eq.s32.totalorder %s27, 1
      %p202 = por %p200, %p201
      %p204 = scmp.ne.s32.totalorder %s187, %s203
      %p205 = scmp.eq.s32.totalorder %s27, 0
      %p206 = por %p204, %p205
      %p207 = scmp.le.s32.totalorder 1, %s21
      %p208 = scmp.lt.s32.totalorder %s21, 3
      %p209 = pnand %p207, %p208
      %p210 = pneg %p209
      // Predicated region
      $region9: #{tpu_custom_call.1} parent=5 // pred_check
        _
      $region10: #{tpu_custom_call.1} parent=5 // pred_check_branch
        %212 = sbr.rel (%p209) target = $region12
      $region11: #{tpu_custom_call.1} parent=5 // pred_region
        %s213 = ssub.s32 %s21, 1
        // Predicated region
        $region13: #{tpu_custom_call.1} parent=11 // pred_check
          %p214 = pneg %p68
        $region14: #{tpu_custom_call.1} parent=11 // pred_check_branch
          %216 = sbr.rel (%p214) target = $region16
        $region15: #{tpu_custom_call.1} parent=11 // pred_region
          %s218 = ssub.s32 1024, 1024
          %219 = vsyncadd [#allocation7], %s218
          %s220 = sshll.u32 [#allocation6], 4
          %s221 = int_to_ptr.vmem [resolvable:$true] %s220
          %226 = dma.hbm_to_vmem [thread:$0]  %s1, 1024, %s221, [#allocation7], 64, 64, 4
        $region16: #{tpu_custom_call.1} parent=11 // pred_fallthru
          _
        // Predicated region
        $region17: #{tpu_custom_call.1} parent=11 // pred_check
          %p227 = pneg %p89
        $region18: #{tpu_custom_call.1} parent=11 // pred_check_branch
          %229 = sbr.rel (%p227) target = $region20
        $region19: #{tpu_custom_call.1} parent=11 // pred_region
          _
        $region20: #{tpu_custom_call.1} parent=11 // pred_fallthru
          _
        // Predicated region
        $region21: #{tpu_custom_call.1} parent=11 // pred_check
          %p230 = pneg %p110
        $region22: #{tpu_custom_call.1} parent=11 // pred_check_branch
          %232 = sbr.rel (%p230) target = $region24
        $region23: #{tpu_custom_call.1} parent=11 // pred_region
          %s234 = ssub.s32 9216, 9216
          %235 = vsyncadd [#allocation7], %s234
          %s236 = sshll.u32 [#allocation8], 4
          %s237 = int_to_ptr.vmem [resolvable:$true] %s236
          %242 = dma.hbm_to_vmem [thread:$0]  %s3, 9216, %s237, [#allocation7], 64, 64, 4
        $region24: #{tpu_custom_call.1} parent=11 // pred_fallthru
          _
        // Predicated region
        $region25: #{tpu_custom_call.1} parent=11 // pred_check
          %p243 = pneg %p131
        $region26: #{tpu_custom_call.1} parent=11 // pred_check_branch
          %245 = sbr.rel (%p243) target = $region28
        $region27: #{tpu_custom_call.1} parent=11 // pred_region
          _
        $region28: #{tpu_custom_call.1} parent=11 // pred_fallthru
          _
        // Predicated region
        $region29: #{tpu_custom_call.1} parent=11 // pred_check
          %p246 = pneg %p152
        $region30: #{tpu_custom_call.1} parent=11 // pred_check_branch
          %248 = sbr.rel (%p246) target = $region32
        $region31: #{tpu_custom_call.1} parent=11 // pred_region
          %s250 = ssub.s32 1024, 1024
          %251 = vsyncadd [#allocation10], %s250
          %s252 = sshll.u32 [#allocation9], 4
          %s253 = int_to_ptr.vmem [resolvable:$true] %s252
          %258 = dma.hbm_to_vmem [thread:$0]  %s5, 1024, %s253, [#allocation10], 64, 64, 4
        $region32: #{tpu_custom_call.1} parent=11 // pred_fallthru
          _
        // Predicated region
        $region33: #{tpu_custom_call.1} parent=11 // pred_check
          %p259 = pneg %p173
        $region34: #{tpu_custom_call.1} parent=11 // pred_check_branch
          %261 = sbr.rel (%p259) target = $region36
        $region35: #{tpu_custom_call.1} parent=11 // pred_region
          _
        $region36: #{tpu_custom_call.1} parent=11 // pred_fallthru
          _
      $region12: #{tpu_custom_call.1} parent=5 // pred_fallthru
        _
      %p262 = scmp.lt.s32.totalorder %s21, 2
      // Predicated region
      $region37: #{tpu_custom_call.1} parent=5 // pred_check
        %p263 = pneg %p262
      $region38: #{tpu_custom_call.1} parent=5 // pred_check_branch
        %265 = sbr.rel (%p263) target = $region40
      $region39: #{tpu_custom_call.1} parent=5 // pred_region
        // Predicated region
        $region41: #{tpu_custom_call.1} parent=39 // pred_check
          %p266 = pneg %p41
        $region42: #{tpu_custom_call.1} parent=39 // pred_check_branch
          %268 = sbr.rel (%p266) target = $region44
        $region43: #{tpu_custom_call.1} parent=39 // pred_region
          %s269 = sand.u32 %s31, 1
          %s270 = scalar_lea.sflag [#allocation4], %s269
          %s271 = sand.u32 %s31, 1
          %s272 = smul.addr %s271, 128
          %s273 = scalar_lea.vmem [#allocation3], %s272
          %s275 = ssub.s32 2048, 2048
          %276 = vsyncadd %s270, %s275
          %s277 = smul.addr %s21, 32
          %s278 = smul.addr %s277, 64
          %s279 = scalar_lea.hbm %s0, %s278
          %s280 = sshll.u32 %s273, 4
          %s281 = int_to_ptr.vmem [resolvable:$true] %s280
          %286 = dma.hbm_to_vmem [thread:$0]  %s279, 2048, %s281, %s270, 64, 64, 4
        $region44: #{tpu_custom_call.1} parent=39 // pred_fallthru
          _
      $region40: #{tpu_custom_call.1} parent=5 // pred_fallthru
        _
      %p287 = scmp.le.s32.totalorder 1, %s21
      %p288 = scmp.lt.s32.totalorder %s21, 3
      %p289 = pnand %p287, %p288
      %p290 = pneg %p289
      // Predicated region
      $region45: #{tpu_custom_call.1} parent=5 // pred_check
        _
      $region46: #{tpu_custom_call.1} parent=5 // pred_check_branch
        %292 = sbr.rel (%p289) target = $region48
      $region47: #{tpu_custom_call.1} parent=5 // pred_region
        %s293 = ssub.s32 %s21, 1
        %s294 = sand.u32 %s34, 1
        %s295 = scalar_lea.sflag [#allocation4], %s294
        %s296 = sand.u32 %s34, 1
        %s297 = smul.addr %s296, 128
        %s298 = scalar_lea.vmem [#allocation3], %s297
        // Predicated region
        $region49: #{tpu_custom_call.1} parent=47 // pred_check
          %p299 = pneg %p47
        $region50: #{tpu_custom_call.1} parent=47 // pred_check_branch
          %301 = sbr.rel (%p299) target = $region52
        $region51: #{tpu_custom_call.1} parent=47 // pred_region
          %302 = dma.done %s295, 2048
        $region52: #{tpu_custom_call.1} parent=47 // pred_fallthru
          _
        // Predicated region
        $region53: #{tpu_custom_call.1} parent=47 // pred_check
          %p303 = pneg %p68
        $region54: #{tpu_custom_call.1} parent=47 // pred_check_branch
          %305 = sbr.rel (%p303) target = $region56
        $region55: #{tpu_custom_call.1} parent=47 // pred_region
          %306 = dma.done [#allocation7], 1024
        $region56: #{tpu_custom_call.1} parent=47 // pred_fallthru
          _
        // Predicated region
        $region57: #{tpu_custom_call.1} parent=47 // pred_check
          %p307 = pneg %p110
        $region58: #{tpu_custom_call.1} parent=47 // pred_check_branch
          %309 = sbr.rel (%p307) target = $region60
        $region59: #{tpu_custom_call.1} parent=47 // pred_region
          %310 = dma.done [#allocation7], 9216
        $region60: #{tpu_custom_call.1} parent=47 // pred_fallthru
          _
        // Predicated region
        $region61: #{tpu_custom_call.1} parent=47 // pred_check
          %p311 = pneg %p152
        $region62: #{tpu_custom_call.1} parent=47 // pred_check_branch
          %313 = sbr.rel (%p311) target = $region64
        $region63: #{tpu_custom_call.1} parent=47 // pred_region
          %314 = dma.done [#allocation10], 1024
        $region64: #{tpu_custom_call.1} parent=47 // pred_fallthru
          _
        %s315 = sand.u32 %s34, 1
        %s316 = scalar_lea.sflag [#allocation4], %s315
        %s317 = sand.u32 %s34, 1
        %s318 = smul.addr %s317, 128
        %s319 = scalar_lea.vmem [#allocation3], %s318
        %p320 = pneg %p47
        %p321 = pneg %p44
        %p322 = pneg %p68
        %p323 = pneg %p65
        %p324 = pneg %p89
        %p325 = pneg %p86
        %p326 = pneg %p110
        %p327 = pneg %p107
        %p328 = pneg %p131
        %p329 = pneg %p128
        %p330 = pneg %p152
        %p331 = pneg %p149
        %p332 = pneg %p173
        %p333 = pneg %p170
        %p334 = pneg %p199
        %p335 = pneg %p196
        %s336 = sand.u32 %s186, 1
        %s337 = scalar_lea.sflag [#allocation5], %s336
        %s338 = sand.u32 %s186, 1
        %s339 = smul.addr %s338, 128
        %s340 = scalar_lea.vmem [#allocation11], %s339
        %v342 = vld [vmem:[%s298] sm:$0xf]
        %v343 = vld [vmem:[%s298 + $0x4] sm:$0xf]
        %v344 = vld [vmem:[%s298 + $0x8] sm:$0xf]
        %v345 = vld [vmem:[%s298 + $0xc] sm:$0xf]
        %v346 = vld [vmem:[%s298 + $0x10] sm:$0xf]
        %v347 = vld [vmem:[%s298 + $0x14] sm:$0xf]
        %v348 = vld [vmem:[%s298 + $0x18] sm:$0xf]
        %v349 = vld [vmem:[%s298 + $0x1c] sm:$0xf]
        %v350 = vld [vmem:[%s298 + $0x20] sm:$0xf]
        %v351 = vld [vmem:[%s298 + $0x24] sm:$0xf]
        %v352 = vld [vmem:[%s298 + $0x28] sm:$0xf]
        %v353 = vld [vmem:[%s298 + $0x2c] sm:$0xf]
        %v354 = vld [vmem:[%s298 + $0x30] sm:$0xf]
        %v355 = vld [vmem:[%s298 + $0x34] sm:$0xf]
        %v356 = vld [vmem:[%s298 + $0x38] sm:$0xf]
        %v357 = vld [vmem:[%s298 + $0x3c] sm:$0xf]
        %v358 = vld [vmem:[%s298 + $0x40] sm:$0xf]
        %v359 = vld [vmem:[%s298 + $0x44] sm:$0xf]
        %v360 = vld [vmem:[%s298 + $0x48] sm:$0xf]
        %v361 = vld [vmem:[%s298 + $0x4c] sm:$0xf]
        %v362 = vld [vmem:[%s298 + $0x50] sm:$0xf]
        %v363 = vld [vmem:[%s298 + $0x54] sm:$0xf]
        %v364 = vld [vmem:[%s298 + $0x58] sm:$0xf]
        %v365 = vld [vmem:[%s298 + $0x5c] sm:$0xf]
        %v366 = vld [vmem:[%s298 + $0x60] sm:$0xf]
        %v367 = vld [vmem:[%s298 + $0x64] sm:$0xf]
        %v368 = vld [vmem:[%s298 + $0x68] sm:$0xf]
        %v369 = vld [vmem:[%s298 + $0x6c] sm:$0xf]
        %v370 = vld [vmem:[%s298 + $0x70] sm:$0xf]
        %v371 = vld [vmem:[%s298 + $0x74] sm:$0xf]
        %v372 = vld [vmem:[%s298 + $0x78] sm:$0xf]
        %v373 = vld [vmem:[%s298 + $0x7c] sm:$0xf]
        %v374 = vld [vmem:[#allocation6] sm:$0xf]
        %v375 = vld [vmem:[#allocation6 + $0x4] sm:$0xf]
        %v376 = vld [vmem:[#allocation6 + $0x8] sm:$0xf]
        %v377 = vld [vmem:[#allocation6 + $0xc] sm:$0xf]
        %v378 = vld [vmem:[#allocation6 + $0x10] sm:$0xf]
        %v379 = vld [vmem:[#allocation6 + $0x14] sm:$0xf]
        %v380 = vld [vmem:[#allocation6 + $0x18] sm:$0xf]
        %v381 = vld [vmem:[#allocation6 + $0x1c] sm:$0xf]
        %v382 = vld [vmem:[#allocation6 + $0x20] sm:$0xf]
        %v383 = vld [vmem:[#allocation6 + $0x24] sm:$0xf]
        %v384 = vld [vmem:[#allocation6 + $0x28] sm:$0xf]
        %v385 = vld [vmem:[#allocation6 + $0x2c] sm:$0xf]
        %v386 = vld [vmem:[#allocation6 + $0x30] sm:$0xf]
        %v387 = vld [vmem:[#allocation6 + $0x34] sm:$0xf]
        %v388 = vld [vmem:[#allocation6 + $0x38] sm:$0xf]
        %v389 = vld [vmem:[#allocation6 + $0x3c] sm:$0xf]
        %v390 = vld [vmem:[%s2] sm:$0x1]
        %v392 = vlaneseq
        %v393 = vshrl.u32 %v392, 7
        %v394 = vsub.s32 0, %v393
        %v395 = vrot.slane %v390, %v394
        %v429 = vunpack.c.l.b16 %v342
        %v430 = vunpack.c.l.b16 %v343
        %v431 = vunpack.c.l.b16 %v344
        %v432 = vunpack.c.l.b16 %v345
        %v433 = vunpack.c.l.b16 %v346
        %v434 = vunpack.c.l.b16 %v347
        %v435 = vunpack.c.l.b16 %v348
        %v436 = vunpack.c.l.b16 %v349
        %v437 = vunpack.c.l.b16 %v350
        %v438 = vunpack.c.l.b16 %v351
        %v439 = vunpack.c.l.b16 %v352
        %v440 = vunpack.c.l.b16 %v353
        %v441 = vunpack.c.l.b16 %v354
        %v442 = vunpack.c.l.b16 %v355
        %v443 = vunpack.c.l.b16 %v356
        %v444 = vunpack.c.l.b16 %v357
        %v445 = vunpack.c.l.b16 %v358
        %v446 = vunpack.c.l.b16 %v359
        %v447 = vunpack.c.l.b16 %v360
        %v448 = vunpack.c.l.b16 %v361
        %v449 = vunpack.c.l.b16 %v362
        %v450 = vunpack.c.l.b16 %v363
        %v451 = vunpack.c.l.b16 %v364
        %v452 = vunpack.c.l.b16 %v365
        %v453 = vunpack.c.l.b16 %v366
        %v454 = vunpack.c.l.b16 %v367
        %v455 = vunpack.c.l.b16 %v368
        %v456 = vunpack.c.l.b16 %v369
        %v457 = vunpack.c.l.b16 %v370
        %v458 = vunpack.c.l.b16 %v371
        %v459 = vunpack.c.l.b16 %v372
        %v460 = vunpack.c.l.b16 %v373
        %v461 = vpack.c.b16 %v430, %v429
        %v462 = vpack.c.b16 %v432, %v431
        %v463 = vpack.c.b16 %v434, %v433
        %v464 = vpack.c.b16 %v436, %v435
        %v465 = vpack.c.b16 %v438, %v437
        %v466 = vpack.c.b16 %v440, %v439
        %v467 = vpack.c.b16 %v442, %v441
        %v468 = vpack.c.b16 %v444, %v443
        %v469 = vpack.c.b16 %v446, %v445
        %v470 = vpack.c.b16 %v448, %v447
        %v471 = vpack.c.b16 %v450, %v449
        %v472 = vpack.c.b16 %v452, %v451
        %v473 = vpack.c.b16 %v454, %v453
        %v474 = vpack.c.b16 %v456, %v455
        %v475 = vpack.c.b16 %v458, %v457
        %v476 = vpack.c.b16 %v460, %v459
        %v509 = vunpack.c.l.b16 %v374
        %v510 = vunpack.c.l.b16 %v375
        %v511 = vunpack.c.l.b16 %v376
        %v512 = vunpack.c.l.b16 %v377
        %v513 = vunpack.c.l.b16 %v378
        %v514 = vunpack.c.l.b16 %v379
        %v515 = vunpack.c.l.b16 %v380
        %v516 = vunpack.c.l.b16 %v381
        %v517 = vunpack.c.l.b16 %v382
        %v518 = vunpack.c.l.b16 %v383
        %v519 = vunpack.c.l.b16 %v384
        %v520 = vunpack.c.l.b16 %v385
        %v521 = vunpack.c.l.b16 %v386
        %v522 = vunpack.c.l.b16 %v387
        %v523 = vunpack.c.l.b16 %v388
        %v524 = vunpack.c.l.b16 %v389
        %v525 = vpack.c.b16 %v510, %v509
        %v526 = vpack.c.b16 %v512, %v511
        %v527 = vpack.c.b16 %v514, %v513
        %v528 = vpack.c.b16 %v516, %v515
        %v529 = vpack.c.b16 %v518, %v517
        %v530 = vpack.c.b16 %v520, %v519
        %v531 = vpack.c.b16 %v522, %v521
        %v532 = vpack.c.b16 %v524, %v523
        %541 = vmatprep.subr.bf16.mxu0 0
        %542 = vmatpush1.bf16.msra.mxu0 %v532
        %543 = vmatprep.subr.bf16.mxu0 0
        %544 = vmatpush1.bf16.msra.mxu0 %v531
        %545 = vmatprep.subr.bf16.mxu0 0
        %546 = vmatpush1.bf16.msra.mxu0 %v530
        %547 = vmatprep.subr.bf16.mxu0 0
        %548 = vmatpush1.bf16.msra.mxu0 %v529
        %549 = vmatprep.subr.bf16.mxu0 0
        %550 = vmatpush1.bf16.msra.mxu0 %v528
        %551 = vmatprep.subr.bf16.mxu0 0
        %552 = vmatpush1.bf16.msra.mxu0 %v527
        %553 = vmatprep.subr.bf16.mxu0 0
        %554 = vmatpush1.bf16.msra.mxu0 %v526
        %555 = vmatprep.subr.bf16.mxu0 0
        %556 = vmatpush1.bf16.msra.mxu0 %v525
        %557 = vmatprep.subr.bf16.mxu0 0
        %558 = vmatpush2.bf16.msra.mxu0 0
        %559 = vmatprep.subr.bf16.mxu0 0
        %560 = vmatpush2.bf16.msra.mxu0 0
        %561 = vmatprep.subr.bf16.mxu0 0
        %562 = vmatpush2.bf16.msra.mxu0 0
        %563 = vmatprep.subr.bf16.mxu0 0
        %564 = vmatpush2.bf16.msra.mxu0 0
        %565 = vmatprep.subr.bf16.mxu0 0
        %566 = vmatpush2.bf16.msra.mxu0 0
        %567 = vmatprep.subr.bf16.mxu0 0
        %568 = vmatpush2.bf16.msra.mxu0 0
        %569 = vmatprep.subr.bf16.mxu0 0
        %570 = vmatpush2.bf16.msra.mxu0 0
        %571 = vmatprep.subr.bf16.mxu0 0
        %572 = vmatpush2.bf16.msra.mxu0 0
        %573 = vmatprep.mubr.bf16.mxu0 0
        %574 = vmatmul.mubr.bf16.gmra.mxu0 %v461
        %v575 = vpop.f32.mrf.mxu0
        %v576 = vadd.f32 %v395, %v575
        %v577 = vpop.f32.mrf.mxu0
        %v578 = vpop.f32.mrf.mxu0
        %v579 = vadd.f32 %v395, %v578
        %v580 = vpop.f32.mrf.mxu0
        %581 = vmatprep.mubr.bf16.mxu0 0
        %582 = vmatmul.mubr.bf16.gmra.mxu0 %v462
        %v583 = vpop.f32.mrf.mxu0
        %v584 = vadd.f32 %v395, %v583
        %v585 = vpop.f32.mrf.mxu0
        %v586 = vpop.f32.mrf.mxu0
        %v587 = vadd.f32 %v395, %v586
        %v588 = vpop.f32.mrf.mxu0
        %589 = vmatprep.mubr.bf16.mxu0 0
        %590 = vmatmul.mubr.bf16.gmra.mxu0 %v463
        %v591 = vpop.f32.mrf.mxu0
        %v592 = vadd.f32 %v395, %v591
        %v593 = vpop.f32.mrf.mxu0
        %v594 = vpop.f32.mrf.mxu0
        %v595 = vadd.f32 %v395, %v594
        %v596 = vpop.f32.mrf.mxu0
        %597 = vmatprep.mubr.bf16.mxu0 0
        %598 = vmatmul.mubr.bf16.gmra.mxu0 %v464
        %v599 = vpop.f32.mrf.mxu0
        %v600 = vadd.f32 %v395, %v599
        %v601 = vpop.f32.mrf.mxu0
        %v602 = vpop.f32.mrf.mxu0
        %v603 = vadd.f32 %v395, %v602
        %v604 = vpop.f32.mrf.mxu0
        %605 = vmatprep.mubr.bf16.mxu0 0
        %606 = vmatmul.mubr.bf16.gmra.mxu0 %v465
        %v607 = vpop.f32.mrf.mxu0
        %v608 = vadd.f32 %v395, %v607
        %v609 = vpop.f32.mrf.mxu0
        %v610 = vpop.f32.mrf.mxu0
        %v611 = vadd.f32 %v395, %v610
        %v612 = vpop.f32.mrf.mxu0
        %613 = vmatprep.mubr.bf16.mxu0 0
        %614 = vmatmul.mubr.bf16.gmra.mxu0 %v466
        %v615 = vpop.f32.mrf.mxu0
        %v616 = vadd.f32 %v395, %v615
        %v617 = vpop.f32.mrf.mxu0
        %v618 = vpop.f32.mrf.mxu0
        %v619 = vadd.f32 %v395, %v618
        %v620 = vpop.f32.mrf.mxu0
        %621 = vmatprep.mubr.bf16.mxu0 0
        %622 = vmatmul.mubr.bf16.gmra.mxu0 %v467
        %v623 = vpop.f32.mrf.mxu0
        %v624 = vadd.f32 %v395, %v623
        %v625 = vpop.f32.mrf.mxu0
        %v626 = vpop.f32.mrf.mxu0
        %v627 = vadd.f32 %v395, %v626
        %v628 = vpop.f32.mrf.mxu0
        %629 = vmatprep.mubr.bf16.mxu0 0
        %630 = vmatmul.mubr.bf16.gmra.mxu0 %v468
        %v631 = vpop.f32.mrf.mxu0
        %v632 = vadd.f32 %v395, %v631
        %v633 = vpop.f32.mrf.mxu0
        %v634 = vpop.f32.mrf.mxu0
        %v635 = vadd.f32 %v395, %v634
        %v636 = vpop.f32.mrf.mxu0
        %637 = vmatprep.mubr.bf16.mxu0 0
        %638 = vmatmul.mubr.bf16.gmra.mxu0 %v469
        %v639 = vpop.f32.mrf.mxu0
        %v640 = vadd.f32 %v395, %v639
        %v641 = vpop.f32.mrf.mxu0
        %v642 = vpop.f32.mrf.mxu0
        %v643 = vadd.f32 %v395, %v642
        %v644 = vpop.f32.mrf.mxu0
        %645 = vmatprep.mubr.bf16.mxu0 0
        %646 = vmatmul.mubr.bf16.gmra.mxu0 %v470
        %v647 = vpop.f32.mrf.mxu0
        %v648 = vadd.f32 %v395, %v647
        %v649 = vpop.f32.mrf.mxu0
        %v650 = vpop.f32.mrf.mxu0
        %v651 = vadd.f32 %v395, %v650
        %v652 = vpop.f32.mrf.mxu0
        %653 = vmatprep.mubr.bf16.mxu0 0
        %654 = vmatmul.mubr.bf16.gmra.mxu0 %v471
        %v655 = vpop.f32.mrf.mxu0
        %v656 = vadd.f32 %v395, %v655
        %v657 = vpop.f32.mrf.mxu0
        %v658 = vpop.f32.mrf.mxu0
        %v659 = vadd.f32 %v395, %v658
        %v660 = vpop.f32.mrf.mxu0
        %661 = vmatprep.mubr.bf16.mxu0 0
        %662 = vmatmul.mubr.bf16.gmra.mxu0 %v472
        %v663 = vpop.f32.mrf.mxu0
        %v664 = vadd.f32 %v395, %v663
        %v665 = vpop.f32.mrf.mxu0
        %v666 = vpop.f32.mrf.mxu0
        %v667 = vadd.f32 %v395, %v666
        %v668 = vpop.f32.mrf.mxu0
        %669 = vmatprep.mubr.bf16.mxu0 0
        %670 = vmatmul.mubr.bf16.gmra.mxu0 %v473
        %v671 = vpop.f32.mrf.mxu0
        %v672 = vadd.f32 %v395, %v671
        %v673 = vpop.f32.mrf.mxu0
        %v674 = vpop.f32.mrf.mxu0
        %v675 = vadd.f32 %v395, %v674
        %v676 = vpop.f32.mrf.mxu0
        %677 = vmatprep.mubr.bf16.mxu0 0
        %678 = vmatmul.mubr.bf16.gmra.mxu0 %v474
        %v679 = vpop.f32.mrf.mxu0
        %v680 = vadd.f32 %v395, %v679
        %v681 = vpop.f32.mrf.mxu0
        %v682 = vpop.f32.mrf.mxu0
        %v683 = vadd.f32 %v395, %v682
        %v684 = vpop.f32.mrf.mxu0
        %685 = vmatprep.mubr.bf16.mxu0 0
        %686 = vmatmul.mubr.bf16.gmra.mxu0 %v475
        %v687 = vpop.f32.mrf.mxu0
        %v688 = vadd.f32 %v395, %v687
        %v689 = vpop.f32.mrf.mxu0
        %v690 = vpop.f32.mrf.mxu0
        %v691 = vadd.f32 %v395, %v690
        %v692 = vpop.f32.mrf.mxu0
        %693 = vmatprep.mubr.bf16.mxu0 0
        %694 = vmatmul.mubr.bf16.gmra.mxu0 %v476
        %v695 = vpop.f32.mrf.mxu0
        %v696 = vadd.f32 %v395, %v695
        %v697 = vpop.f32.mrf.mxu0
        %v698 = vpop.f32.mrf.mxu0
        %v699 = vadd.f32 %v395, %v698
        %v700 = vpop.f32.mrf.mxu0
        %701 = vdwg.mxu0
        %v702 = vmax.f32 %v576, 0.0
        %v703 = vmax.f32 %v579, 0.0
        %v704 = vmax.f32 %v584, 0.0
        %v705 = vmax.f32 %v587, 0.0
        %v706 = vmax.f32 %v592, 0.0
        %v707 = vmax.f32 %v595, 0.0
        %v708 = vmax.f32 %v600, 0.0
        %v709 = vmax.f32 %v603, 0.0
        %v710 = vmax.f32 %v608, 0.0
        %v711 = vmax.f32 %v611, 0.0
        %v712 = vmax.f32 %v616, 0.0
        %v713 = vmax.f32 %v619, 0.0
        %v714 = vmax.f32 %v624, 0.0
        %v715 = vmax.f32 %v627, 0.0
        %v716 = vmax.f32 %v632, 0.0
        %v717 = vmax.f32 %v635, 0.0
        %v718 = vmax.f32 %v640, 0.0
        %v719 = vmax.f32 %v643, 0.0
        %v720 = vmax.f32 %v648, 0.0
        %v721 = vmax.f32 %v651, 0.0
        %v722 = vmax.f32 %v656, 0.0
        %v723 = vmax.f32 %v659, 0.0
        %v724 = vmax.f32 %v664, 0.0
        %v725 = vmax.f32 %v667, 0.0
        %v726 = vmax.f32 %v672, 0.0
        %v727 = vmax.f32 %v675, 0.0
        %v728 = vmax.f32 %v680, 0.0
        %v729 = vmax.f32 %v683, 0.0
        %v730 = vmax.f32 %v688, 0.0
        %v731 = vmax.f32 %v691, 0.0
        %v732 = vmax.f32 %v696, 0.0
        %v733 = vmax.f32 %v699, 0.0
        %v734 = vpack.c.bf16 %v703, %v702
        %v735 = vpack.c.bf16 %v705, %v704
        %v736 = vpack.c.bf16 %v707, %v706
        %v737 = vpack.c.bf16 %v709, %v708
        %v738 = vpack.c.bf16 %v711, %v710
        %v739 = vpack.c.bf16 %v713, %v712
        %v740 = vpack.c.bf16 %v715, %v714
        %v741 = vpack.c.bf16 %v717, %v716
        %v742 = vpack.c.bf16 %v719, %v718
        %v743 = vpack.c.bf16 %v721, %v720
        %v744 = vpack.c.bf16 %v723, %v722
        %v745 = vpack.c.bf16 %v725, %v724
        %v746 = vpack.c.bf16 %v727, %v726
        %v747 = vpack.c.bf16 %v729, %v728
        %v748 = vpack.c.bf16 %v731, %v730
        %v749 = vpack.c.bf16 %v733, %v732
        %v751 = vshrl.u32 %v734, 16
        %v753 = vrot.slane %v751, 7
        %v754 = vshll.u32 %v734, 16
        %v756 = vor.u32 %v753, %v754
        %v758 = vshrl.u32 %v735, 16
        %v760 = vrot.slane %v758, 7
        %v761 = vshll.u32 %v735, 16
        %v763 = vor.u32 %v760, %v761
        %v765 = vshrl.u32 %v736, 16
        %v767 = vrot.slane %v765, 7
        %v768 = vshll.u32 %v736, 16
        %v770 = vor.u32 %v767, %v768
        %v772 = vshrl.u32 %v737, 16
        %v774 = vrot.slane %v772, 7
        %v775 = vshll.u32 %v737, 16
        %v777 = vor.u32 %v774, %v775
        %v779 = vshrl.u32 %v738, 16
        %v781 = vrot.slane %v779, 7
        %v782 = vshll.u32 %v738, 16
        %v784 = vor.u32 %v781, %v782
        %v786 = vshrl.u32 %v739, 16
        %v788 = vrot.slane %v786, 7
        %v789 = vshll.u32 %v739, 16
        %v791 = vor.u32 %v788, %v789
        %v793 = vshrl.u32 %v740, 16
        %v795 = vrot.slane %v793, 7
        %v796 = vshll.u32 %v740, 16
        %v798 = vor.u32 %v795, %v796
        %v800 = vshrl.u32 %v741, 16
        %v802 = vrot.slane %v800, 7
        %v803 = vshll.u32 %v741, 16
        %v805 = vor.u32 %v802, %v803
        %v807 = vshrl.u32 %v742, 16
        %v809 = vrot.slane %v807, 7
        %v810 = vshll.u32 %v742, 16
        %v812 = vor.u32 %v809, %v810
        %v814 = vshrl.u32 %v743, 16
        %v816 = vrot.slane %v814, 7
        %v817 = vshll.u32 %v743, 16
        %v819 = vor.u32 %v816, %v817
        %v821 = vshrl.u32 %v744, 16
        %v823 = vrot.slane %v821, 7
        %v824 = vshll.u32 %v744, 16
        %v826 = vor.u32 %v823, %v824
        %v828 = vshrl.u32 %v745, 16
        %v830 = vrot.slane %v828, 7
        %v831 = vshll.u32 %v745, 16
        %v833 = vor.u32 %v830, %v831
        %v835 = vshrl.u32 %v746, 16
        %v837 = vrot.slane %v835, 7
        %v838 = vshll.u32 %v746, 16
        %v840 = vor.u32 %v837, %v838
        %v842 = vshrl.u32 %v747, 16
        %v844 = vrot.slane %v842, 7
        %v845 = vshll.u32 %v747, 16
        %v847 = vor.u32 %v844, %v845
        %v849 = vshrl.u32 %v748, 16
        %v851 = vrot.slane %v849, 7
        %v852 = vshll.u32 %v748, 16
        %v854 = vor.u32 %v851, %v852
        %v856 = vshrl.u32 %v749, 16
        %v858 = vrot.slane %v856, 7
        %v859 = vshll.u32 %v749, 16
        %v861 = vor.u32 %v858, %v859
        %vm894 = vcmask 1040384
        %vm895 = vsmask.f32 256
        %vm896 = vmand %vm894, %vm895
        %v897 = vsel %vm896, 0, %v756
        %v898 = vsel %vm896, 0, %v763
        %v899 = vsel %vm896, 0, %v770
        %v900 = vsel %vm896, 0, %v777
        %v901 = vsel %vm896, 0, %v784
        %v902 = vsel %vm896, 0, %v791
        %v903 = vsel %vm896, 0, %v798
        %v904 = vsel %vm896, 0, %v805
        %v905 = vsel %vm896, 0, %v812
        %v906 = vsel %vm896, 0, %v819
        %v907 = vsel %vm896, 0, %v826
        %v908 = vsel %vm896, 0, %v833
        %v909 = vsel %vm896, 0, %v840
        %v910 = vsel %vm896, 0, %v847
        %v911 = vsel %vm896, 0, %v854
        %v912 = vsel %vm896, 0, %v861
        %v913 = vsel %vm896, %v753, 0
        %v914 = vsel %vm896, %v760, 0
        %v915 = vsel %vm896, %v767, 0
        %v916 = vsel %vm896, %v774, 0
        %v917 = vsel %vm896, %v781, 0
        %v918 = vsel %vm896, %v788, 0
        %v919 = vsel %vm896, %v795, 0
        %v920 = vsel %vm896, %v802, 0
        %v921 = vsel %vm896, %v809, 0
        %v922 = vsel %vm896, %v816, 0
        %v923 = vsel %vm896, %v823, 0
        %v924 = vsel %vm896, %v830, 0
        %v925 = vsel %vm896, %v837, 0
        %v926 = vsel %vm896, %v844, 0
        %v927 = vsel %vm896, %v851, 0
        %v928 = vsel %vm896, %v858, 0
        %v962 = vunpack.c.l.b16 0
        %v963 = vunpack.c.h.b16 0
        %v964 = vunpack.c.l.b16 %v897
        %v965 = vunpack.c.h.b16 %v897
        %v966 = vunpack.c.l.b16 %v913
        %v967 = vunpack.c.l.b16 %v898
        %v968 = vunpack.c.h.b16 %v898
        %v969 = vunpack.c.l.b16 %v914
        %v970 = vunpack.c.l.b16 %v899
        %v971 = vunpack.c.h.b16 %v899
        %v972 = vunpack.c.l.b16 %v915
        %v973 = vunpack.c.l.b16 %v900
        %v974 = vunpack.c.h.b16 %v900
        %v975 = vunpack.c.l.b16 %v916
        %v976 = vunpack.c.l.b16 %v901
        %v977 = vunpack.c.h.b16 %v901
        %v978 = vunpack.c.l.b16 %v917
        %v979 = vunpack.c.l.b16 %v902
        %v980 = vunpack.c.h.b16 %v902
        %v981 = vunpack.c.l.b16 %v918
        %v982 = vunpack.c.l.b16 %v903
        %v983 = vunpack.c.h.b16 %v903
        %v984 = vunpack.c.l.b16 %v919
        %v985 = vunpack.c.l.b16 %v904
        %v986 = vunpack.c.h.b16 %v904
        %v987 = vunpack.c.l.b16 %v920
        %v988 = vunpack.c.l.b16 %v905
        %v989 = vunpack.c.h.b16 %v905
        %v990 = vunpack.c.l.b16 %v921
        %v991 = vunpack.c.l.b16 %v906
        %v992 = vunpack.c.h.b16 %v906
        %v993 = vunpack.c.l.b16 %v922
        %v994 = vunpack.c.l.b16 %v907
        %v995 = vunpack.c.h.b16 %v907
        %v996 = vunpack.c.l.b16 %v923
        %v997 = vunpack.c.l.b16 %v908
        %v998 = vunpack.c.h.b16 %v908
        %v999 = vunpack.c.l.b16 %v924
        %v1000 = vunpack.c.l.b16 %v909
        %v1001 = vunpack.c.h.b16 %v909
        %v1002 = vunpack.c.l.b16 %v925
        %v1003 = vunpack.c.l.b16 %v910
        %v1004 = vunpack.c.h.b16 %v910
        %v1005 = vunpack.c.l.b16 %v926
        %v1006 = vunpack.c.l.b16 %v911
        %v1007 = vunpack.c.h.b16 %v911
        %v1008 = vunpack.c.l.b16 %v927
        %v1009 = vunpack.c.l.b16 %v912
        %v1010 = vunpack.c.h.b16 %v912
        %v1011 = vunpack.c.l.b16 %v928
        %v1012 = vpack.c.b16 %v962, %v962
        %v1013 = vpack.c.b16 %v963, %v963
        %v1014 = vpack.c.b16 %v964, %v964
        %v1015 = vpack.c.b16 %v965, %v965
        %v1016 = vpack.c.b16 %v966, %v966
        %v1017 = vpack.c.b16 %v967, %v967
        %v1018 = vpack.c.b16 %v968, %v968
        %v1019 = vpack.c.b16 %v969, %v969
        %v1020 = vpack.c.b16 %v970, %v970
        %v1021 = vpack.c.b16 %v971, %v971
        %v1022 = vpack.c.b16 %v972, %v972
        %v1023 = vpack.c.b16 %v973, %v973
        %v1024 = vpack.c.b16 %v974, %v974
        %v1025 = vpack.c.b16 %v975, %v975
        %v1026 = vpack.c.b16 %v976, %v976
        %v1027 = vpack.c.b16 %v977, %v977
        %v1028 = vpack.c.b16 %v978, %v978
        %v1029 = vpack.c.b16 %v979, %v979
        %v1030 = vpack.c.b16 %v980, %v980
        %v1031 = vpack.c.b16 %v981, %v981
        %v1032 = vpack.c.b16 %v982, %v982
        %v1033 = vpack.c.b16 %v983, %v983
        %v1034 = vpack.c.b16 %v984, %v984
        %v1035 = vpack.c.b16 %v985, %v985
        %v1036 = vpack.c.b16 %v986, %v986
        %v1037 = vpack.c.b16 %v987, %v987
        %v1038 = vpack.c.b16 %v988, %v988
        %v1039 = vpack.c.b16 %v989, %v989
        %v1040 = vpack.c.b16 %v990, %v990
        %v1041 = vpack.c.b16 %v991, %v991
        %v1042 = vpack.c.b16 %v992, %v992
        %v1043 = vpack.c.b16 %v993, %v993
        %v1044 = vpack.c.b16 %v994, %v994
        %v1045 = vpack.c.b16 %v995, %v995
        %v1046 = vpack.c.b16 %v996, %v996
        %v1047 = vpack.c.b16 %v997, %v997
        %v1048 = vpack.c.b16 %v998, %v998
        %v1049 = vpack.c.b16 %v999, %v999
        %v1050 = vpack.c.b16 %v1000, %v1000
        %v1051 = vpack.c.b16 %v1001, %v1001
        %v1052 = vpack.c.b16 %v1002, %v1002
        %v1053 = vpack.c.b16 %v1003, %v1003
        %v1054 = vpack.c.b16 %v1004, %v1004
        %v1055 = vpack.c.b16 %v1005, %v1005
        %v1056 = vpack.c.b16 %v1006, %v1006
        %v1057 = vpack.c.b16 %v1007, %v1007
        %v1058 = vpack.c.b16 %v1008, %v1008
        %v1059 = vpack.c.b16 %v1009, %v1009
        %v1060 = vpack.c.b16 %v1010, %v1010
        %v1061 = vpack.c.b16 %v1011, %v1011
        %1112 = vst [vmem:[#allocation2] sm:$0xf] %v1012
        %1113 = vst [vmem:[#allocation2 + $0x4] sm:$0xf] %v1013
        %1114 = vst [vmem:[#allocation2 + $0x8] sm:$0x1] %v1012
        %1115 = vst [vmem:[#allocation2 + $0xc] sm:$0xf] %v1014
        %1116 = vst [vmem:[#allocation2 + $0x10] sm:$0xf] %v1015
        %1117 = vst [vmem:[#allocation2 + $0x14] sm:$0x1] %v1016
        %1118 = vst [vmem:[#allocation2 + $0x18] sm:$0xf] %v1017
        %1119 = vst [vmem:[#allocation2 + $0x1c] sm:$0xf] %v1018
        %1120 = vst [vmem:[#allocation2 + $0x20] sm:$0x1] %v1019
        %1121 = vst [vmem:[#allocation2 + $0x24] sm:$0xf] %v1020
        %1122 = vst [vmem:[#allocation2 + $0x28] sm:$0xf] %v1021
        %1123 = vst [vmem:[#allocation2 + $0x2c] sm:$0x1] %v1022
        %1124 = vst [vmem:[#allocation2 + $0x30] sm:$0xf] %v1023
        %1125 = vst [vmem:[#allocation2 + $0x34] sm:$0xf] %v1024
        %1126 = vst [vmem:[#allocation2 + $0x38] sm:$0x1] %v1025
        %1127 = vst [vmem:[#allocation2 + $0x3c] sm:$0xf] %v1026
        %1128 = vst [vmem:[#allocation2 + $0x40] sm:$0xf] %v1027
        %1129 = vst [vmem:[#allocation2 + $0x44] sm:$0x1] %v1028
        %1130 = vst [vmem:[#allocation2 + $0x48] sm:$0xf] %v1029
        %1131 = vst [vmem:[#allocation2 + $0x4c] sm:$0xf] %v1030
        %1132 = vst [vmem:[#allocation2 + $0x50] sm:$0x1] %v1031
        %1133 = vst [vmem:[#allocation2 + $0x54] sm:$0xf] %v1032
        %1134 = vst [vmem:[#allocation2 + $0x58] sm:$0xf] %v1033
        %1135 = vst [vmem:[#allocation2 + $0x5c] sm:$0x1] %v1034
        %1136 = vst [vmem:[#allocation2 + $0x60] sm:$0xf] %v1035
        %1137 = vst [vmem:[#allocation2 + $0x64] sm:$0xf] %v1036
        %1138 = vst [vmem:[#allocation2 + $0x68] sm:$0x1] %v1037
        %1139 = vst [vmem:[#allocation2 + $0x6c] sm:$0xf] %v1038
        %1140 = vst [vmem:[#allocation2 + $0x70] sm:$0xf] %v1039
        %1141 = vst [vmem:[#allocation2 + $0x74] sm:$0x1] %v1040
        %1142 = vst [vmem:[#allocation2 + $0x78] sm:$0xf] %v1041
        %1143 = vst [vmem:[#allocation2 + $0x7c] sm:$0xf] %v1042
        %1144 = vst [vmem:[#allocation2 + $0x80] sm:$0x1] %v1043
        %1145 = vst [vmem:[#allocation2 + $0x84] sm:$0xf] %v1044
        %1146 = vst [vmem:[#allocation2 + $0x88] sm:$0xf] %v1045
        %1147 = vst [vmem:[#allocation2 + $0x8c] sm:$0x1] %v1046
        %1148 = vst [vmem:[#allocation2 + $0x90] sm:$0xf] %v1047
        %1149 = vst [vmem:[#allocation2 + $0x94] sm:$0xf] %v1048
        %1150 = vst [vmem:[#allocation2 + $0x98] sm:$0x1] %v1049
        %1151 = vst [vmem:[#allocation2 + $0x9c] sm:$0xf] %v1050
        %1152 = vst [vmem:[#allocation2 + $0xa0] sm:$0xf] %v1051
        %1153 = vst [vmem:[#allocation2 + $0xa4] sm:$0x1] %v1052
        %1154 = vst [vmem:[#allocation2 + $0xa8] sm:$0xf] %v1053
        %1155 = vst [vmem:[#allocation2 + $0xac] sm:$0xf] %v1054
        %1156 = vst [vmem:[#allocation2 + $0xb0] sm:$0x1] %v1055
        %1157 = vst [vmem:[#allocation2 + $0xb4] sm:$0xf] %v1056
        %1158 = vst [vmem:[#allocation2 + $0xb8] sm:$0xf] %v1057
        %1159 = vst [vmem:[#allocation2 + $0xbc] sm:$0x1] %v1058
        %1160 = vst [vmem:[#allocation2 + $0xc0] sm:$0xf] %v1059
        %1161 = vst [vmem:[#allocation2 + $0xc4] sm:$0xf] %v1060
        %1162 = vst [vmem:[#allocation2 + $0xc8] sm:$0x1] %v1061
        %1163 = vst [vmem:[#allocation2 + $0xcc] sm:$0xf] %v1012
        %1164 = vst [vmem:[#allocation2 + $0xd0] sm:$0xf] %v1013
        %1165 = vst [vmem:[#allocation2 + $0xd4] sm:$0x1] %v1012
        %v1166 = vld [vmem:[#allocation2] sm:$0xf]
        %v1167 = vld [vmem:[#allocation2 + $0x4] sm:$0xf]
        %v1168 = vld [vmem:[#allocation2 + $0xc] sm:$0xf]
        %v1169 = vld [vmem:[#allocation2 + $0x10] sm:$0xf]
        %v1170 = vld [vmem:[#allocation2 + $0x18] sm:$0xf]
        %v1171 = vld [vmem:[#allocation2 + $0x1c] sm:$0xf]
        %v1172 = vld [vmem:[#allocation2 + $0x24] sm:$0xf]
        %v1173 = vld [vmem:[#allocation2 + $0x28] sm:$0xf]
        %v1174 = vld [vmem:[#allocation2 + $0x30] sm:$0xf]
        %v1175 = vld [vmem:[#allocation2 + $0x34] sm:$0xf]
        %v1176 = vld [vmem:[#allocation2 + $0x3c] sm:$0xf]
        %v1177 = vld [vmem:[#allocation2 + $0x40] sm:$0xf]
        %v1178 = vld [vmem:[#allocation2 + $0x48] sm:$0xf]
        %v1179 = vld [vmem:[#allocation2 + $0x4c] sm:$0xf]
        %v1180 = vld [vmem:[#allocation2 + $0x54] sm:$0xf]
        %v1181 = vld [vmem:[#allocation2 + $0x58] sm:$0xf]
        %v1182 = vld [vmem:[#allocation2 + $0x60] sm:$0xf]
        %v1183 = vld [vmem:[#allocation2 + $0x64] sm:$0xf]
        %v1184 = vld [vmem:[#allocation2 + $0x6c] sm:$0xf]
        %v1185 = vld [vmem:[#allocation2 + $0x70] sm:$0xf]
        %v1186 = vld [vmem:[#allocation2 + $0x78] sm:$0xf]
        %v1187 = vld [vmem:[#allocation2 + $0x7c] sm:$0xf]
        %v1188 = vld [vmem:[#allocation2 + $0x84] sm:$0xf]
        %v1189 = vld [vmem:[#allocation2 + $0x88] sm:$0xf]
        %v1190 = vld [vmem:[#allocation2 + $0x90] sm:$0xf]
        %v1191 = vld [vmem:[#allocation2 + $0x94] sm:$0xf]
        %v1192 = vld [vmem:[#allocation2 + $0x9c] sm:$0xf]
        %v1193 = vld [vmem:[#allocation2 + $0xa0] sm:$0xf]
        %v1194 = vld [vmem:[#allocation2 + $0xa8] sm:$0xf]
        %v1195 = vld [vmem:[#allocation2 + $0xac] sm:$0xf]
        %v1196 = vld [vmem:[#allocation2 + $0xb4] sm:$0xf]
        %v1197 = vld [vmem:[#allocation2 + $0xb8] sm:$0xf]
        %v1198 = vld [vmem:[#allocation8] sm:$0xf]
        %v1199 = vld [vmem:[#allocation8 + $0x4] sm:$0xf]
        %v1200 = vld [vmem:[#allocation8 + $0x8] sm:$0xf]
        %v1201 = vld [vmem:[#allocation8 + $0xc] sm:$0xf]
        %v1202 = vld [vmem:[#allocation8 + $0x10] sm:$0xf]
        %v1203 = vld [vmem:[#allocation8 + $0x14] sm:$0xf]
        %v1204 = vld [vmem:[#allocation8 + $0x18] sm:$0xf]
        %v1205 = vld [vmem:[#allocation8 + $0x1c] sm:$0xf]
        %v1206 = vld [vmem:[#allocation8 + $0x20] sm:$0xf]
        %v1207 = vld [vmem:[#allocation8 + $0x24] sm:$0xf]
        %v1208 = vld [vmem:[#allocation8 + $0x28] sm:$0xf]
        %v1209 = vld [vmem:[#allocation8 + $0x2c] sm:$0xf]
        %v1210 = vld [vmem:[#allocation8 + $0x30] sm:$0xf]
        %v1211 = vld [vmem:[#allocation8 + $0x34] sm:$0xf]
        %v1212 = vld [vmem:[#allocation8 + $0x38] sm:$0xf]
        %v1213 = vld [vmem:[#allocation8 + $0x3c] sm:$0xf]
        %v1214 = vld [vmem:[#allocation2 + $0x8] sm:$0x1]
        %v1215 = vld [vmem:[#allocation2 + $0x14] sm:$0x1]
        %v1216 = vld [vmem:[#allocation2 + $0x20] sm:$0x1]
        %v1217 = vld [vmem:[#allocation2 + $0x2c] sm:$0x1]
        %v1218 = vld [vmem:[#allocation2 + $0x38] sm:$0x1]
        %v1219 = vld [vmem:[#allocation2 + $0x44] sm:$0x1]
        %v1220 = vld [vmem:[#allocation2 + $0x50] sm:$0x1]
        %v1221 = vld [vmem:[#allocation2 + $0x5c] sm:$0x1]
        %v1222 = vld [vmem:[#allocation2 + $0x68] sm:$0x1]
        %v1223 = vld [vmem:[#allocation2 + $0x74] sm:$0x1]
        %v1224 = vld [vmem:[#allocation2 + $0x80] sm:$0x1]
        %v1225 = vld [vmem:[#allocation2 + $0x8c] sm:$0x1]
        %v1226 = vld [vmem:[#allocation2 + $0x98] sm:$0x1]
        %v1227 = vld [vmem:[#allocation2 + $0xa4] sm:$0x1]
        %v1228 = vld [vmem:[#allocation2 + $0xb0] sm:$0x1]
        %v1229 = vld [vmem:[#allocation2 + $0xbc] sm:$0x1]
        %vm1230 = vsmask.f32 3328
        %vm1231 = vsmask.f32 7440
        %vm1232 = vmor %vm1230, %vm1231
        %v1234 = vshrl.u32 %v1166, 16
        %v1236 = vrot.slane %v1234, 4
        %v1237 = vshll.u32 %v1166, 16
        %v1239 = vrot.slane %v1237, 5
        %v1240 = vor.u32 %v1236, %v1239
        %v1241 = vrot.slane %v1240, 4
        %v1243 = vshll.u32 %v1167, 16
        %v1245 = vrot.slane %v1243, 5
        %v1246 = vsel %vm1232, %v1241, %v1245
        %v1247 = vshrl.u32 %v1167, 16
        %v1249 = vrot.slane %v1247, 4
        %v1250 = vor.u32 %v1249, %v1245
        %v1251 = vrot.slane %v1250, 4
        %v1253 = vshll.u32 %v1214, 16
        %v1255 = vrot.slane %v1253, 5
        %v1256 = vsel %vm1232, %v1251, %v1255
        %v1258 = vshrl.u32 %v1168, 16
        %v1260 = vrot.slane %v1258, 4
        %v1261 = vshll.u32 %v1168, 16
        %v1263 = vrot.slane %v1261, 5
        %v1264 = vor.u32 %v1260, %v1263
        %v1265 = vrot.slane %v1264, 4
        %v1267 = vshll.u32 %v1169, 16
        %v1269 = vrot.slane %v1267, 5
        %v1270 = vsel %vm1232, %v1265, %v1269
        %v1271 = vshrl.u32 %v1169, 16
        %v1273 = vrot.slane %v1271, 4
        %v1274 = vor.u32 %v1273, %v1269
        %v1275 = vrot.slane %v1274, 4
        %v1277 = vshll.u32 %v1215, 16
        %v1279 = vrot.slane %v1277, 5
        %v1280 = vsel %vm1232, %v1275, %v1279
        %v1282 = vshrl.u32 %v1170, 16
        %v1284 = vrot.slane %v1282, 4
        %v1285 = vshll.u32 %v1170, 16
        %v1287 = vrot.slane %v1285, 5
        %v1288 = vor.u32 %v1284, %v1287
        %v1289 = vrot.slane %v1288, 4
        %v1291 = vshll.u32 %v1171, 16
        %v1293 = vrot.slane %v1291, 5
        %v1294 = vsel %vm1232, %v1289, %v1293
        %v1295 = vshrl.u32 %v1171, 16
        %v1297 = vrot.slane %v1295, 4
        %v1298 = vor.u32 %v1297, %v1293
        %v1299 = vrot.slane %v1298, 4
        %v1301 = vshll.u32 %v1216, 16
        %v1303 = vrot.slane %v1301, 5
        %v1304 = vsel %vm1232, %v1299, %v1303
        %v1306 = vshrl.u32 %v1172, 16
        %v1308 = vrot.slane %v1306, 4
        %v1309 = vshll.u32 %v1172, 16
        %v1311 = vrot.slane %v1309, 5
        %v1312 = vor.u32 %v1308, %v1311
        %v1313 = vrot.slane %v1312, 4
        %v1315 = vshll.u32 %v1173, 16
        %v1317 = vrot.slane %v1315, 5
        %v1318 = vsel %vm1232, %v1313, %v1317
        %v1319 = vshrl.u32 %v1173, 16
        %v1321 = vrot.slane %v1319, 4
        %v1322 = vor.u32 %v1321, %v1317
        %v1323 = vrot.slane %v1322, 4
        %v1325 = vshll.u32 %v1217, 16
        %v1327 = vrot.slane %v1325, 5
        %v1328 = vsel %vm1232, %v1323, %v1327
        %v1330 = vshrl.u32 %v1174, 16
        %v1332 = vrot.slane %v1330, 4
        %v1333 = vshll.u32 %v1174, 16
        %v1335 = vrot.slane %v1333, 5
        %v1336 = vor.u32 %v1332, %v1335
        %v1337 = vrot.slane %v1336, 4
        %v1339 = vshll.u32 %v1175, 16
        %v1341 = vrot.slane %v1339, 5
        %v1342 = vsel %vm1232, %v1337, %v1341
        %v1343 = vshrl.u32 %v1175, 16
        %v1345 = vrot.slane %v1343, 4
        %v1346 = vor.u32 %v1345, %v1341
        %v1347 = vrot.slane %v1346, 4
        %v1349 = vshll.u32 %v1218, 16
        %v1351 = vrot.slane %v1349, 5
        %v1352 = vsel %vm1232, %v1347, %v1351
        %v1354 = vshrl.u32 %v1176, 16
        %v1356 = vrot.slane %v1354, 4
        %v1357 = vshll.u32 %v1176, 16
        %v1359 = vrot.slane %v1357, 5
        %v1360 = vor.u32 %v1356, %v1359
        %v1361 = vrot.slane %v1360, 4
        %v1363 = vshll.u32 %v1177, 16
        %v1365 = vrot.slane %v1363, 5
        %v1366 = vsel %vm1232, %v1361, %v1365
        %v1367 = vshrl.u32 %v1177, 16
        %v1369 = vrot.slane %v1367, 4
        %v1370 = vor.u32 %v1369, %v1365
        %v1371 = vrot.slane %v1370, 4
        %v1373 = vshll.u32 %v1219, 16
        %v1375 = vrot.slane %v1373, 5
        %v1376 = vsel %vm1232, %v1371, %v1375
        %v1378 = vshrl.u32 %v1178, 16
        %v1380 = vrot.slane %v1378, 4
        %v1381 = vshll.u32 %v1178, 16
        %v1383 = vrot.slane %v1381, 5
        %v1384 = vor.u32 %v1380, %v1383
        %v1385 = vrot.slane %v1384, 4
        %v1387 = vshll.u32 %v1179, 16
        %v1389 = vrot.slane %v1387, 5
        %v1390 = vsel %vm1232, %v1385, %v1389
        %v1391 = vshrl.u32 %v1179, 16
        %v1393 = vrot.slane %v1391, 4
        %v1394 = vor.u32 %v1393, %v1389
        %v1395 = vrot.slane %v1394, 4
        %v1397 = vshll.u32 %v1220, 16
        %v1399 = vrot.slane %v1397, 5
        %v1400 = vsel %vm1232, %v1395, %v1399
        %v1402 = vshrl.u32 %v1180, 16
        %v1404 = vrot.slane %v1402, 4
        %v1405 = vshll.u32 %v1180, 16
        %v1407 = vrot.slane %v1405, 5
        %v1408 = vor.u32 %v1404, %v1407
        %v1409 = vrot.slane %v1408, 4
        %v1411 = vshll.u32 %v1181, 16
        %v1413 = vrot.slane %v1411, 5
        %v1414 = vsel %vm1232, %v1409, %v1413
        %v1415 = vshrl.u32 %v1181, 16
        %v1417 = vrot.slane %v1415, 4
        %v1418 = vor.u32 %v1417, %v1413
        %v1419 = vrot.slane %v1418, 4
        %v1421 = vshll.u32 %v1221, 16
        %v1423 = vrot.slane %v1421, 5
        %v1424 = vsel %vm1232, %v1419, %v1423
        %v1426 = vshrl.u32 %v1182, 16
        %v1428 = vrot.slane %v1426, 4
        %v1429 = vshll.u32 %v1182, 16
        %v1431 = vrot.slane %v1429, 5
        %v1432 = vor.u32 %v1428, %v1431
        %v1433 = vrot.slane %v1432, 4
        %v1435 = vshll.u32 %v1183, 16
        %v1437 = vrot.slane %v1435, 5
        %v1438 = vsel %vm1232, %v1433, %v1437
        %v1439 = vshrl.u32 %v1183, 16
        %v1441 = vrot.slane %v1439, 4
        %v1442 = vor.u32 %v1441, %v1437
        %v1443 = vrot.slane %v1442, 4
        %v1445 = vshll.u32 %v1222, 16
        %v1447 = vrot.slane %v1445, 5
        %v1448 = vsel %vm1232, %v1443, %v1447
        %v1450 = vshrl.u32 %v1184, 16
        %v1452 = vrot.slane %v1450, 4
        %v1453 = vshll.u32 %v1184, 16
        %v1455 = vrot.slane %v1453, 5
        %v1456 = vor.u32 %v1452, %v1455
        %v1457 = vrot.slane %v1456, 4
        %v1459 = vshll.u32 %v1185, 16
        %v1461 = vrot.slane %v1459, 5
        %v1462 = vsel %vm1232, %v1457, %v1461
        %v1463 = vshrl.u32 %v1185, 16
        %v1465 = vrot.slane %v1463, 4
        %v1466 = vor.u32 %v1465, %v1461
        %v1467 = vrot.slane %v1466, 4
        %v1469 = vshll.u32 %v1223, 16
        %v1471 = vrot.slane %v1469, 5
        %v1472 = vsel %vm1232, %v1467, %v1471
        %v1474 = vshrl.u32 %v1186, 16
        %v1476 = vrot.slane %v1474, 4
        %v1477 = vshll.u32 %v1186, 16
        %v1479 = vrot.slane %v1477, 5
        %v1480 = vor.u32 %v1476, %v1479
        %v1481 = vrot.slane %v1480, 4
        %v1483 = vshll.u32 %v1187, 16
        %v1485 = vrot.slane %v1483, 5
        %v1486 = vsel %vm1232, %v1481, %v1485
        %v1487 = vshrl.u32 %v1187, 16
        %v1489 = vrot.slane %v1487, 4
        %v1490 = vor.u32 %v1489, %v1485
        %v1491 = vrot.slane %v1490, 4
        %v1493 = vshll.u32 %v1224, 16
        %v1495 = vrot.slane %v1493, 5
        %v1496 = vsel %vm1232, %v1491, %v1495
        %v1498 = vshrl.u32 %v1188, 16
        %v1500 = vrot.slane %v1498, 4
        %v1501 = vshll.u32 %v1188, 16
        %v1503 = vrot.slane %v1501, 5
        %v1504 = vor.u32 %v1500, %v1503
        %v1505 = vrot.slane %v1504, 4
        %v1507 = vshll.u32 %v1189, 16
        %v1509 = vrot.slane %v1507, 5
        %v1510 = vsel %vm1232, %v1505, %v1509
        %v1511 = vshrl.u32 %v1189, 16
        %v1513 = vrot.slane %v1511, 4
        %v1514 = vor.u32 %v1513, %v1509
        %v1515 = vrot.slane %v1514, 4
        %v1517 = vshll.u32 %v1225, 16
        %v1519 = vrot.slane %v1517, 5
        %v1520 = vsel %vm1232, %v1515, %v1519
        %v1522 = vshrl.u32 %v1190, 16
        %v1524 = vrot.slane %v1522, 4
        %v1525 = vshll.u32 %v1190, 16
        %v1527 = vrot.slane %v1525, 5
        %v1528 = vor.u32 %v1524, %v1527
        %v1529 = vrot.slane %v1528, 4
        %v1531 = vshll.u32 %v1191, 16
        %v1533 = vrot.slane %v1531, 5
        %v1534 = vsel %vm1232, %v1529, %v1533
        %v1535 = vshrl.u32 %v1191, 16
        %v1537 = vrot.slane %v1535, 4
        %v1538 = vor.u32 %v1537, %v1533
        %v1539 = vrot.slane %v1538, 4
        %v1541 = vshll.u32 %v1226, 16
        %v1543 = vrot.slane %v1541, 5
        %v1544 = vsel %vm1232, %v1539, %v1543
        %v1546 = vshrl.u32 %v1192, 16
        %v1548 = vrot.slane %v1546, 4
        %v1549 = vshll.u32 %v1192, 16
        %v1551 = vrot.slane %v1549, 5
        %v1552 = vor.u32 %v1548, %v1551
        %v1553 = vrot.slane %v1552, 4
        %v1555 = vshll.u32 %v1193, 16
        %v1557 = vrot.slane %v1555, 5
        %v1558 = vsel %vm1232, %v1553, %v1557
        %v1559 = vshrl.u32 %v1193, 16
        %v1561 = vrot.slane %v1559, 4
        %v1562 = vor.u32 %v1561, %v1557
        %v1563 = vrot.slane %v1562, 4
        %v1565 = vshll.u32 %v1227, 16
        %v1567 = vrot.slane %v1565, 5
        %v1568 = vsel %vm1232, %v1563, %v1567
        %v1570 = vshrl.u32 %v1194, 16
        %v1572 = vrot.slane %v1570, 4
        %v1573 = vshll.u32 %v1194, 16
        %v1575 = vrot.slane %v1573, 5
        %v1576 = vor.u32 %v1572, %v1575
        %v1577 = vrot.slane %v1576, 4
        %v1579 = vshll.u32 %v1195, 16
        %v1581 = vrot.slane %v1579, 5
        %v1582 = vsel %vm1232, %v1577, %v1581
        %v1583 = vshrl.u32 %v1195, 16
        %v1585 = vrot.slane %v1583, 4
        %v1586 = vor.u32 %v1585, %v1581
        %v1587 = vrot.slane %v1586, 4
        %v1589 = vshll.u32 %v1228, 16
        %v1591 = vrot.slane %v1589, 5
        %v1592 = vsel %vm1232, %v1587, %v1591
        %v1594 = vshrl.u32 %v1196, 16
        %v1596 = vrot.slane %v1594, 4
        %v1597 = vshll.u32 %v1196, 16
        %v1599 = vrot.slane %v1597, 5
        %v1600 = vor.u32 %v1596, %v1599
        %v1601 = vrot.slane %v1600, 4
        %v1603 = vshll.u32 %v1197, 16
        %v1605 = vrot.slane %v1603, 5
        %v1606 = vsel %vm1232, %v1601, %v1605
        %v1607 = vshrl.u32 %v1197, 16
        %v1609 = vrot.slane %v1607, 4
        %v1610 = vor.u32 %v1609, %v1605
        %v1611 = vrot.slane %v1610, 4
        %v1613 = vshll.u32 %v1229, 16
        %v1615 = vrot.slane %v1613, 5
        %v1616 = vsel %vm1232, %v1611, %v1615
        %s1617 = scalar_lea.vmem [#allocation8], 64
        %v1618 = vld [vmem:[%s1617] sm:$0xf]
        %v1619 = vld [vmem:[%s1617 + $0x4] sm:$0xf]
        %v1620 = vld [vmem:[%s1617 + $0x8] sm:$0xf]
        %v1621 = vld [vmem:[%s1617 + $0xc] sm:$0xf]
        %v1622 = vld [vmem:[%s1617 + $0x10] sm:$0xf]
        %v1623 = vld [vmem:[%s1617 + $0x14] sm:$0xf]
        %v1624 = vld [vmem:[%s1617 + $0x18] sm:$0xf]
        %v1625 = vld [vmem:[%s1617 + $0x1c] sm:$0xf]
        %v1626 = vld [vmem:[%s1617 + $0x20] sm:$0xf]
        %v1627 = vld [vmem:[%s1617 + $0x24] sm:$0xf]
        %v1628 = vld [vmem:[%s1617 + $0x28] sm:$0xf]
        %v1629 = vld [vmem:[%s1617 + $0x2c] sm:$0xf]
        %v1630 = vld [vmem:[%s1617 + $0x30] sm:$0xf]
        %v1631 = vld [vmem:[%s1617 + $0x34] sm:$0xf]
        %v1632 = vld [vmem:[%s1617 + $0x38] sm:$0xf]
        %v1633 = vld [vmem:[%s1617 + $0x3c] sm:$0xf]
        %v1634 = vunpack.c.l.b16 %v1246
        %v1635 = vunpack.c.l.b16 %v1256
        %v1636 = vunpack.c.l.b16 %v1270
        %v1637 = vunpack.c.l.b16 %v1280
        %v1638 = vunpack.c.l.b16 %v1294
        %v1639 = vunpack.c.l.b16 %v1304
        %v1640 = vunpack.c.l.b16 %v1318
        %v1641 = vunpack.c.l.b16 %v1328
        %v1642 = vunpack.c.l.b16 %v1342
        %v1643 = vunpack.c.l.b16 %v1352
        %v1644 = vunpack.c.l.b16 %v1366
        %v1645 = vunpack.c.l.b16 %v1376
        %v1646 = vunpack.c.l.b16 %v1390
        %v1647 = vunpack.c.l.b16 %v1400
        %v1648 = vunpack.c.l.b16 %v1414
        %v1649 = vunpack.c.l.b16 %v1424
        %v1650 = vunpack.c.l.b16 %v1438
        %v1651 = vunpack.c.l.b16 %v1448
        %v1652 = vunpack.c.l.b16 %v1462
        %v1653 = vunpack.c.l.b16 %v1472
        %v1654 = vunpack.c.l.b16 %v1486
        %v1655 = vunpack.c.l.b16 %v1496
        %v1656 = vunpack.c.l.b16 %v1510
        %v1657 = vunpack.c.l.b16 %v1520
        %v1658 = vunpack.c.l.b16 %v1534
        %v1659 = vunpack.c.l.b16 %v1544
        %v1660 = vunpack.c.l.b16 %v1558
        %v1661 = vunpack.c.l.b16 %v1568
        %v1662 = vunpack.c.l.b16 %v1582
        %v1663 = vunpack.c.l.b16 %v1592
        %v1664 = vunpack.c.l.b16 %v1606
        %v1665 = vunpack.c.l.b16 %v1616
        %v1666 = vpack.c.b16 %v1635, %v1634
        %v1667 = vpack.c.b16 %v1637, %v1636
        %v1668 = vpack.c.b16 %v1639, %v1638
        %v1669 = vpack.c.b16 %v1641, %v1640
        %v1670 = vpack.c.b16 %v1643, %v1642
        %v1671 = vpack.c.b16 %v1645, %v1644
        %v1672 = vpack.c.b16 %v1647, %v1646
        %v1673 = vpack.c.b16 %v1649, %v1648
        %v1674 = vpack.c.b16 %v1651, %v1650
        %v1675 = vpack.c.b16 %v1653, %v1652
        %v1676 = vpack.c.b16 %v1655, %v1654
        %v1677 = vpack.c.b16 %v1657, %v1656
        %v1678 = vpack.c.b16 %v1659, %v1658
        %v1679 = vpack.c.b16 %v1661, %v1660
        %v1680 = vpack.c.b16 %v1663, %v1662
        %v1681 = vpack.c.b16 %v1665, %v1664
        %v1714 = vunpack.c.l.b16 %v1618
        %v1715 = vunpack.c.l.b16 %v1619
        %v1716 = vunpack.c.l.b16 %v1620
        %v1717 = vunpack.c.l.b16 %v1621
        %v1718 = vunpack.c.l.b16 %v1622
        %v1719 = vunpack.c.l.b16 %v1623
        %v1720 = vunpack.c.l.b16 %v1624
        %v1721 = vunpack.c.l.b16 %v1625
        %v1722 = vunpack.c.l.b16 %v1626
        %v1723 = vunpack.c.l.b16 %v1627
        %v1724 = vunpack.c.l.b16 %v1628
        %v1725 = vunpack.c.l.b16 %v1629
        %v1726 = vunpack.c.l.b16 %v1630
        %v1727 = vunpack.c.l.b16 %v1631
        %v1728 = vunpack.c.l.b16 %v1632
        %v1729 = vunpack.c.l.b16 %v1633
        %v1730 = vpack.c.b16 %v1715, %v1714
        %v1731 = vpack.c.b16 %v1717, %v1716
        %v1732 = vpack.c.b16 %v1719, %v1718
        %v1733 = vpack.c.b16 %v1721, %v1720
        %v1734 = vpack.c.b16 %v1723, %v1722
        %v1735 = vpack.c.b16 %v1725, %v1724
        %v1736 = vpack.c.b16 %v1727, %v1726
        %v1737 = vpack.c.b16 %v1729, %v1728
        %1746 = vmatprep.subr.bf16.mxu0 0
        %1747 = vmatpush1.bf16.msra.mxu0 %v1737
        %1748 = vmatprep.subr.bf16.mxu0 0
        %1749 = vmatpush1.bf16.msra.mxu0 %v1736
        %1750 = vmatprep.subr.bf16.mxu0 0
        %1751 = vmatpush1.bf16.msra.mxu0 %v1735
        %1752 = vmatprep.subr.bf16.mxu0 0
        %1753 = vmatpush1.bf16.msra.mxu0 %v1734
        %1754 = vmatprep.subr.bf16.mxu0 0
        %1755 = vmatpush1.bf16.msra.mxu0 %v1733
        %1756 = vmatprep.subr.bf16.mxu0 0
        %1757 = vmatpush1.bf16.msra.mxu0 %v1732
        %1758 = vmatprep.subr.bf16.mxu0 0
        %1759 = vmatpush1.bf16.msra.mxu0 %v1731
        %1760 = vmatprep.subr.bf16.mxu0 0
        %1761 = vmatpush1.bf16.msra.mxu0 %v1730
        %1762 = vmatprep.subr.bf16.mxu0 0
        %1763 = vmatpush2.bf16.msra.mxu0 0
        %1764 = vmatprep.subr.bf16.mxu0 0
        %1765 = vmatpush2.bf16.msra.mxu0 0
        %1766 = vmatprep.subr.bf16.mxu0 0
        %1767 = vmatpush2.bf16.msra.mxu0 0
        %1768 = vmatprep.subr.bf16.mxu0 0
        %1769 = vmatpush2.bf16.msra.mxu0 0
        %1770 = vmatprep.subr.bf16.mxu0 0
        %1771 = vmatpush2.bf16.msra.mxu0 0
        %1772 = vmatprep.subr.bf16.mxu0 0
        %1773 = vmatpush2.bf16.msra.mxu0 0
        %1774 = vmatprep.subr.bf16.mxu0 0
        %1775 = vmatpush2.bf16.msra.mxu0 0
        %1776 = vmatprep.subr.bf16.mxu0 0
        %1777 = vmatpush2.bf16.msra.mxu0 0
        %1778 = vmatprep.mubr.bf16.mxu0 0
        %1779 = vmatmul.mubr.bf16.gmra.mxu0 %v1666
        %v1780 = vpop.f32.mrf.mxu0
        %v1781 = vadd.f32 0.0, %v1780
        %v1782 = vpop.f32.mrf.mxu0
        %v1783 = vpop.f32.mrf.mxu0
        %v1784 = vadd.f32 0.0, %v1783
        %v1785 = vpop.f32.mrf.mxu0
        %1786 = vmatprep.mubr.bf16.mxu0 0
        %1787 = vmatmul.mubr.bf16.gmra.mxu0 %v1667
        %v1788 = vpop.f32.mrf.mxu0
        %v1789 = vadd.f32 0.0, %v1788
        %v1790 = vpop.f32.mrf.mxu0
        %v1791 = vpop.f32.mrf.mxu0
        %v1792 = vadd.f32 0.0, %v1791
        %v1793 = vpop.f32.mrf.mxu0
        %1794 = vmatprep.mubr.bf16.mxu0 0
        %1795 = vmatmul.mubr.bf16.gmra.mxu0 %v1668
        %v1796 = vpop.f32.mrf.mxu0
        %v1797 = vadd.f32 0.0, %v1796
        %v1798 = vpop.f32.mrf.mxu0
        %v1799 = vpop.f32.mrf.mxu0
        %v1800 = vadd.f32 0.0, %v1799
        %v1801 = vpop.f32.mrf.mxu0
        %1802 = vmatprep.mubr.bf16.mxu0 0
        %1803 = vmatmul.mubr.bf16.gmra.mxu0 %v1669
        %v1804 = vpop.f32.mrf.mxu0
        %v1805 = vadd.f32 0.0, %v1804
        %v1806 = vpop.f32.mrf.mxu0
        %v1807 = vpop.f32.mrf.mxu0
        %v1808 = vadd.f32 0.0, %v1807
        %v1809 = vpop.f32.mrf.mxu0
        %1810 = vmatprep.mubr.bf16.mxu0 0
        %1811 = vmatmul.mubr.bf16.gmra.mxu0 %v1670
        %v1812 = vpop.f32.mrf.mxu0
        %v1813 = vadd.f32 0.0, %v1812
        %v1814 = vpop.f32.mrf.mxu0
        %v1815 = vpop.f32.mrf.mxu0
        %v1816 = vadd.f32 0.0, %v1815
        %v1817 = vpop.f32.mrf.mxu0
        %1818 = vmatprep.mubr.bf16.mxu0 0
        %1819 = vmatmul.mubr.bf16.gmra.mxu0 %v1671
        %v1820 = vpop.f32.mrf.mxu0
        %v1821 = vadd.f32 0.0, %v1820
        %v1822 = vpop.f32.mrf.mxu0
        %v1823 = vpop.f32.mrf.mxu0
        %v1824 = vadd.f32 0.0, %v1823
        %v1825 = vpop.f32.mrf.mxu0
        %1826 = vmatprep.mubr.bf16.mxu0 0
        %1827 = vmatmul.mubr.bf16.gmra.mxu0 %v1672
        %v1828 = vpop.f32.mrf.mxu0
        %v1829 = vadd.f32 0.0, %v1828
        %v1830 = vpop.f32.mrf.mxu0
        %v1831 = vpop.f32.mrf.mxu0
        %v1832 = vadd.f32 0.0, %v1831
        %v1833 = vpop.f32.mrf.mxu0
        %1834 = vmatprep.mubr.bf16.mxu0 0
        %1835 = vmatmul.mubr.bf16.gmra.mxu0 %v1673
        %v1836 = vpop.f32.mrf.mxu0
        %v1837 = vadd.f32 0.0, %v1836
        %v1838 = vpop.f32.mrf.mxu0
        %v1839 = vpop.f32.mrf.mxu0
        %v1840 = vadd.f32 0.0, %v1839
        %v1841 = vpop.f32.mrf.mxu0
        %1842 = vmatprep.mubr.bf16.mxu0 0
        %1843 = vmatmul.mubr.bf16.gmra.mxu0 %v1674
        %v1844 = vpop.f32.mrf.mxu0
        %v1845 = vadd.f32 0.0, %v1844
        %v1846 = vpop.f32.mrf.mxu0
        %v1847 = vpop.f32.mrf.mxu0
        %v1848 = vadd.f32 0.0, %v1847
        %v1849 = vpop.f32.mrf.mxu0
        %1850 = vmatprep.mubr.bf16.mxu0 0
        %1851 = vmatmul.mubr.bf16.gmra.mxu0 %v1675
        %v1852 = vpop.f32.mrf.mxu0
        %v1853 = vadd.f32 0.0, %v1852
        %v1854 = vpop.f32.mrf.mxu0
        %v1855 = vpop.f32.mrf.mxu0
        %v1856 = vadd.f32 0.0, %v1855
        %v1857 = vpop.f32.mrf.mxu0
        %1858 = vmatprep.mubr.bf16.mxu0 0
        %1859 = vmatmul.mubr.bf16.gmra.mxu0 %v1676
        %v1860 = vpop.f32.mrf.mxu0
        %v1861 = vadd.f32 0.0, %v1860
        %v1862 = vpop.f32.mrf.mxu0
        %v1863 = vpop.f32.mrf.mxu0
        %v1864 = vadd.f32 0.0, %v1863
        %v1865 = vpop.f32.mrf.mxu0
        %1866 = vmatprep.mubr.bf16.mxu0 0
        %1867 = vmatmul.mubr.bf16.gmra.mxu0 %v1677
        %v1868 = vpop.f32.mrf.mxu0
        %v1869 = vadd.f32 0.0, %v1868
        %v1870 = vpop.f32.mrf.mxu0
        %v1871 = vpop.f32.mrf.mxu0
        %v1872 = vadd.f32 0.0, %v1871
        %v1873 = vpop.f32.mrf.mxu0
        %1874 = vmatprep.mubr.bf16.mxu0 0
        %1875 = vmatmul.mubr.bf16.gmra.mxu0 %v1678
        %v1876 = vpop.f32.mrf.mxu0
        %v1877 = vadd.f32 0.0, %v1876
        %v1878 = vpop.f32.mrf.mxu0
        %v1879 = vpop.f32.mrf.mxu0
        %v1880 = vadd.f32 0.0, %v1879
        %v1881 = vpop.f32.mrf.mxu0
        %1882 = vmatprep.mubr.bf16.mxu0 0
        %1883 = vmatmul.mubr.bf16.gmra.mxu0 %v1679
        %v1884 = vpop.f32.mrf.mxu0
        %v1885 = vadd.f32 0.0, %v1884
        %v1886 = vpop.f32.mrf.mxu0
        %v1887 = vpop.f32.mrf.mxu0
        %v1888 = vadd.f32 0.0, %v1887
        %v1889 = vpop.f32.mrf.mxu0
        %1890 = vmatprep.mubr.bf16.mxu0 0
        %1891 = vmatmul.mubr.bf16.gmra.mxu0 %v1680
        %v1892 = vpop.f32.mrf.mxu0
        %v1893 = vadd.f32 0.0, %v1892
        %v1894 = vpop.f32.mrf.mxu0
        %v1895 = vpop.f32.mrf.mxu0
        %v1896 = vadd.f32 0.0, %v1895
        %v1897 = vpop.f32.mrf.mxu0
        %1898 = vmatprep.mubr.bf16.mxu0 0
        %1899 = vmatmul.mubr.bf16.gmra.mxu0 %v1681
        %v1900 = vpop.f32.mrf.mxu0
        %v1901 = vadd.f32 0.0, %v1900
        %v1902 = vpop.f32.mrf.mxu0
        %v1903 = vpop.f32.mrf.mxu0
        %v1904 = vadd.f32 0.0, %v1903
        %v1905 = vpop.f32.mrf.mxu0
        %1906 = vdwg.mxu0
        %v1939 = vunpack.c.l.b16 %v1166
        %v1940 = vunpack.c.l.b16 %v1167
        %v1941 = vunpack.c.l.b16 %v1168
        %v1942 = vunpack.c.l.b16 %v1169
        %v1943 = vunpack.c.l.b16 %v1170
        %v1944 = vunpack.c.l.b16 %v1171
        %v1945 = vunpack.c.l.b16 %v1172
        %v1946 = vunpack.c.l.b16 %v1173
        %v1947 = vunpack.c.l.b16 %v1174
        %v1948 = vunpack.c.l.b16 %v1175
        %v1949 = vunpack.c.l.b16 %v1176
        %v1950 = vunpack.c.l.b16 %v1177
        %v1951 = vunpack.c.l.b16 %v1178
        %v1952 = vunpack.c.l.b16 %v1179
        %v1953 = vunpack.c.l.b16 %v1180
        %v1954 = vunpack.c.l.b16 %v1181
        %v1955 = vunpack.c.l.b16 %v1182
        %v1956 = vunpack.c.l.b16 %v1183
        %v1957 = vunpack.c.l.b16 %v1184
        %v1958 = vunpack.c.l.b16 %v1185
        %v1959 = vunpack.c.l.b16 %v1186
        %v1960 = vunpack.c.l.b16 %v1187
        %v1961 = vunpack.c.l.b16 %v1188
        %v1962 = vunpack.c.l.b16 %v1189
        %v1963 = vunpack.c.l.b16 %v1190
        %v1964 = vunpack.c.l.b16 %v1191
        %v1965 = vunpack.c.l.b16 %v1192
        %v1966 = vunpack.c.l.b16 %v1193
        %v1967 = vunpack.c.l.b16 %v1194
        %v1968 = vunpack.c.l.b16 %v1195
        %v1969 = vunpack.c.l.b16 %v1196
        %v1970 = vunpack.c.l.b16 %v1197
        %v1971 = vpack.c.b16 %v1940, %v1939
        %v1972 = vpack.c.b16 %v1942, %v1941
        %v1973 = vpack.c.b16 %v1944, %v1943
        %v1974 = vpack.c.b16 %v1946, %v1945
        %v1975 = vpack.c.b16 %v1948, %v1947
        %v1976 = vpack.c.b16 %v1950, %v1949
        %v1977 = vpack.c.b16 %v1952, %v1951
        %v1978 = vpack.c.b16 %v1954, %v1953
        %v1979 = vpack.c.b16 %v1956, %v1955
        %v1980 = vpack.c.b16 %v1958, %v1957
        %v1981 = vpack.c.b16 %v1960, %v1959
        %v1982 = vpack.c.b16 %v1962, %v1961
        %v1983 = vpack.c.b16 %v1964, %v1963
        %v1984 = vpack.c.b16 %v1966, %v1965
        %v1985 = vpack.c.b16 %v1968, %v1967
        %v1986 = vpack.c.b16 %v1970, %v1969
        %v2019 = vunpack.c.l.b16 %v1198
        %v2020 = vunpack.c.l.b16 %v1199
        %v2021 = vunpack.c.l.b16 %v1200
        %v2022 = vunpack.c.l.b16 %v1201
        %v2023 = vunpack.c.l.b16 %v1202
        %v2024 = vunpack.c.l.b16 %v1203
        %v2025 = vunpack.c.l.b16 %v1204
        %v2026 = vunpack.c.l.b16 %v1205
        %v2027 = vunpack.c.l.b16 %v1206
        %v2028 = vunpack.c.l.b16 %v1207
        %v2029 = vunpack.c.l.b16 %v1208
        %v2030 = vunpack.c.l.b16 %v1209
        %v2031 = vunpack.c.l.b16 %v1210
        %v2032 = vunpack.c.l.b16 %v1211
        %v2033 = vunpack.c.l.b16 %v1212
        %v2034 = vunpack.c.l.b16 %v1213
        %v2035 = vpack.c.b16 %v2020, %v2019
        %v2036 = vpack.c.b16 %v2022, %v2021
        %v2037 = vpack.c.b16 %v2024, %v2023
        %v2038 = vpack.c.b16 %v2026, %v2025
        %v2039 = vpack.c.b16 %v2028, %v2027
        %v2040 = vpack.c.b16 %v2030, %v2029
        %v2041 = vpack.c.b16 %v2032, %v2031
        %v2042 = vpack.c.b16 %v2034, %v2033
        %2051 = vmatprep.subr.bf16.mxu0 0
        %2052 = vmatpush1.bf16.msra.mxu0 %v2042
        %2053 = vmatprep.subr.bf16.mxu0 0
        %2054 = vmatpush1.bf16.msra.mxu0 %v2041
        %2055 = vmatprep.subr.bf16.mxu0 0
        %2056 = vmatpush1.bf16.msra.mxu0 %v2040
        %2057 = vmatprep.subr.bf16.mxu0 0
        %2058 = vmatpush1.bf16.msra.mxu0 %v2039
        %2059 = vmatprep.subr.bf16.mxu0 0
        %2060 = vmatpush1.bf16.msra.mxu0 %v2038
        %2061 = vmatprep.subr.bf16.mxu0 0
        %2062 = vmatpush1.bf16.msra.mxu0 %v2037
        %2063 = vmatprep.subr.bf16.mxu0 0
        %2064 = vmatpush1.bf16.msra.mxu0 %v2036
        %2065 = vmatprep.subr.bf16.mxu0 0
        %2066 = vmatpush1.bf16.msra.mxu0 %v2035
        %2067 = vmatprep.subr.bf16.mxu0 0
        %2068 = vmatpush2.bf16.msra.mxu0 0
        %2069 = vmatprep.subr.bf16.mxu0 0
        %2070 = vmatpush2.bf16.msra.mxu0 0
        %2071 = vmatprep.subr.bf16.mxu0 0
        %2072 = vmatpush2.bf16.msra.mxu0 0
        %2073 = vmatprep.subr.bf16.mxu0 0
        %2074 = vmatpush2.bf16.msra.mxu0 0
        %2075 = vmatprep.subr.bf16.mxu0 0
        %2076 = vmatpush2.bf16.msra.mxu0 0
        %2077 = vmatprep.subr.bf16.mxu0 0
        %2078 = vmatpush2.bf16.msra.mxu0 0
        %2079 = vmatprep.subr.bf16.mxu0 0
        %2080 = vmatpush2.bf16.msra.mxu0 0
        %2081 = vmatprep.subr.bf16.mxu0 0
        %2082 = vmatpush2.bf16.msra.mxu0 0
        %2083 = vmatprep.mubr.bf16.mxu0 0
        %2084 = vmatmul.mubr.bf16.gmra.mxu0 %v1971
        %v2085 = vpop.f32.mrf.mxu0
        %v2086 = vadd.f32 %v1781, %v2085
        %v2087 = vpop.f32.mrf.mxu0
        %v2088 = vpop.f32.mrf.mxu0
        %v2089 = vadd.f32 %v1784, %v2088
        %v2090 = vpop.f32.mrf.mxu0
        %2091 = vmatprep.mubr.bf16.mxu0 0
        %2092 = vmatmul.mubr.bf16.gmra.mxu0 %v1972
        %v2093 = vpop.f32.mrf.mxu0
        %v2094 = vadd.f32 %v1789, %v2093
        %v2095 = vpop.f32.mrf.mxu0
        %v2096 = vpop.f32.mrf.mxu0
        %v2097 = vadd.f32 %v1792, %v2096
        %v2098 = vpop.f32.mrf.mxu0
        %2099 = vmatprep.mubr.bf16.mxu0 0
        %2100 = vmatmul.mubr.bf16.gmra.mxu0 %v1973
        %v2101 = vpop.f32.mrf.mxu0
        %v2102 = vadd.f32 %v1797, %v2101
        %v2103 = vpop.f32.mrf.mxu0
        %v2104 = vpop.f32.mrf.mxu0
        %v2105 = vadd.f32 %v1800, %v2104
        %v2106 = vpop.f32.mrf.mxu0
        %2107 = vmatprep.mubr.bf16.mxu0 0
        %2108 = vmatmul.mubr.bf16.gmra.mxu0 %v1974
        %v2109 = vpop.f32.mrf.mxu0
        %v2110 = vadd.f32 %v1805, %v2109
        %v2111 = vpop.f32.mrf.mxu0
        %v2112 = vpop.f32.mrf.mxu0
        %v2113 = vadd.f32 %v1808, %v2112
        %v2114 = vpop.f32.mrf.mxu0
        %2115 = vmatprep.mubr.bf16.mxu0 0
        %2116 = vmatmul.mubr.bf16.gmra.mxu0 %v1975
        %v2117 = vpop.f32.mrf.mxu0
        %v2118 = vadd.f32 %v1813, %v2117
        %v2119 = vpop.f32.mrf.mxu0
        %v2120 = vpop.f32.mrf.mxu0
        %v2121 = vadd.f32 %v1816, %v2120
        %v2122 = vpop.f32.mrf.mxu0
        %2123 = vmatprep.mubr.bf16.mxu0 0
        %2124 = vmatmul.mubr.bf16.gmra.mxu0 %v1976
        %v2125 = vpop.f32.mrf.mxu0
        %v2126 = vadd.f32 %v1821, %v2125
        %v2127 = vpop.f32.mrf.mxu0
        %v2128 = vpop.f32.mrf.mxu0
        %v2129 = vadd.f32 %v1824, %v2128
        %v2130 = vpop.f32.mrf.mxu0
        %2131 = vmatprep.mubr.bf16.mxu0 0
        %2132 = vmatmul.mubr.bf16.gmra.mxu0 %v1977
        %v2133 = vpop.f32.mrf.mxu0
        %v2134 = vadd.f32 %v1829, %v2133
        %v2135 = vpop.f32.mrf.mxu0
        %v2136 = vpop.f32.mrf.mxu0
        %v2137 = vadd.f32 %v1832, %v2136
        %v2138 = vpop.f32.mrf.mxu0
        %2139 = vmatprep.mubr.bf16.mxu0 0
        %2140 = vmatmul.mubr.bf16.gmra.mxu0 %v1978
        %v2141 = vpop.f32.mrf.mxu0
        %v2142 = vadd.f32 %v1837, %v2141
        %v2143 = vpop.f32.mrf.mxu0
        %v2144 = vpop.f32.mrf.mxu0
        %v2145 = vadd.f32 %v1840, %v2144
        %v2146 = vpop.f32.mrf.mxu0
        %2147 = vmatprep.mubr.bf16.mxu0 0
        %2148 = vmatmul.mubr.bf16.gmra.mxu0 %v1979
        %v2149 = vpop.f32.mrf.mxu0
        %v2150 = vadd.f32 %v1845, %v2149
        %v2151 = vpop.f32.mrf.mxu0
        %v2152 = vpop.f32.mrf.mxu0
        %v2153 = vadd.f32 %v1848, %v2152
        %v2154 = vpop.f32.mrf.mxu0
        %2155 = vmatprep.mubr.bf16.mxu0 0
        %2156 = vmatmul.mubr.bf16.gmra.mxu0 %v1980
        %v2157 = vpop.f32.mrf.mxu0
        %v2158 = vadd.f32 %v1853, %v2157
        %v2159 = vpop.f32.mrf.mxu0
        %v2160 = vpop.f32.mrf.mxu0
        %v2161 = vadd.f32 %v1856, %v2160
        %v2162 = vpop.f32.mrf.mxu0
        %2163 = vmatprep.mubr.bf16.mxu0 0
        %2164 = vmatmul.mubr.bf16.gmra.mxu0 %v1981
        %v2165 = vpop.f32.mrf.mxu0
        %v2166 = vadd.f32 %v1861, %v2165
        %v2167 = vpop.f32.mrf.mxu0
        %v2168 = vpop.f32.mrf.mxu0
        %v2169 = vadd.f32 %v1864, %v2168
        %v2170 = vpop.f32.mrf.mxu0
        %2171 = vmatprep.mubr.bf16.mxu0 0
        %2172 = vmatmul.mubr.bf16.gmra.mxu0 %v1982
        %v2173 = vpop.f32.mrf.mxu0
        %v2174 = vadd.f32 %v1869, %v2173
        %v2175 = vpop.f32.mrf.mxu0
        %v2176 = vpop.f32.mrf.mxu0
        %v2177 = vadd.f32 %v1872, %v2176
        %v2178 = vpop.f32.mrf.mxu0
        %2179 = vmatprep.mubr.bf16.mxu0 0
        %2180 = vmatmul.mubr.bf16.gmra.mxu0 %v1983
        %v2181 = vpop.f32.mrf.mxu0
        %v2182 = vadd.f32 %v1877, %v2181
        %v2183 = vpop.f32.mrf.mxu0
        %v2184 = vpop.f32.mrf.mxu0
        %v2185 = vadd.f32 %v1880, %v2184
        %v2186 = vpop.f32.mrf.mxu0
        %2187 = vmatprep.mubr.bf16.mxu0 0
        %2188 = vmatmul.mubr.bf16.gmra.mxu0 %v1984
        %v2189 = vpop.f32.mrf.mxu0
        %v2190 = vadd.f32 %v1885, %v2189
        %v2191 = vpop.f32.mrf.mxu0
        %v2192 = vpop.f32.mrf.mxu0
        %v2193 = vadd.f32 %v1888, %v2192
        %v2194 = vpop.f32.mrf.mxu0
        %2195 = vmatprep.mubr.bf16.mxu0 0
        %2196 = vmatmul.mubr.bf16.gmra.mxu0 %v1985
        %v2197 = vpop.f32.mrf.mxu0
        %v2198 = vadd.f32 %v1893, %v2197
        %v2199 = vpop.f32.mrf.mxu0
        %v2200 = vpop.f32.mrf.mxu0
        %v2201 = vadd.f32 %v1896, %v2200
        %v2202 = vpop.f32.mrf.mxu0
        %2203 = vmatprep.mubr.bf16.mxu0 0
        %2204 = vmatmul.mubr.bf16.gmra.mxu0 %v1986
        %v2205 = vpop.f32.mrf.mxu0
        %v2206 = vadd.f32 %v1901, %v2205
        %v2207 = vpop.f32.mrf.mxu0
        %v2208 = vpop.f32.mrf.mxu0
        %v2209 = vadd.f32 %v1904, %v2208
        %v2210 = vpop.f32.mrf.mxu0
        %2211 = vdwg.mxu0
        %v2212 = vld [vmem:[#allocation2] sm:$0xe]
        %v2213 = vld [vmem:[#allocation2 + $0xc] sm:$0xe]
        %v2214 = vld [vmem:[#allocation2 + $0x18] sm:$0xe]
        %v2215 = vld [vmem:[#allocation2 + $0x24] sm:$0xe]
        %v2216 = vld [vmem:[#allocation2 + $0x30] sm:$0xe]
        %v2217 = vld [vmem:[#allocation2 + $0x3c] sm:$0xe]
        %v2218 = vld [vmem:[#allocation2 + $0x48] sm:$0xe]
        %v2219 = vld [vmem:[#allocation2 + $0x54] sm:$0xe]
        %v2220 = vld [vmem:[#allocation2 + $0x60] sm:$0xe]
        %v2221 = vld [vmem:[#allocation2 + $0x6c] sm:$0xe]
        %v2222 = vld [vmem:[#allocation2 + $0x78] sm:$0xe]
        %v2223 = vld [vmem:[#allocation2 + $0x84] sm:$0xe]
        %v2224 = vld [vmem:[#allocation2 + $0x90] sm:$0xe]
        %v2225 = vld [vmem:[#allocation2 + $0x9c] sm:$0xe]
        %v2226 = vld [vmem:[#allocation2 + $0xa8] sm:$0xe]
        %v2227 = vld [vmem:[#allocation2 + $0xb4] sm:$0xe]
        %vm2260 = vcmask 1042432
        %vm2261 = vcmask 1046532
        %vm2262 = vmor %vm2260, %vm2261
        %v2263 = vrot.slane %v2212, 5
        %v2264 = vrot.slane %v2263, 4
        %v2265 = vrot.slane %v1167, 5
        %v2266 = vsel %vm2262, %v2264, %v2265
        %v2267 = vrot.slane %v2265, 4
        %v2268 = vrot.slane %v1214, 5
        %v2269 = vsel %vm2262, %v2267, %v2268
        %v2270 = vrot.slane %v2213, 5
        %v2271 = vrot.slane %v2270, 4
        %v2272 = vrot.slane %v1169, 5
        %v2273 = vsel %vm2262, %v2271, %v2272
        %v2274 = vrot.slane %v2272, 4
        %v2275 = vrot.slane %v1215, 5
        %v2276 = vsel %vm2262, %v2274, %v2275
        %v2277 = vrot.slane %v2214, 5
        %v2278 = vrot.slane %v2277, 4
        %v2279 = vrot.slane %v1171, 5
        %v2280 = vsel %vm2262, %v2278, %v2279
        %v2281 = vrot.slane %v2279, 4
        %v2282 = vrot.slane %v1216, 5
        %v2283 = vsel %vm2262, %v2281, %v2282
        %v2284 = vrot.slane %v2215, 5
        %v2285 = vrot.slane %v2284, 4
        %v2286 = vrot.slane %v1173, 5
        %v2287 = vsel %vm2262, %v2285, %v2286
        %v2288 = vrot.slane %v2286, 4
        %v2289 = vrot.slane %v1217, 5
        %v2290 = vsel %vm2262, %v2288, %v2289
        %v2291 = vrot.slane %v2216, 5
        %v2292 = vrot.slane %v2291, 4
        %v2293 = vrot.slane %v1175, 5
        %v2294 = vsel %vm2262, %v2292, %v2293
        %v2295 = vrot.slane %v2293, 4
        %v2296 = vrot.slane %v1218, 5
        %v2297 = vsel %vm2262, %v2295, %v2296
        %v2298 = vrot.slane %v2217, 5
        %v2299 = vrot.slane %v2298, 4
        %v2300 = vrot.slane %v1177, 5
        %v2301 = vsel %vm2262, %v2299, %v2300
        %v2302 = vrot.slane %v2300, 4
        %v2303 = vrot.slane %v1219, 5
        %v2304 = vsel %vm2262, %v2302, %v2303
        %v2305 = vrot.slane %v2218, 5
        %v2306 = vrot.slane %v2305, 4
        %v2307 = vrot.slane %v1179, 5
        %v2308 = vsel %vm2262, %v2306, %v2307
        %v2309 = vrot.slane %v2307, 4
        %v2310 = vrot.slane %v1220, 5
        %v2311 = vsel %vm2262, %v2309, %v2310
        %v2312 = vrot.slane %v2219, 5
        %v2313 = vrot.slane %v2312, 4
        %v2314 = vrot.slane %v1181, 5
        %v2315 = vsel %vm2262, %v2313, %v2314
        %v2316 = vrot.slane %v2314, 4
        %v2317 = vrot.slane %v1221, 5
        %v2318 = vsel %vm2262, %v2316, %v2317
        %v2319 = vrot.slane %v2220, 5
        %v2320 = vrot.slane %v2319, 4
        %v2321 = vrot.slane %v1183, 5
        %v2322 = vsel %vm2262, %v2320, %v2321
        %v2323 = vrot.slane %v2321, 4
        %v2324 = vrot.slane %v1222, 5
        %v2325 = vsel %vm2262, %v2323, %v2324
        %v2326 = vrot.slane %v2221, 5
        %v2327 = vrot.slane %v2326, 4
        %v2328 = vrot.slane %v1185, 5
        %v2329 = vsel %vm2262, %v2327, %v2328
        %v2330 = vrot.slane %v2328, 4
        %v2331 = vrot.slane %v1223, 5
        %v2332 = vsel %vm2262, %v2330, %v2331
        %v2333 = vrot.slane %v2222, 5
        %v2334 = vrot.slane %v2333, 4
        %v2335 = vrot.slane %v1187, 5
        %v2336 = vsel %vm2262, %v2334, %v2335
        %v2337 = vrot.slane %v2335, 4
        %v2338 = vrot.slane %v1224, 5
        %v2339 = vsel %vm2262, %v2337, %v2338
        %v2340 = vrot.slane %v2223, 5
        %v2341 = vrot.slane %v2340, 4
        %v2342 = vrot.slane %v1189, 5
        %v2343 = vsel %vm2262, %v2341, %v2342
        %v2344 = vrot.slane %v2342, 4
        %v2345 = vrot.slane %v1225, 5
        %v2346 = vsel %vm2262, %v2344, %v2345
        %v2347 = vrot.slane %v2224, 5
        %v2348 = vrot.slane %v2347, 4
        %v2349 = vrot.slane %v1191, 5
        %v2350 = vsel %vm2262, %v2348, %v2349
        %v2351 = vrot.slane %v2349, 4
        %v2352 = vrot.slane %v1226, 5
        %v2353 = vsel %vm2262, %v2351, %v2352
        %v2354 = vrot.slane %v2225, 5
        %v2355 = vrot.slane %v2354, 4
        %v2356 = vrot.slane %v1193, 5
        %v2357 = vsel %vm2262, %v2355, %v2356
        %v2358 = vrot.slane %v2356, 4
        %v2359 = vrot.slane %v1227, 5
        %v2360 = vsel %vm2262, %v2358, %v2359
        %v2361 = vrot.slane %v2226, 5
        %v2362 = vrot.slane %v2361, 4
        %v2363 = vrot.slane %v1195, 5
        %v2364 = vsel %vm2262, %v2362, %v2363
        %v2365 = vrot.slane %v2363, 4
        %v2366 = vrot.slane %v1228, 5
        %v2367 = vsel %vm2262, %v2365, %v2366
        %v2368 = vrot.slane %v2227, 5
        %v2369 = vrot.slane %v2368, 4
        %v2370 = vrot.slane %v1197, 5
        %v2371 = vsel %vm2262, %v2369, %v2370
        %v2372 = vrot.slane %v2370, 4
        %v2373 = vrot.slane %v1229, 5
        %v2374 = vsel %vm2262, %v2372, %v2373
        %s2375 = scalar_lea.vmem [#allocation8], 128
        %v2376 = vld [vmem:[%s2375] sm:$0xf]
        %v2377 = vld [vmem:[%s2375 + $0x4] sm:$0xf]
        %v2378 = vld [vmem:[%s2375 + $0x8] sm:$0xf]
        %v2379 = vld [vmem:[%s2375 + $0xc] sm:$0xf]
        %v2380 = vld [vmem:[%s2375 + $0x10] sm:$0xf]
        %v2381 = vld [vmem:[%s2375 + $0x14] sm:$0xf]
        %v2382 = vld [vmem:[%s2375 + $0x18] sm:$0xf]
        %v2383 = vld [vmem:[%s2375 + $0x1c] sm:$0xf]
        %v2384 = vld [vmem:[%s2375 + $0x20] sm:$0xf]
        %v2385 = vld [vmem:[%s2375 + $0x24] sm:$0xf]
        %v2386 = vld [vmem:[%s2375 + $0x28] sm:$0xf]
        %v2387 = vld [vmem:[%s2375 + $0x2c] sm:$0xf]
        %v2388 = vld [vmem:[%s2375 + $0x30] sm:$0xf]
        %v2389 = vld [vmem:[%s2375 + $0x34] sm:$0xf]
        %v2390 = vld [vmem:[%s2375 + $0x38] sm:$0xf]
        %v2391 = vld [vmem:[%s2375 + $0x3c] sm:$0xf]
        %v2392 = vunpack.c.l.b16 %v2266
        %v2393 = vunpack.c.l.b16 %v2269
        %v2394 = vunpack.c.l.b16 %v2273
        %v2395 = vunpack.c.l.b16 %v2276
        %v2396 = vunpack.c.l.b16 %v2280
        %v2397 = vunpack.c.l.b16 %v2283
        %v2398 = vunpack.c.l.b16 %v2287
        %v2399 = vunpack.c.l.b16 %v2290
        %v2400 = vunpack.c.l.b16 %v2294
        %v2401 = vunpack.c.l.b16 %v2297
        %v2402 = vunpack.c.l.b16 %v2301
        %v2403 = vunpack.c.l.b16 %v2304
        %v2404 = vunpack.c.l.b16 %v2308
        %v2405 = vunpack.c.l.b16 %v2311
        %v2406 = vunpack.c.l.b16 %v2315
        %v2407 = vunpack.c.l.b16 %v2318
        %v2408 = vunpack.c.l.b16 %v2322
        %v2409 = vunpack.c.l.b16 %v2325
        %v2410 = vunpack.c.l.b16 %v2329
        %v2411 = vunpack.c.l.b16 %v2332
        %v2412 = vunpack.c.l.b16 %v2336
        %v2413 = vunpack.c.l.b16 %v2339
        %v2414 = vunpack.c.l.b16 %v2343
        %v2415 = vunpack.c.l.b16 %v2346
        %v2416 = vunpack.c.l.b16 %v2350
        %v2417 = vunpack.c.l.b16 %v2353
        %v2418 = vunpack.c.l.b16 %v2357
        %v2419 = vunpack.c.l.b16 %v2360
        %v2420 = vunpack.c.l.b16 %v2364
        %v2421 = vunpack.c.l.b16 %v2367
        %v2422 = vunpack.c.l.b16 %v2371
        %v2423 = vunpack.c.l.b16 %v2374
        %v2424 = vpack.c.b16 %v2393, %v2392
        %v2425 = vpack.c.b16 %v2395, %v2394
        %v2426 = vpack.c.b16 %v2397, %v2396
        %v2427 = vpack.c.b16 %v2399, %v2398
        %v2428 = vpack.c.b16 %v2401, %v2400
        %v2429 = vpack.c.b16 %v2403, %v2402
        %v2430 = vpack.c.b16 %v2405, %v2404
        %v2431 = vpack.c.b16 %v2407, %v2406
        %v2432 = vpack.c.b16 %v2409, %v2408
        %v2433 = vpack.c.b16 %v2411, %v2410
        %v2434 = vpack.c.b16 %v2413, %v2412
        %v2435 = vpack.c.b16 %v2415, %v2414
        %v2436 = vpack.c.b16 %v2417, %v2416
        %v2437 = vpack.c.b16 %v2419, %v2418
        %v2438 = vpack.c.b16 %v2421, %v2420
        %v2439 = vpack.c.b16 %v2423, %v2422
        %v2472 = vunpack.c.l.b16 %v2376
        %v2473 = vunpack.c.l.b16 %v2377
        %v2474 = vunpack.c.l.b16 %v2378
        %v2475 = vunpack.c.l.b16 %v2379
        %v2476 = vunpack.c.l.b16 %v2380
        %v2477 = vunpack.c.l.b16 %v2381
        %v2478 = vunpack.c.l.b16 %v2382
        %v2479 = vunpack.c.l.b16 %v2383
        %v2480 = vunpack.c.l.b16 %v2384
        %v2481 = vunpack.c.l.b16 %v2385
        %v2482 = vunpack.c.l.b16 %v2386
        %v2483 = vunpack.c.l.b16 %v2387
        %v2484 = vunpack.c.l.b16 %v2388
        %v2485 = vunpack.c.l.b16 %v2389
        %v2486 = vunpack.c.l.b16 %v2390
        %v2487 = vunpack.c.l.b16 %v2391
        %v2488 = vpack.c.b16 %v2473, %v2472
        %v2489 = vpack.c.b16 %v2475, %v2474
        %v2490 = vpack.c.b16 %v2477, %v2476
        %v2491 = vpack.c.b16 %v2479, %v2478
        %v2492 = vpack.c.b16 %v2481, %v2480
        %v2493 = vpack.c.b16 %v2483, %v2482
        %v2494 = vpack.c.b16 %v2485, %v2484
        %v2495 = vpack.c.b16 %v2487, %v2486
        %2504 = vmatprep.subr.bf16.mxu0 0
        %2505 = vmatpush1.bf16.msra.mxu0 %v2495
        %2506 = vmatprep.subr.bf16.mxu0 0
        %2507 = vmatpush1.bf16.msra.mxu0 %v2494
        %2508 = vmatprep.subr.bf16.mxu0 0
        %2509 = vmatpush1.bf16.msra.mxu0 %v2493
        %2510 = vmatprep.subr.bf16.mxu0 0
        %2511 = vmatpush1.bf16.msra.mxu0 %v2492
        %2512 = vmatprep.subr.bf16.mxu0 0
        %2513 = vmatpush1.bf16.msra.mxu0 %v2491
        %2514 = vmatprep.subr.bf16.mxu0 0
        %2515 = vmatpush1.bf16.msra.mxu0 %v2490
        %2516 = vmatprep.subr.bf16.mxu0 0
        %2517 = vmatpush1.bf16.msra.mxu0 %v2489
        %2518 = vmatprep.subr.bf16.mxu0 0
        %2519 = vmatpush1.bf16.msra.mxu0 %v2488
        %2520 = vmatprep.subr.bf16.mxu0 0
        %2521 = vmatpush2.bf16.msra.mxu0 0
        %2522 = vmatprep.subr.bf16.mxu0 0
        %2523 = vmatpush2.bf16.msra.mxu0 0
        %2524 = vmatprep.subr.bf16.mxu0 0
        %2525 = vmatpush2.bf16.msra.mxu0 0
        %2526 = vmatprep.subr.bf16.mxu0 0
        %2527 = vmatpush2.bf16.msra.mxu0 0
        %2528 = vmatprep.subr.bf16.mxu0 0
        %2529 = vmatpush2.bf16.msra.mxu0 0
        %2530 = vmatprep.subr.bf16.mxu0 0
        %2531 = vmatpush2.bf16.msra.mxu0 0
        %2532 = vmatprep.subr.bf16.mxu0 0
        %2533 = vmatpush2.bf16.msra.mxu0 0
        %2534 = vmatprep.subr.bf16.mxu0 0
        %2535 = vmatpush2.bf16.msra.mxu0 0
        %2536 = vmatprep.mubr.bf16.mxu0 0
        %2537 = vmatmul.mubr.bf16.gmra.mxu0 %v2424
        %v2538 = vpop.f32.mrf.mxu0
        %v2539 = vadd.f32 0.0, %v2538
        %v2540 = vpop.f32.mrf.mxu0
        %v2541 = vpop.f32.mrf.mxu0
        %v2542 = vadd.f32 0.0, %v2541
        %v2543 = vpop.f32.mrf.mxu0
        %2544 = vmatprep.mubr.bf16.mxu0 0
        %2545 = vmatmul.mubr.bf16.gmra.mxu0 %v2425
        %v2546 = vpop.f32.mrf.mxu0
        %v2547 = vadd.f32 0.0, %v2546
        %v2548 = vpop.f32.mrf.mxu0
        %v2549 = vpop.f32.mrf.mxu0
        %v2550 = vadd.f32 0.0, %v2549
        %v2551 = vpop.f32.mrf.mxu0
        %2552 = vmatprep.mubr.bf16.mxu0 0
        %2553 = vmatmul.mubr.bf16.gmra.mxu0 %v2426
        %v2554 = vpop.f32.mrf.mxu0
        %v2555 = vadd.f32 0.0, %v2554
        %v2556 = vpop.f32.mrf.mxu0
        %v2557 = vpop.f32.mrf.mxu0
        %v2558 = vadd.f32 0.0, %v2557
        %v2559 = vpop.f32.mrf.mxu0
        %2560 = vmatprep.mubr.bf16.mxu0 0
        %2561 = vmatmul.mubr.bf16.gmra.mxu0 %v2427
        %v2562 = vpop.f32.mrf.mxu0
        %v2563 = vadd.f32 0.0, %v2562
        %v2564 = vpop.f32.mrf.mxu0
        %v2565 = vpop.f32.mrf.mxu0
        %v2566 = vadd.f32 0.0, %v2565
        %v2567 = vpop.f32.mrf.mxu0
        %2568 = vmatprep.mubr.bf16.mxu0 0
        %2569 = vmatmul.mubr.bf16.gmra.mxu0 %v2428
        %v2570 = vpop.f32.mrf.mxu0
        %v2571 = vadd.f32 0.0, %v2570
        %v2572 = vpop.f32.mrf.mxu0
        %v2573 = vpop.f32.mrf.mxu0
        %v2574 = vadd.f32 0.0, %v2573
        %v2575 = vpop.f32.mrf.mxu0
        %2576 = vmatprep.mubr.bf16.mxu0 0
        %2577 = vmatmul.mubr.bf16.gmra.mxu0 %v2429
        %v2578 = vpop.f32.mrf.mxu0
        %v2579 = vadd.f32 0.0, %v2578
        %v2580 = vpop.f32.mrf.mxu0
        %v2581 = vpop.f32.mrf.mxu0
        %v2582 = vadd.f32 0.0, %v2581
        %v2583 = vpop.f32.mrf.mxu0
        %2584 = vmatprep.mubr.bf16.mxu0 0
        %2585 = vmatmul.mubr.bf16.gmra.mxu0 %v2430
        %v2586 = vpop.f32.mrf.mxu0
        %v2587 = vadd.f32 0.0, %v2586
        %v2588 = vpop.f32.mrf.mxu0
        %v2589 = vpop.f32.mrf.mxu0
        %v2590 = vadd.f32 0.0, %v2589
        %v2591 = vpop.f32.mrf.mxu0
        %2592 = vmatprep.mubr.bf16.mxu0 0
        %2593 = vmatmul.mubr.bf16.gmra.mxu0 %v2431
        %v2594 = vpop.f32.mrf.mxu0
        %v2595 = vadd.f32 0.0, %v2594
        %v2596 = vpop.f32.mrf.mxu0
        %v2597 = vpop.f32.mrf.mxu0
        %v2598 = vadd.f32 0.0, %v2597
        %v2599 = vpop.f32.mrf.mxu0
        %2600 = vmatprep.mubr.bf16.mxu0 0
        %2601 = vmatmul.mubr.bf16.gmra.mxu0 %v2432
        %v2602 = vpop.f32.mrf.mxu0
        %v2603 = vadd.f32 0.0, %v2602
        %v2604 = vpop.f32.mrf.mxu0
        %v2605 = vpop.f32.mrf.mxu0
        %v2606 = vadd.f32 0.0, %v2605
        %v2607 = vpop.f32.mrf.mxu0
        %2608 = vmatprep.mubr.bf16.mxu0 0
        %2609 = vmatmul.mubr.bf16.gmra.mxu0 %v2433
        %v2610 = vpop.f32.mrf.mxu0
        %v2611 = vadd.f32 0.0, %v2610
        %v2612 = vpop.f32.mrf.mxu0
        %v2613 = vpop.f32.mrf.mxu0
        %v2614 = vadd.f32 0.0, %v2613
        %v2615 = vpop.f32.mrf.mxu0
        %2616 = vmatprep.mubr.bf16.mxu0 0
        %2617 = vmatmul.mubr.bf16.gmra.mxu0 %v2434
        %v2618 = vpop.f32.mrf.mxu0
        %v2619 = vadd.f32 0.0, %v2618
        %v2620 = vpop.f32.mrf.mxu0
        %v2621 = vpop.f32.mrf.mxu0
        %v2622 = vadd.f32 0.0, %v2621
        %v2623 = vpop.f32.mrf.mxu0
        %2624 = vmatprep.mubr.bf16.mxu0 0
        %2625 = vmatmul.mubr.bf16.gmra.mxu0 %v2435
        %v2626 = vpop.f32.mrf.mxu0
        %v2627 = vadd.f32 0.0, %v2626
        %v2628 = vpop.f32.mrf.mxu0
        %v2629 = vpop.f32.mrf.mxu0
        %v2630 = vadd.f32 0.0, %v2629
        %v2631 = vpop.f32.mrf.mxu0
        %2632 = vmatprep.mubr.bf16.mxu0 0
        %2633 = vmatmul.mubr.bf16.gmra.mxu0 %v2436
        %v2634 = vpop.f32.mrf.mxu0
        %v2635 = vadd.f32 0.0, %v2634
        %v2636 = vpop.f32.mrf.mxu0
        %v2637 = vpop.f32.mrf.mxu0
        %v2638 = vadd.f32 0.0, %v2637
        %v2639 = vpop.f32.mrf.mxu0
        %2640 = vmatprep.mubr.bf16.mxu0 0
        %2641 = vmatmul.mubr.bf16.gmra.mxu0 %v2437
        %v2642 = vpop.f32.mrf.mxu0
        %v2643 = vadd.f32 0.0, %v2642
        %v2644 = vpop.f32.mrf.mxu0
        %v2645 = vpop.f32.mrf.mxu0
        %v2646 = vadd.f32 0.0, %v2645
        %v2647 = vpop.f32.mrf.mxu0
        %2648 = vmatprep.mubr.bf16.mxu0 0
        %2649 = vmatmul.mubr.bf16.gmra.mxu0 %v2438
        %v2650 = vpop.f32.mrf.mxu0
        %v2651 = vadd.f32 0.0, %v2650
        %v2652 = vpop.f32.mrf.mxu0
        %v2653 = vpop.f32.mrf.mxu0
        %v2654 = vadd.f32 0.0, %v2653
        %v2655 = vpop.f32.mrf.mxu0
        %2656 = vmatprep.mubr.bf16.mxu0 0
        %2657 = vmatmul.mubr.bf16.gmra.mxu0 %v2439
        %v2658 = vpop.f32.mrf.mxu0
        %v2659 = vadd.f32 0.0, %v2658
        %v2660 = vpop.f32.mrf.mxu0
        %v2661 = vpop.f32.mrf.mxu0
        %v2662 = vadd.f32 0.0, %v2661
        %v2663 = vpop.f32.mrf.mxu0
        %2664 = vdwg.mxu0
        %v2665 = vadd.f32 %v2086, %v2539
        %v2666 = vadd.f32 %v2089, %v2542
        %v2667 = vadd.f32 %v2094, %v2547
        %v2668 = vadd.f32 %v2097, %v2550
        %v2669 = vadd.f32 %v2102, %v2555
        %v2670 = vadd.f32 %v2105, %v2558
        %v2671 = vadd.f32 %v2110, %v2563
        %v2672 = vadd.f32 %v2113, %v2566
        %v2673 = vadd.f32 %v2118, %v2571
        %v2674 = vadd.f32 %v2121, %v2574
        %v2675 = vadd.f32 %v2126, %v2579
        %v2676 = vadd.f32 %v2129, %v2582
        %v2677 = vadd.f32 %v2134, %v2587
        %v2678 = vadd.f32 %v2137, %v2590
        %v2679 = vadd.f32 %v2142, %v2595
        %v2680 = vadd.f32 %v2145, %v2598
        %v2681 = vadd.f32 %v2150, %v2603
        %v2682 = vadd.f32 %v2153, %v2606
        %v2683 = vadd.f32 %v2158, %v2611
        %v2684 = vadd.f32 %v2161, %v2614
        %v2685 = vadd.f32 %v2166, %v2619
        %v2686 = vadd.f32 %v2169, %v2622
        %v2687 = vadd.f32 %v2174, %v2627
        %v2688 = vadd.f32 %v2177, %v2630
        %v2689 = vadd.f32 %v2182, %v2635
        %v2690 = vadd.f32 %v2185, %v2638
        %v2691 = vadd.f32 %v2190, %v2643
        %v2692 = vadd.f32 %v2193, %v2646
        %v2693 = vadd.f32 %v2198, %v2651
        %v2694 = vadd.f32 %v2201, %v2654
        %v2695 = vadd.f32 %v2206, %v2659
        %v2696 = vadd.f32 %v2209, %v2662
        %s2697 = scalar_lea.vmem [#allocation2], 12
        %v2698 = vld [vmem:[%s2697] sm:$0xf]
        %v2699 = vld [vmem:[%s2697 + $0x4] sm:$0xf]
        %v2700 = vld [vmem:[%s2697 + $0xc] sm:$0xf]
        %v2701 = vld [vmem:[%s2697 + $0x10] sm:$0xf]
        %v2702 = vld [vmem:[%s2697 + $0x18] sm:$0xf]
        %v2703 = vld [vmem:[%s2697 + $0x1c] sm:$0xf]
        %v2704 = vld [vmem:[%s2697 + $0x24] sm:$0xf]
        %v2705 = vld [vmem:[%s2697 + $0x28] sm:$0xf]
        %v2706 = vld [vmem:[%s2697 + $0x30] sm:$0xf]
        %v2707 = vld [vmem:[%s2697 + $0x34] sm:$0xf]
        %v2708 = vld [vmem:[%s2697 + $0x3c] sm:$0xf]
        %v2709 = vld [vmem:[%s2697 + $0x40] sm:$0xf]
        %v2710 = vld [vmem:[%s2697 + $0x48] sm:$0xf]
        %v2711 = vld [vmem:[%s2697 + $0x4c] sm:$0xf]
        %v2712 = vld [vmem:[%s2697 + $0x54] sm:$0xf]
        %v2713 = vld [vmem:[%s2697 + $0x58] sm:$0xf]
        %v2714 = vld [vmem:[%s2697 + $0x60] sm:$0xf]
        %v2715 = vld [vmem:[%s2697 + $0x64] sm:$0xf]
        %v2716 = vld [vmem:[%s2697 + $0x6c] sm:$0xf]
        %v2717 = vld [vmem:[%s2697 + $0x70] sm:$0xf]
        %v2718 = vld [vmem:[%s2697 + $0x78] sm:$0xf]
        %v2719 = vld [vmem:[%s2697 + $0x7c] sm:$0xf]
        %v2720 = vld [vmem:[%s2697 + $0x84] sm:$0xf]
        %v2721 = vld [vmem:[%s2697 + $0x88] sm:$0xf]
        %v2722 = vld [vmem:[%s2697 + $0x90] sm:$0xf]
        %v2723 = vld [vmem:[%s2697 + $0x94] sm:$0xf]
        %v2724 = vld [vmem:[%s2697 + $0x9c] sm:$0xf]
        %v2725 = vld [vmem:[%s2697 + $0xa0] sm:$0xf]
        %v2726 = vld [vmem:[%s2697 + $0xa8] sm:$0xf]
        %v2727 = vld [vmem:[%s2697 + $0xac] sm:$0xf]
        %v2728 = vld [vmem:[%s2697 + $0xb4] sm:$0xf]
        %v2729 = vld [vmem:[%s2697 + $0xb8] sm:$0xf]
        %s2730 = scalar_lea.vmem [#allocation8], 192
        %v2731 = vld [vmem:[%s2730] sm:$0xf]
        %v2732 = vld [vmem:[%s2730 + $0x4] sm:$0xf]
        %v2733 = vld [vmem:[%s2730 + $0x8] sm:$0xf]
        %v2734 = vld [vmem:[%s2730 + $0xc] sm:$0xf]
        %v2735 = vld [vmem:[%s2730 + $0x10] sm:$0xf]
        %v2736 = vld [vmem:[%s2730 + $0x14] sm:$0xf]
        %v2737 = vld [vmem:[%s2730 + $0x18] sm:$0xf]
        %v2738 = vld [vmem:[%s2730 + $0x1c] sm:$0xf]
        %v2739 = vld [vmem:[%s2730 + $0x20] sm:$0xf]
        %v2740 = vld [vmem:[%s2730 + $0x24] sm:$0xf]
        %v2741 = vld [vmem:[%s2730 + $0x28] sm:$0xf]
        %v2742 = vld [vmem:[%s2730 + $0x2c] sm:$0xf]
        %v2743 = vld [vmem:[%s2730 + $0x30] sm:$0xf]
        %v2744 = vld [vmem:[%s2730 + $0x34] sm:$0xf]
        %v2745 = vld [vmem:[%s2730 + $0x38] sm:$0xf]
        %v2746 = vld [vmem:[%s2730 + $0x3c] sm:$0xf]
        %v2779 = vunpack.c.l.b16 %v2698
        %v2780 = vunpack.c.l.b16 %v2699
        %v2781 = vunpack.c.l.b16 %v2700
        %v2782 = vunpack.c.l.b16 %v2701
        %v2783 = vunpack.c.l.b16 %v2702
        %v2784 = vunpack.c.l.b16 %v2703
        %v2785 = vunpack.c.l.b16 %v2704
        %v2786 = vunpack.c.l.b16 %v2705
        %v2787 = vunpack.c.l.b16 %v2706
        %v2788 = vunpack.c.l.b16 %v2707
        %v2789 = vunpack.c.l.b16 %v2708
        %v2790 = vunpack.c.l.b16 %v2709
        %v2791 = vunpack.c.l.b16 %v2710
        %v2792 = vunpack.c.l.b16 %v2711
        %v2793 = vunpack.c.l.b16 %v2712
        %v2794 = vunpack.c.l.b16 %v2713
        %v2795 = vunpack.c.l.b16 %v2714
        %v2796 = vunpack.c.l.b16 %v2715
        %v2797 = vunpack.c.l.b16 %v2716
        %v2798 = vunpack.c.l.b16 %v2717
        %v2799 = vunpack.c.l.b16 %v2718
        %v2800 = vunpack.c.l.b16 %v2719
        %v2801 = vunpack.c.l.b16 %v2720
        %v2802 = vunpack.c.l.b16 %v2721
        %v2803 = vunpack.c.l.b16 %v2722
        %v2804 = vunpack.c.l.b16 %v2723
        %v2805 = vunpack.c.l.b16 %v2724
        %v2806 = vunpack.c.l.b16 %v2725
        %v2807 = vunpack.c.l.b16 %v2726
        %v2808 = vunpack.c.l.b16 %v2727
        %v2809 = vunpack.c.l.b16 %v2728
        %v2810 = vunpack.c.l.b16 %v2729
        %v2811 = vpack.c.b16 %v2780, %v2779
        %v2812 = vpack.c.b16 %v2782, %v2781
        %v2813 = vpack.c.b16 %v2784, %v2783
        %v2814 = vpack.c.b16 %v2786, %v2785
        %v2815 = vpack.c.b16 %v2788, %v2787
        %v2816 = vpack.c.b16 %v2790, %v2789
        %v2817 = vpack.c.b16 %v2792, %v2791
        %v2818 = vpack.c.b16 %v2794, %v2793
        %v2819 = vpack.c.b16 %v2796, %v2795
        %v2820 = vpack.c.b16 %v2798, %v2797
        %v2821 = vpack.c.b16 %v2800, %v2799
        %v2822 = vpack.c.b16 %v2802, %v2801
        %v2823 = vpack.c.b16 %v2804, %v2803
        %v2824 = vpack.c.b16 %v2806, %v2805
        %v2825 = vpack.c.b16 %v2808, %v2807
        %v2826 = vpack.c.b16 %v2810, %v2809
        %v2859 = vunpack.c.l.b16 %v2731
        %v2860 = vunpack.c.l.b16 %v2732
        %v2861 = vunpack.c.l.b16 %v2733
        %v2862 = vunpack.c.l.b16 %v2734
        %v2863 = vunpack.c.l.b16 %v2735
        %v2864 = vunpack.c.l.b16 %v2736
        %v2865 = vunpack.c.l.b16 %v2737
        %v2866 = vunpack.c.l.b16 %v2738
        %v2867 = vunpack.c.l.b16 %v2739
        %v2868 = vunpack.c.l.b16 %v2740
        %v2869 = vunpack.c.l.b16 %v2741
        %v2870 = vunpack.c.l.b16 %v2742
        %v2871 = vunpack.c.l.b16 %v2743
        %v2872 = vunpack.c.l.b16 %v2744
        %v2873 = vunpack.c.l.b16 %v2745
        %v2874 = vunpack.c.l.b16 %v2746
        %v2875 = vpack.c.b16 %v2860, %v2859
        %v2876 = vpack.c.b16 %v2862, %v2861
        %v2877 = vpack.c.b16 %v2864, %v2863
        %v2878 = vpack.c.b16 %v2866, %v2865
        %v2879 = vpack.c.b16 %v2868, %v2867
        %v2880 = vpack.c.b16 %v2870, %v2869
        %v2881 = vpack.c.b16 %v2872, %v2871
        %v2882 = vpack.c.b16 %v2874, %v2873
        %2891 = vmatprep.subr.bf16.mxu0 0
        %2892 = vmatpush1.bf16.msra.mxu0 %v2882
        %2893 = vmatprep.subr.bf16.mxu0 0
        %2894 = vmatpush1.bf16.msra.mxu0 %v2881
        %2895 = vmatprep.subr.bf16.mxu0 0
        %2896 = vmatpush1.bf16.msra.mxu0 %v2880
        %2897 = vmatprep.subr.bf16.mxu0 0
        %2898 = vmatpush1.bf16.msra.mxu0 %v2879
        %2899 = vmatprep.subr.bf16.mxu0 0
        %2900 = vmatpush1.bf16.msra.mxu0 %v2878
        %2901 = vmatprep.subr.bf16.mxu0 0
        %2902 = vmatpush1.bf16.msra.mxu0 %v2877
        %2903 = vmatprep.subr.bf16.mxu0 0
        %2904 = vmatpush1.bf16.msra.mxu0 %v2876
        %2905 = vmatprep.subr.bf16.mxu0 0
        %2906 = vmatpush1.bf16.msra.mxu0 %v2875
        %2907 = vmatprep.subr.bf16.mxu0 0
        %2908 = vmatpush2.bf16.msra.mxu0 0
        %2909 = vmatprep.subr.bf16.mxu0 0
        %2910 = vmatpush2.bf16.msra.mxu0 0
        %2911 = vmatprep.subr.bf16.mxu0 0
        %2912 = vmatpush2.bf16.msra.mxu0 0
        %2913 = vmatprep.subr.bf16.mxu0 0
        %2914 = vmatpush2.bf16.msra.mxu0 0
        %2915 = vmatprep.subr.bf16.mxu0 0
        %2916 = vmatpush2.bf16.msra.mxu0 0
        %2917 = vmatprep.subr.bf16.mxu0 0
        %2918 = vmatpush2.bf16.msra.mxu0 0
        %2919 = vmatprep.subr.bf16.mxu0 0
        %2920 = vmatpush2.bf16.msra.mxu0 0
        %2921 = vmatprep.subr.bf16.mxu0 0
        %2922 = vmatpush2.bf16.msra.mxu0 0
        %2923 = vmatprep.mubr.bf16.mxu0 0
        %2924 = vmatmul.mubr.bf16.gmra.mxu0 %v2811
        %v2925 = vpop.f32.mrf.mxu0
        %v2926 = vadd.f32 0.0, %v2925
        %v2927 = vpop.f32.mrf.mxu0
        %v2928 = vpop.f32.mrf.mxu0
        %v2929 = vadd.f32 0.0, %v2928
        %v2930 = vpop.f32.mrf.mxu0
        %2931 = vmatprep.mubr.bf16.mxu0 0
        %2932 = vmatmul.mubr.bf16.gmra.mxu0 %v2812
        %v2933 = vpop.f32.mrf.mxu0
        %v2934 = vadd.f32 0.0, %v2933
        %v2935 = vpop.f32.mrf.mxu0
        %v2936 = vpop.f32.mrf.mxu0
        %v2937 = vadd.f32 0.0, %v2936
        %v2938 = vpop.f32.mrf.mxu0
        %2939 = vmatprep.mubr.bf16.mxu0 0
        %2940 = vmatmul.mubr.bf16.gmra.mxu0 %v2813
        %v2941 = vpop.f32.mrf.mxu0
        %v2942 = vadd.f32 0.0, %v2941
        %v2943 = vpop.f32.mrf.mxu0
        %v2944 = vpop.f32.mrf.mxu0
        %v2945 = vadd.f32 0.0, %v2944
        %v2946 = vpop.f32.mrf.mxu0
        %2947 = vmatprep.mubr.bf16.mxu0 0
        %2948 = vmatmul.mubr.bf16.gmra.mxu0 %v2814
        %v2949 = vpop.f32.mrf.mxu0
        %v2950 = vadd.f32 0.0, %v2949
        %v2951 = vpop.f32.mrf.mxu0
        %v2952 = vpop.f32.mrf.mxu0
        %v2953 = vadd.f32 0.0, %v2952
        %v2954 = vpop.f32.mrf.mxu0
        %2955 = vmatprep.mubr.bf16.mxu0 0
        %2956 = vmatmul.mubr.bf16.gmra.mxu0 %v2815
        %v2957 = vpop.f32.mrf.mxu0
        %v2958 = vadd.f32 0.0, %v2957
        %v2959 = vpop.f32.mrf.mxu0
        %v2960 = vpop.f32.mrf.mxu0
        %v2961 = vadd.f32 0.0, %v2960
        %v2962 = vpop.f32.mrf.mxu0
        %2963 = vmatprep.mubr.bf16.mxu0 0
        %2964 = vmatmul.mubr.bf16.gmra.mxu0 %v2816
        %v2965 = vpop.f32.mrf.mxu0
        %v2966 = vadd.f32 0.0, %v2965
        %v2967 = vpop.f32.mrf.mxu0
        %v2968 = vpop.f32.mrf.mxu0
        %v2969 = vadd.f32 0.0, %v2968
        %v2970 = vpop.f32.mrf.mxu0
        %2971 = vmatprep.mubr.bf16.mxu0 0
        %2972 = vmatmul.mubr.bf16.gmra.mxu0 %v2817
        %v2973 = vpop.f32.mrf.mxu0
        %v2974 = vadd.f32 0.0, %v2973
        %v2975 = vpop.f32.mrf.mxu0
        %v2976 = vpop.f32.mrf.mxu0
        %v2977 = vadd.f32 0.0, %v2976
        %v2978 = vpop.f32.mrf.mxu0
        %2979 = vmatprep.mubr.bf16.mxu0 0
        %2980 = vmatmul.mubr.bf16.gmra.mxu0 %v2818
        %v2981 = vpop.f32.mrf.mxu0
        %v2982 = vadd.f32 0.0, %v2981
        %v2983 = vpop.f32.mrf.mxu0
        %v2984 = vpop.f32.mrf.mxu0
        %v2985 = vadd.f32 0.0, %v2984
        %v2986 = vpop.f32.mrf.mxu0
        %2987 = vmatprep.mubr.bf16.mxu0 0
        %2988 = vmatmul.mubr.bf16.gmra.mxu0 %v2819
        %v2989 = vpop.f32.mrf.mxu0
        %v2990 = vadd.f32 0.0, %v2989
        %v2991 = vpop.f32.mrf.mxu0
        %v2992 = vpop.f32.mrf.mxu0
        %v2993 = vadd.f32 0.0, %v2992
        %v2994 = vpop.f32.mrf.mxu0
        %2995 = vmatprep.mubr.bf16.mxu0 0
        %2996 = vmatmul.mubr.bf16.gmra.mxu0 %v2820
        %v2997 = vpop.f32.mrf.mxu0
        %v2998 = vadd.f32 0.0, %v2997
        %v2999 = vpop.f32.mrf.mxu0
        %v3000 = vpop.f32.mrf.mxu0
        %v3001 = vadd.f32 0.0, %v3000
        %v3002 = vpop.f32.mrf.mxu0
        %3003 = vmatprep.mubr.bf16.mxu0 0
        %3004 = vmatmul.mubr.bf16.gmra.mxu0 %v2821
        %v3005 = vpop.f32.mrf.mxu0
        %v3006 = vadd.f32 0.0, %v3005
        %v3007 = vpop.f32.mrf.mxu0
        %v3008 = vpop.f32.mrf.mxu0
        %v3009 = vadd.f32 0.0, %v3008
        %v3010 = vpop.f32.mrf.mxu0
        %3011 = vmatprep.mubr.bf16.mxu0 0
        %3012 = vmatmul.mubr.bf16.gmra.mxu0 %v2822
        %v3013 = vpop.f32.mrf.mxu0
        %v3014 = vadd.f32 0.0, %v3013
        %v3015 = vpop.f32.mrf.mxu0
        %v3016 = vpop.f32.mrf.mxu0
        %v3017 = vadd.f32 0.0, %v3016
        %v3018 = vpop.f32.mrf.mxu0
        %3019 = vmatprep.mubr.bf16.mxu0 0
        %3020 = vmatmul.mubr.bf16.gmra.mxu0 %v2823
        %v3021 = vpop.f32.mrf.mxu0
        %v3022 = vadd.f32 0.0, %v3021
        %v3023 = vpop.f32.mrf.mxu0
        %v3024 = vpop.f32.mrf.mxu0
        %v3025 = vadd.f32 0.0, %v3024
        %v3026 = vpop.f32.mrf.mxu0
        %3027 = vmatprep.mubr.bf16.mxu0 0
        %3028 = vmatmul.mubr.bf16.gmra.mxu0 %v2824
        %v3029 = vpop.f32.mrf.mxu0
        %v3030 = vadd.f32 0.0, %v3029
        %v3031 = vpop.f32.mrf.mxu0
        %v3032 = vpop.f32.mrf.mxu0
        %v3033 = vadd.f32 0.0, %v3032
        %v3034 = vpop.f32.mrf.mxu0
        %3035 = vmatprep.mubr.bf16.mxu0 0
        %3036 = vmatmul.mubr.bf16.gmra.mxu0 %v2825
        %v3037 = vpop.f32.mrf.mxu0
        %v3038 = vadd.f32 0.0, %v3037
        %v3039 = vpop.f32.mrf.mxu0
        %v3040 = vpop.f32.mrf.mxu0
        %v3041 = vadd.f32 0.0, %v3040
        %v3042 = vpop.f32.mrf.mxu0
        %3043 = vmatprep.mubr.bf16.mxu0 0
        %3044 = vmatmul.mubr.bf16.gmra.mxu0 %v2826
        %v3045 = vpop.f32.mrf.mxu0
        %v3046 = vadd.f32 0.0, %v3045
        %v3047 = vpop.f32.mrf.mxu0
        %v3048 = vpop.f32.mrf.mxu0
        %v3049 = vadd.f32 0.0, %v3048
        %v3050 = vpop.f32.mrf.mxu0
        %3051 = vdwg.mxu0
        %v3052 = vadd.f32 %v2665, %v2926
        %v3053 = vadd.f32 %v2666, %v2929
        %v3054 = vadd.f32 %v2667, %v2934
        %v3055 = vadd.f32 %v2668, %v2937
        %v3056 = vadd.f32 %v2669, %v2942
        %v3057 = vadd.f32 %v2670, %v2945
        %v3058 = vadd.f32 %v2671, %v2950
        %v3059 = vadd.f32 %v2672, %v2953
        %v3060 = vadd.f32 %v2673, %v2958
        %v3061 = vadd.f32 %v2674, %v2961
        %v3062 = vadd.f32 %v2675, %v2966
        %v3063 = vadd.f32 %v2676, %v2969
        %v3064 = vadd.f32 %v2677, %v2974
        %v3065 = vadd.f32 %v2678, %v2977
        %v3066 = vadd.f32 %v2679, %v2982
        %v3067 = vadd.f32 %v2680, %v2985
        %v3068 = vadd.f32 %v2681, %v2990
        %v3069 = vadd.f32 %v2682, %v2993
        %v3070 = vadd.f32 %v2683, %v2998
        %v3071 = vadd.f32 %v2684, %v3001
        %v3072 = vadd.f32 %v2685, %v3006
        %v3073 = vadd.f32 %v2686, %v3009
        %v3074 = vadd.f32 %v2687, %v3014
        %v3075 = vadd.f32 %v2688, %v3017
        %v3076 = vadd.f32 %v2689, %v3022
        %v3077 = vadd.f32 %v2690, %v3025
        %v3078 = vadd.f32 %v2691, %v3030
        %v3079 = vadd.f32 %v2692, %v3033
        %v3080 = vadd.f32 %v2693, %v3038
        %v3081 = vadd.f32 %v2694, %v3041
        %v3082 = vadd.f32 %v2695, %v3046
        %v3083 = vadd.f32 %v2696, %v3049
        %v3084 = vld [vmem:[%s2697] sm:$0xf]
        %v3085 = vld [vmem:[%s2697 + $0x4] sm:$0xf]
        %v3086 = vld [vmem:[%s2697 + $0x8] sm:$0x1]
        %v3087 = vld [vmem:[%s2697 + $0xc] sm:$0xf]
        %v3088 = vld [vmem:[%s2697 + $0x10] sm:$0xf]
        %v3089 = vld [vmem:[%s2697 + $0x14] sm:$0x1]
        %v3090 = vld [vmem:[%s2697 + $0x18] sm:$0xf]
        %v3091 = vld [vmem:[%s2697 + $0x1c] sm:$0xf]
        %v3092 = vld [vmem:[%s2697 + $0x20] sm:$0x1]
        %v3093 = vld [vmem:[%s2697 + $0x24] sm:$0xf]
        %v3094 = vld [vmem:[%s2697 + $0x28] sm:$0xf]
        %v3095 = vld [vmem:[%s2697 + $0x2c] sm:$0x1]
        %v3096 = vld [vmem:[%s2697 + $0x30] sm:$0xf]
        %v3097 = vld [vmem:[%s2697 + $0x34] sm:$0xf]
        %v3098 = vld [vmem:[%s2697 + $0x38] sm:$0x1]
        %v3099 = vld [vmem:[%s2697 + $0x3c] sm:$0xf]
        %v3100 = vld [vmem:[%s2697 + $0x40] sm:$0xf]
        %v3101 = vld [vmem:[%s2697 + $0x44] sm:$0x1]
        %v3102 = vld [vmem:[%s2697 + $0x48] sm:$0xf]
        %v3103 = vld [vmem:[%s2697 + $0x4c] sm:$0xf]
        %v3104 = vld [vmem:[%s2697 + $0x50] sm:$0x1]
        %v3105 = vld [vmem:[%s2697 + $0x54] sm:$0xf]
        %v3106 = vld [vmem:[%s2697 + $0x58] sm:$0xf]
        %v3107 = vld [vmem:[%s2697 + $0x5c] sm:$0x1]
        %v3108 = vld [vmem:[%s2697 + $0x60] sm:$0xf]
        %v3109 = vld [vmem:[%s2697 + $0x64] sm:$0xf]
        %v3110 = vld [vmem:[%s2697 + $0x68] sm:$0x1]
        %v3111 = vld [vmem:[%s2697 + $0x6c] sm:$0xf]
        %v3112 = vld [vmem:[%s2697 + $0x70] sm:$0xf]
        %v3113 = vld [vmem:[%s2697 + $0x74] sm:$0x1]
        %v3114 = vld [vmem:[%s2697 + $0x78] sm:$0xf]
        %v3115 = vld [vmem:[%s2697 + $0x7c] sm:$0xf]
        %v3116 = vld [vmem:[%s2697 + $0x80] sm:$0x1]
        %v3117 = vld [vmem:[%s2697 + $0x84] sm:$0xf]
        %v3118 = vld [vmem:[%s2697 + $0x88] sm:$0xf]
        %v3119 = vld [vmem:[%s2697 + $0x8c] sm:$0x1]
        %v3120 = vld [vmem:[%s2697 + $0x90] sm:$0xf]
        %v3121 = vld [vmem:[%s2697 + $0x94] sm:$0xf]
        %v3122 = vld [vmem:[%s2697 + $0x98] sm:$0x1]
        %v3123 = vld [vmem:[%s2697 + $0x9c] sm:$0xf]
        %v3124 = vld [vmem:[%s2697 + $0xa0] sm:$0xf]
        %v3125 = vld [vmem:[%s2697 + $0xa4] sm:$0x1]
        %v3126 = vld [vmem:[%s2697 + $0xa8] sm:$0xf]
        %v3127 = vld [vmem:[%s2697 + $0xac] sm:$0xf]
        %v3128 = vld [vmem:[%s2697 + $0xb0] sm:$0x1]
        %v3129 = vld [vmem:[%s2697 + $0xb4] sm:$0xf]
        %v3130 = vld [vmem:[%s2697 + $0xb8] sm:$0xf]
        %v3131 = vld [vmem:[%s2697 + $0xbc] sm:$0x1]
        %v3133 = vshrl.u32 %v3084, 16
        %v3135 = vrot.slane %v3133, 4
        %v3136 = vshll.u32 %v3084, 16
        %v3138 = vrot.slane %v3136, 5
        %v3139 = vor.u32 %v3135, %v3138
        %v3140 = vrot.slane %v3139, 4
        %v3142 = vshll.u32 %v3085, 16
        %v3144 = vrot.slane %v3142, 5
        %v3145 = vsel %vm1232, %v3140, %v3144
        %v3146 = vshrl.u32 %v3085, 16
        %v3148 = vrot.slane %v3146, 4
        %v3149 = vor.u32 %v3148, %v3144
        %v3150 = vrot.slane %v3149, 4
        %v3152 = vshll.u32 %v3086, 16
        %v3154 = vrot.slane %v3152, 5
        %v3155 = vsel %vm1232, %v3150, %v3154
        %v3157 = vshrl.u32 %v3087, 16
        %v3159 = vrot.slane %v3157, 4
        %v3160 = vshll.u32 %v3087, 16
        %v3162 = vrot.slane %v3160, 5
        %v3163 = vor.u32 %v3159, %v3162
        %v3164 = vrot.slane %v3163, 4
        %v3166 = vshll.u32 %v3088, 16
        %v3168 = vrot.slane %v3166, 5
        %v3169 = vsel %vm1232, %v3164, %v3168
        %v3170 = vshrl.u32 %v3088, 16
        %v3172 = vrot.slane %v3170, 4
        %v3173 = vor.u32 %v3172, %v3168
        %v3174 = vrot.slane %v3173, 4
        %v3176 = vshll.u32 %v3089, 16
        %v3178 = vrot.slane %v3176, 5
        %v3179 = vsel %vm1232, %v3174, %v3178
        %v3181 = vshrl.u32 %v3090, 16
        %v3183 = vrot.slane %v3181, 4
        %v3184 = vshll.u32 %v3090, 16
        %v3186 = vrot.slane %v3184, 5
        %v3187 = vor.u32 %v3183, %v3186
        %v3188 = vrot.slane %v3187, 4
        %v3190 = vshll.u32 %v3091, 16
        %v3192 = vrot.slane %v3190, 5
        %v3193 = vsel %vm1232, %v3188, %v3192
        %v3194 = vshrl.u32 %v3091, 16
        %v3196 = vrot.slane %v3194, 4
        %v3197 = vor.u32 %v3196, %v3192
        %v3198 = vrot.slane %v3197, 4
        %v3200 = vshll.u32 %v3092, 16
        %v3202 = vrot.slane %v3200, 5
        %v3203 = vsel %vm1232, %v3198, %v3202
        %v3205 = vshrl.u32 %v3093, 16
        %v3207 = vrot.slane %v3205, 4
        %v3208 = vshll.u32 %v3093, 16
        %v3210 = vrot.slane %v3208, 5
        %v3211 = vor.u32 %v3207, %v3210
        %v3212 = vrot.slane %v3211, 4
        %v3214 = vshll.u32 %v3094, 16
        %v3216 = vrot.slane %v3214, 5
        %v3217 = vsel %vm1232, %v3212, %v3216
        %v3218 = vshrl.u32 %v3094, 16
        %v3220 = vrot.slane %v3218, 4
        %v3221 = vor.u32 %v3220, %v3216
        %v3222 = vrot.slane %v3221, 4
        %v3224 = vshll.u32 %v3095, 16
        %v3226 = vrot.slane %v3224, 5
        %v3227 = vsel %vm1232, %v3222, %v3226
        %v3229 = vshrl.u32 %v3096, 16
        %v3231 = vrot.slane %v3229, 4
        %v3232 = vshll.u32 %v3096, 16
        %v3234 = vrot.slane %v3232, 5
        %v3235 = vor.u32 %v3231, %v3234
        %v3236 = vrot.slane %v3235, 4
        %v3238 = vshll.u32 %v3097, 16
        %v3240 = vrot.slane %v3238, 5
        %v3241 = vsel %vm1232, %v3236, %v3240
        %v3242 = vshrl.u32 %v3097, 16
        %v3244 = vrot.slane %v3242, 4
        %v3245 = vor.u32 %v3244, %v3240
        %v3246 = vrot.slane %v3245, 4
        %v3248 = vshll.u32 %v3098, 16
        %v3250 = vrot.slane %v3248, 5
        %v3251 = vsel %vm1232, %v3246, %v3250
        %v3253 = vshrl.u32 %v3099, 16
        %v3255 = vrot.slane %v3253, 4
        %v3256 = vshll.u32 %v3099, 16
        %v3258 = vrot.slane %v3256, 5
        %v3259 = vor.u32 %v3255, %v3258
        %v3260 = vrot.slane %v3259, 4
        %v3262 = vshll.u32 %v3100, 16
        %v3264 = vrot.slane %v3262, 5
        %v3265 = vsel %vm1232, %v3260, %v3264
        %v3266 = vshrl.u32 %v3100, 16
        %v3268 = vrot.slane %v3266, 4
        %v3269 = vor.u32 %v3268, %v3264
        %v3270 = vrot.slane %v3269, 4
        %v3272 = vshll.u32 %v3101, 16
        %v3274 = vrot.slane %v3272, 5
        %v3275 = vsel %vm1232, %v3270, %v3274
        %v3277 = vshrl.u32 %v3102, 16
        %v3279 = vrot.slane %v3277, 4
        %v3280 = vshll.u32 %v3102, 16
        %v3282 = vrot.slane %v3280, 5
        %v3283 = vor.u32 %v3279, %v3282
        %v3284 = vrot.slane %v3283, 4
        %v3286 = vshll.u32 %v3103, 16
        %v3288 = vrot.slane %v3286, 5
        %v3289 = vsel %vm1232, %v3284, %v3288
        %v3290 = vshrl.u32 %v3103, 16
        %v3292 = vrot.slane %v3290, 4
        %v3293 = vor.u32 %v3292, %v3288
        %v3294 = vrot.slane %v3293, 4
        %v3296 = vshll.u32 %v3104, 16
        %v3298 = vrot.slane %v3296, 5
        %v3299 = vsel %vm1232, %v3294, %v3298
        %v3301 = vshrl.u32 %v3105, 16
        %v3303 = vrot.slane %v3301, 4
        %v3304 = vshll.u32 %v3105, 16
        %v3306 = vrot.slane %v3304, 5
        %v3307 = vor.u32 %v3303, %v3306
        %v3308 = vrot.slane %v3307, 4
        %v3310 = vshll.u32 %v3106, 16
        %v3312 = vrot.slane %v3310, 5
        %v3313 = vsel %vm1232, %v3308, %v3312
        %v3314 = vshrl.u32 %v3106, 16
        %v3316 = vrot.slane %v3314, 4
        %v3317 = vor.u32 %v3316, %v3312
        %v3318 = vrot.slane %v3317, 4
        %v3320 = vshll.u32 %v3107, 16
        %v3322 = vrot.slane %v3320, 5
        %v3323 = vsel %vm1232, %v3318, %v3322
        %v3325 = vshrl.u32 %v3108, 16
        %v3327 = vrot.slane %v3325, 4
        %v3328 = vshll.u32 %v3108, 16
        %v3330 = vrot.slane %v3328, 5
        %v3331 = vor.u32 %v3327, %v3330
        %v3332 = vrot.slane %v3331, 4
        %v3334 = vshll.u32 %v3109, 16
        %v3336 = vrot.slane %v3334, 5
        %v3337 = vsel %vm1232, %v3332, %v3336
        %v3338 = vshrl.u32 %v3109, 16
        %v3340 = vrot.slane %v3338, 4
        %v3341 = vor.u32 %v3340, %v3336
        %v3342 = vrot.slane %v3341, 4
        %v3344 = vshll.u32 %v3110, 16
        %v3346 = vrot.slane %v3344, 5
        %v3347 = vsel %vm1232, %v3342, %v3346
        %v3349 = vshrl.u32 %v3111, 16
        %v3351 = vrot.slane %v3349, 4
        %v3352 = vshll.u32 %v3111, 16
        %v3354 = vrot.slane %v3352, 5
        %v3355 = vor.u32 %v3351, %v3354
        %v3356 = vrot.slane %v3355, 4
        %v3358 = vshll.u32 %v3112, 16
        %v3360 = vrot.slane %v3358, 5
        %v3361 = vsel %vm1232, %v3356, %v3360
        %v3362 = vshrl.u32 %v3112, 16
        %v3364 = vrot.slane %v3362, 4
        %v3365 = vor.u32 %v3364, %v3360
        %v3366 = vrot.slane %v3365, 4
        %v3368 = vshll.u32 %v3113, 16
        %v3370 = vrot.slane %v3368, 5
        %v3371 = vsel %vm1232, %v3366, %v3370
        %v3373 = vshrl.u32 %v3114, 16
        %v3375 = vrot.slane %v3373, 4
        %v3376 = vshll.u32 %v3114, 16
        %v3378 = vrot.slane %v3376, 5
        %v3379 = vor.u32 %v3375, %v3378
        %v3380 = vrot.slane %v3379, 4
        %v3382 = vshll.u32 %v3115, 16
        %v3384 = vrot.slane %v3382, 5
        %v3385 = vsel %vm1232, %v3380, %v3384
        %v3386 = vshrl.u32 %v3115, 16
        %v3388 = vrot.slane %v3386, 4
        %v3389 = vor.u32 %v3388, %v3384
        %v3390 = vrot.slane %v3389, 4
        %v3392 = vshll.u32 %v3116, 16
        %v3394 = vrot.slane %v3392, 5
        %v3395 = vsel %vm1232, %v3390, %v3394
        %v3397 = vshrl.u32 %v3117, 16
        %v3399 = vrot.slane %v3397, 4
        %v3400 = vshll.u32 %v3117, 16
        %v3402 = vrot.slane %v3400, 5
        %v3403 = vor.u32 %v3399, %v3402
        %v3404 = vrot.slane %v3403, 4
        %v3406 = vshll.u32 %v3118, 16
        %v3408 = vrot.slane %v3406, 5
        %v3409 = vsel %vm1232, %v3404, %v3408
        %v3410 = vshrl.u32 %v3118, 16
        %v3412 = vrot.slane %v3410, 4
        %v3413 = vor.u32 %v3412, %v3408
        %v3414 = vrot.slane %v3413, 4
        %v3416 = vshll.u32 %v3119, 16
        %v3418 = vrot.slane %v3416, 5
        %v3419 = vsel %vm1232, %v3414, %v3418
        %v3421 = vshrl.u32 %v3120, 16
        %v3423 = vrot.slane %v3421, 4
        %v3424 = vshll.u32 %v3120, 16
        %v3426 = vrot.slane %v3424, 5
        %v3427 = vor.u32 %v3423, %v3426
        %v3428 = vrot.slane %v3427, 4
        %v3430 = vshll.u32 %v3121, 16
        %v3432 = vrot.slane %v3430, 5
        %v3433 = vsel %vm1232, %v3428, %v3432
        %v3434 = vshrl.u32 %v3121, 16
        %v3436 = vrot.slane %v3434, 4
        %v3437 = vor.u32 %v3436, %v3432
        %v3438 = vrot.slane %v3437, 4
        %v3440 = vshll.u32 %v3122, 16
        %v3442 = vrot.slane %v3440, 5
        %v3443 = vsel %vm1232, %v3438, %v3442
        %v3445 = vshrl.u32 %v3123, 16
        %v3447 = vrot.slane %v3445, 4
        %v3448 = vshll.u32 %v3123, 16
        %v3450 = vrot.slane %v3448, 5
        %v3451 = vor.u32 %v3447, %v3450
        %v3452 = vrot.slane %v3451, 4
        %v3454 = vshll.u32 %v3124, 16
        %v3456 = vrot.slane %v3454, 5
        %v3457 = vsel %vm1232, %v3452, %v3456
        %v3458 = vshrl.u32 %v3124, 16
        %v3460 = vrot.slane %v3458, 4
        %v3461 = vor.u32 %v3460, %v3456
        %v3462 = vrot.slane %v3461, 4
        %v3464 = vshll.u32 %v3125, 16
        %v3466 = vrot.slane %v3464, 5
        %v3467 = vsel %vm1232, %v3462, %v3466
        %v3469 = vshrl.u32 %v3126, 16
        %v3471 = vrot.slane %v3469, 4
        %v3472 = vshll.u32 %v3126, 16
        %v3474 = vrot.slane %v3472, 5
        %v3475 = vor.u32 %v3471, %v3474
        %v3476 = vrot.slane %v3475, 4
        %v3478 = vshll.u32 %v3127, 16
        %v3480 = vrot.slane %v3478, 5
        %v3481 = vsel %vm1232, %v3476, %v3480
        %v3482 = vshrl.u32 %v3127, 16
        %v3484 = vrot.slane %v3482, 4
        %v3485 = vor.u32 %v3484, %v3480
        %v3486 = vrot.slane %v3485, 4
        %v3488 = vshll.u32 %v3128, 16
        %v3490 = vrot.slane %v3488, 5
        %v3491 = vsel %vm1232, %v3486, %v3490
        %v3493 = vshrl.u32 %v3129, 16
        %v3495 = vrot.slane %v3493, 4
        %v3496 = vshll.u32 %v3129, 16
        %v3498 = vrot.slane %v3496, 5
        %v3499 = vor.u32 %v3495, %v3498
        %v3500 = vrot.slane %v3499, 4
        %v3502 = vshll.u32 %v3130, 16
        %v3504 = vrot.slane %v3502, 5
        %v3505 = vsel %vm1232, %v3500, %v3504
        %v3506 = vshrl.u32 %v3130, 16
        %v3508 = vrot.slane %v3506, 4
        %v3509 = vor.u32 %v3508, %v3504
        %v3510 = vrot.slane %v3509, 4
        %v3512 = vshll.u32 %v3131, 16
        %v3514 = vrot.slane %v3512, 5
        %v3515 = vsel %vm1232, %v3510, %v3514
        %s3516 = scalar_lea.vmem [#allocation8], 256
        %v3517 = vld [vmem:[%s3516] sm:$0xf]
        %v3518 = vld [vmem:[%s3516 + $0x4] sm:$0xf]
        %v3519 = vld [vmem:[%s3516 + $0x8] sm:$0xf]
        %v3520 = vld [vmem:[%s3516 + $0xc] sm:$0xf]
        %v3521 = vld [vmem:[%s3516 + $0x10] sm:$0xf]
        %v3522 = vld [vmem:[%s3516 + $0x14] sm:$0xf]
        %v3523 = vld [vmem:[%s3516 + $0x18] sm:$0xf]
        %v3524 = vld [vmem:[%s3516 + $0x1c] sm:$0xf]
        %v3525 = vld [vmem:[%s3516 + $0x20] sm:$0xf]
        %v3526 = vld [vmem:[%s3516 + $0x24] sm:$0xf]
        %v3527 = vld [vmem:[%s3516 + $0x28] sm:$0xf]
        %v3528 = vld [vmem:[%s3516 + $0x2c] sm:$0xf]
        %v3529 = vld [vmem:[%s3516 + $0x30] sm:$0xf]
        %v3530 = vld [vmem:[%s3516 + $0x34] sm:$0xf]
        %v3531 = vld [vmem:[%s3516 + $0x38] sm:$0xf]
        %v3532 = vld [vmem:[%s3516 + $0x3c] sm:$0xf]
        %v3533 = vunpack.c.l.b16 %v3145
        %v3534 = vunpack.c.l.b16 %v3155
        %v3535 = vunpack.c.l.b16 %v3169
        %v3536 = vunpack.c.l.b16 %v3179
        %v3537 = vunpack.c.l.b16 %v3193
        %v3538 = vunpack.c.l.b16 %v3203
        %v3539 = vunpack.c.l.b16 %v3217
        %v3540 = vunpack.c.l.b16 %v3227
        %v3541 = vunpack.c.l.b16 %v3241
        %v3542 = vunpack.c.l.b16 %v3251
        %v3543 = vunpack.c.l.b16 %v3265
        %v3544 = vunpack.c.l.b16 %v3275
        %v3545 = vunpack.c.l.b16 %v3289
        %v3546 = vunpack.c.l.b16 %v3299
        %v3547 = vunpack.c.l.b16 %v3313
        %v3548 = vunpack.c.l.b16 %v3323
        %v3549 = vunpack.c.l.b16 %v3337
        %v3550 = vunpack.c.l.b16 %v3347
        %v3551 = vunpack.c.l.b16 %v3361
        %v3552 = vunpack.c.l.b16 %v3371
        %v3553 = vunpack.c.l.b16 %v3385
        %v3554 = vunpack.c.l.b16 %v3395
        %v3555 = vunpack.c.l.b16 %v3409
        %v3556 = vunpack.c.l.b16 %v3419
        %v3557 = vunpack.c.l.b16 %v3433
        %v3558 = vunpack.c.l.b16 %v3443
        %v3559 = vunpack.c.l.b16 %v3457
        %v3560 = vunpack.c.l.b16 %v3467
        %v3561 = vunpack.c.l.b16 %v3481
        %v3562 = vunpack.c.l.b16 %v3491
        %v3563 = vunpack.c.l.b16 %v3505
        %v3564 = vunpack.c.l.b16 %v3515
        %v3565 = vpack.c.b16 %v3534, %v3533
        %v3566 = vpack.c.b16 %v3536, %v3535
        %v3567 = vpack.c.b16 %v3538, %v3537
        %v3568 = vpack.c.b16 %v3540, %v3539
        %v3569 = vpack.c.b16 %v3542, %v3541
        %v3570 = vpack.c.b16 %v3544, %v3543
        %v3571 = vpack.c.b16 %v3546, %v3545
        %v3572 = vpack.c.b16 %v3548, %v3547
        %v3573 = vpack.c.b16 %v3550, %v3549
        %v3574 = vpack.c.b16 %v3552, %v3551
        %v3575 = vpack.c.b16 %v3554, %v3553
        %v3576 = vpack.c.b16 %v3556, %v3555
        %v3577 = vpack.c.b16 %v3558, %v3557
        %v3578 = vpack.c.b16 %v3560, %v3559
        %v3579 = vpack.c.b16 %v3562, %v3561
        %v3580 = vpack.c.b16 %v3564, %v3563
        %v3613 = vunpack.c.l.b16 %v3517
        %v3614 = vunpack.c.l.b16 %v3518
        %v3615 = vunpack.c.l.b16 %v3519
        %v3616 = vunpack.c.l.b16 %v3520
        %v3617 = vunpack.c.l.b16 %v3521
        %v3618 = vunpack.c.l.b16 %v3522
        %v3619 = vunpack.c.l.b16 %v3523
        %v3620 = vunpack.c.l.b16 %v3524
        %v3621 = vunpack.c.l.b16 %v3525
        %v3622 = vunpack.c.l.b16 %v3526
        %v3623 = vunpack.c.l.b16 %v3527
        %v3624 = vunpack.c.l.b16 %v3528
        %v3625 = vunpack.c.l.b16 %v3529
        %v3626 = vunpack.c.l.b16 %v3530
        %v3627 = vunpack.c.l.b16 %v3531
        %v3628 = vunpack.c.l.b16 %v3532
        %v3629 = vpack.c.b16 %v3614, %v3613
        %v3630 = vpack.c.b16 %v3616, %v3615
        %v3631 = vpack.c.b16 %v3618, %v3617
        %v3632 = vpack.c.b16 %v3620, %v3619
        %v3633 = vpack.c.b16 %v3622, %v3621
        %v3634 = vpack.c.b16 %v3624, %v3623
        %v3635 = vpack.c.b16 %v3626, %v3625
        %v3636 = vpack.c.b16 %v3628, %v3627
        %3645 = vmatprep.subr.bf16.mxu0 0
        %3646 = vmatpush1.bf16.msra.mxu0 %v3636
        %3647 = vmatprep.subr.bf16.mxu0 0
        %3648 = vmatpush1.bf16.msra.mxu0 %v3635
        %3649 = vmatprep.subr.bf16.mxu0 0
        %3650 = vmatpush1.bf16.msra.mxu0 %v3634
        %3651 = vmatprep.subr.bf16.mxu0 0
        %3652 = vmatpush1.bf16.msra.mxu0 %v3633
        %3653 = vmatprep.subr.bf16.mxu0 0
        %3654 = vmatpush1.bf16.msra.mxu0 %v3632
        %3655 = vmatprep.subr.bf16.mxu0 0
        %3656 = vmatpush1.bf16.msra.mxu0 %v3631
        %3657 = vmatprep.subr.bf16.mxu0 0
        %3658 = vmatpush1.bf16.msra.mxu0 %v3630
        %3659 = vmatprep.subr.bf16.mxu0 0
        %3660 = vmatpush1.bf16.msra.mxu0 %v3629
        %3661 = vmatprep.subr.bf16.mxu0 0
        %3662 = vmatpush2.bf16.msra.mxu0 0
        %3663 = vmatprep.subr.bf16.mxu0 0
        %3664 = vmatpush2.bf16.msra.mxu0 0
        %3665 = vmatprep.subr.bf16.mxu0 0
        %3666 = vmatpush2.bf16.msra.mxu0 0
        %3667 = vmatprep.subr.bf16.mxu0 0
        %3668 = vmatpush2.bf16.msra.mxu0 0
        %3669 = vmatprep.subr.bf16.mxu0 0
        %3670 = vmatpush2.bf16.msra.mxu0 0
        %3671 = vmatprep.subr.bf16.mxu0 0
        %3672 = vmatpush2.bf16.msra.mxu0 0
        %3673 = vmatprep.subr.bf16.mxu0 0
        %3674 = vmatpush2.bf16.msra.mxu0 0
        %3675 = vmatprep.subr.bf16.mxu0 0
        %3676 = vmatpush2.bf16.msra.mxu0 0
        %3677 = vmatprep.mubr.bf16.mxu0 0
        %3678 = vmatmul.mubr.bf16.gmra.mxu0 %v3565
        %v3679 = vpop.f32.mrf.mxu0
        %v3680 = vadd.f32 0.0, %v3679
        %v3681 = vpop.f32.mrf.mxu0
        %v3682 = vpop.f32.mrf.mxu0
        %v3683 = vadd.f32 0.0, %v3682
        %v3684 = vpop.f32.mrf.mxu0
        %3685 = vmatprep.mubr.bf16.mxu0 0
        %3686 = vmatmul.mubr.bf16.gmra.mxu0 %v3566
        %v3687 = vpop.f32.mrf.mxu0
        %v3688 = vadd.f32 0.0, %v3687
        %v3689 = vpop.f32.mrf.mxu0
        %v3690 = vpop.f32.mrf.mxu0
        %v3691 = vadd.f32 0.0, %v3690
        %v3692 = vpop.f32.mrf.mxu0
        %3693 = vmatprep.mubr.bf16.mxu0 0
        %3694 = vmatmul.mubr.bf16.gmra.mxu0 %v3567
        %v3695 = vpop.f32.mrf.mxu0
        %v3696 = vadd.f32 0.0, %v3695
        %v3697 = vpop.f32.mrf.mxu0
        %v3698 = vpop.f32.mrf.mxu0
        %v3699 = vadd.f32 0.0, %v3698
        %v3700 = vpop.f32.mrf.mxu0
        %3701 = vmatprep.mubr.bf16.mxu0 0
        %3702 = vmatmul.mubr.bf16.gmra.mxu0 %v3568
        %v3703 = vpop.f32.mrf.mxu0
        %v3704 = vadd.f32 0.0, %v3703
        %v3705 = vpop.f32.mrf.mxu0
        %v3706 = vpop.f32.mrf.mxu0
        %v3707 = vadd.f32 0.0, %v3706
        %v3708 = vpop.f32.mrf.mxu0
        %3709 = vmatprep.mubr.bf16.mxu0 0
        %3710 = vmatmul.mubr.bf16.gmra.mxu0 %v3569
        %v3711 = vpop.f32.mrf.mxu0
        %v3712 = vadd.f32 0.0, %v3711
        %v3713 = vpop.f32.mrf.mxu0
        %v3714 = vpop.f32.mrf.mxu0
        %v3715 = vadd.f32 0.0, %v3714
        %v3716 = vpop.f32.mrf.mxu0
        %3717 = vmatprep.mubr.bf16.mxu0 0
        %3718 = vmatmul.mubr.bf16.gmra.mxu0 %v3570
        %v3719 = vpop.f32.mrf.mxu0
        %v3720 = vadd.f32 0.0, %v3719
        %v3721 = vpop.f32.mrf.mxu0
        %v3722 = vpop.f32.mrf.mxu0
        %v3723 = vadd.f32 0.0, %v3722
        %v3724 = vpop.f32.mrf.mxu0
        %3725 = vmatprep.mubr.bf16.mxu0 0
        %3726 = vmatmul.mubr.bf16.gmra.mxu0 %v3571
        %v3727 = vpop.f32.mrf.mxu0
        %v3728 = vadd.f32 0.0, %v3727
        %v3729 = vpop.f32.mrf.mxu0
        %v3730 = vpop.f32.mrf.mxu0
        %v3731 = vadd.f32 0.0, %v3730
        %v3732 = vpop.f32.mrf.mxu0
        %3733 = vmatprep.mubr.bf16.mxu0 0
        %3734 = vmatmul.mubr.bf16.gmra.mxu0 %v3572
        %v3735 = vpop.f32.mrf.mxu0
        %v3736 = vadd.f32 0.0, %v3735
        %v3737 = vpop.f32.mrf.mxu0
        %v3738 = vpop.f32.mrf.mxu0
        %v3739 = vadd.f32 0.0, %v3738
        %v3740 = vpop.f32.mrf.mxu0
        %3741 = vmatprep.mubr.bf16.mxu0 0
        %3742 = vmatmul.mubr.bf16.gmra.mxu0 %v3573
        %v3743 = vpop.f32.mrf.mxu0
        %v3744 = vadd.f32 0.0, %v3743
        %v3745 = vpop.f32.mrf.mxu0
        %v3746 = vpop.f32.mrf.mxu0
        %v3747 = vadd.f32 0.0, %v3746
        %v3748 = vpop.f32.mrf.mxu0
        %3749 = vmatprep.mubr.bf16.mxu0 0
        %3750 = vmatmul.mubr.bf16.gmra.mxu0 %v3574
        %v3751 = vpop.f32.mrf.mxu0
        %v3752 = vadd.f32 0.0, %v3751
        %v3753 = vpop.f32.mrf.mxu0
        %v3754 = vpop.f32.mrf.mxu0
        %v3755 = vadd.f32 0.0, %v3754
        %v3756 = vpop.f32.mrf.mxu0
        %3757 = vmatprep.mubr.bf16.mxu0 0
        %3758 = vmatmul.mubr.bf16.gmra.mxu0 %v3575
        %v3759 = vpop.f32.mrf.mxu0
        %v3760 = vadd.f32 0.0, %v3759
        %v3761 = vpop.f32.mrf.mxu0
        %v3762 = vpop.f32.mrf.mxu0
        %v3763 = vadd.f32 0.0, %v3762
        %v3764 = vpop.f32.mrf.mxu0
        %3765 = vmatprep.mubr.bf16.mxu0 0
        %3766 = vmatmul.mubr.bf16.gmra.mxu0 %v3576
        %v3767 = vpop.f32.mrf.mxu0
        %v3768 = vadd.f32 0.0, %v3767
        %v3769 = vpop.f32.mrf.mxu0
        %v3770 = vpop.f32.mrf.mxu0
        %v3771 = vadd.f32 0.0, %v3770
        %v3772 = vpop.f32.mrf.mxu0
        %3773 = vmatprep.mubr.bf16.mxu0 0
        %3774 = vmatmul.mubr.bf16.gmra.mxu0 %v3577
        %v3775 = vpop.f32.mrf.mxu0
        %v3776 = vadd.f32 0.0, %v3775
        %v3777 = vpop.f32.mrf.mxu0
        %v3778 = vpop.f32.mrf.mxu0
        %v3779 = vadd.f32 0.0, %v3778
        %v3780 = vpop.f32.mrf.mxu0
        %3781 = vmatprep.mubr.bf16.mxu0 0
        %3782 = vmatmul.mubr.bf16.gmra.mxu0 %v3578
        %v3783 = vpop.f32.mrf.mxu0
        %v3784 = vadd.f32 0.0, %v3783
        %v3785 = vpop.f32.mrf.mxu0
        %v3786 = vpop.f32.mrf.mxu0
        %v3787 = vadd.f32 0.0, %v3786
        %v3788 = vpop.f32.mrf.mxu0
        %3789 = vmatprep.mubr.bf16.mxu0 0
        %3790 = vmatmul.mubr.bf16.gmra.mxu0 %v3579
        %v3791 = vpop.f32.mrf.mxu0
        %v3792 = vadd.f32 0.0, %v3791
        %v3793 = vpop.f32.mrf.mxu0
        %v3794 = vpop.f32.mrf.mxu0
        %v3795 = vadd.f32 0.0, %v3794
        %v3796 = vpop.f32.mrf.mxu0
        %3797 = vmatprep.mubr.bf16.mxu0 0
        %3798 = vmatmul.mubr.bf16.gmra.mxu0 %v3580
        %v3799 = vpop.f32.mrf.mxu0
        %v3800 = vadd.f32 0.0, %v3799
        %v3801 = vpop.f32.mrf.mxu0
        %v3802 = vpop.f32.mrf.mxu0
        %v3803 = vadd.f32 0.0, %v3802
        %v3804 = vpop.f32.mrf.mxu0
        %3805 = vdwg.mxu0
        %v3806 = vadd.f32 %v3052, %v3680
        %v3807 = vadd.f32 %v3053, %v3683
        %v3808 = vadd.f32 %v3054, %v3688
        %v3809 = vadd.f32 %v3055, %v3691
        %v3810 = vadd.f32 %v3056, %v3696
        %v3811 = vadd.f32 %v3057, %v3699
        %v3812 = vadd.f32 %v3058, %v3704
        %v3813 = vadd.f32 %v3059, %v3707
        %v3814 = vadd.f32 %v3060, %v3712
        %v3815 = vadd.f32 %v3061, %v3715
        %v3816 = vadd.f32 %v3062, %v3720
        %v3817 = vadd.f32 %v3063, %v3723
        %v3818 = vadd.f32 %v3064, %v3728
        %v3819 = vadd.f32 %v3065, %v3731
        %v3820 = vadd.f32 %v3066, %v3736
        %v3821 = vadd.f32 %v3067, %v3739
        %v3822 = vadd.f32 %v3068, %v3744
        %v3823 = vadd.f32 %v3069, %v3747
        %v3824 = vadd.f32 %v3070, %v3752
        %v3825 = vadd.f32 %v3071, %v3755
        %v3826 = vadd.f32 %v3072, %v3760
        %v3827 = vadd.f32 %v3073, %v3763
        %v3828 = vadd.f32 %v3074, %v3768
        %v3829 = vadd.f32 %v3075, %v3771
        %v3830 = vadd.f32 %v3076, %v3776
        %v3831 = vadd.f32 %v3077, %v3779
        %v3832 = vadd.f32 %v3078, %v3784
        %v3833 = vadd.f32 %v3079, %v3787
        %v3834 = vadd.f32 %v3080, %v3792
        %v3835 = vadd.f32 %v3081, %v3795
        %v3836 = vadd.f32 %v3082, %v3800
        %v3837 = vadd.f32 %v3083, %v3803
        %v3838 = vld [vmem:[%s2697] sm:$0xe]
        %v3839 = vld [vmem:[%s2697 + $0xc] sm:$0xe]
        %v3840 = vld [vmem:[%s2697 + $0x18] sm:$0xe]
        %v3841 = vld [vmem:[%s2697 + $0x24] sm:$0xe]
        %v3842 = vld [vmem:[%s2697 + $0x30] sm:$0xe]
        %v3843 = vld [vmem:[%s2697 + $0x3c] sm:$0xe]
        %v3844 = vld [vmem:[%s2697 + $0x48] sm:$0xe]
        %v3845 = vld [vmem:[%s2697 + $0x54] sm:$0xe]
        %v3846 = vld [vmem:[%s2697 + $0x60] sm:$0xe]
        %v3847 = vld [vmem:[%s2697 + $0x6c] sm:$0xe]
        %v3848 = vld [vmem:[%s2697 + $0x78] sm:$0xe]
        %v3849 = vld [vmem:[%s2697 + $0x84] sm:$0xe]
        %v3850 = vld [vmem:[%s2697 + $0x90] sm:$0xe]
        %v3851 = vld [vmem:[%s2697 + $0x9c] sm:$0xe]
        %v3852 = vld [vmem:[%s2697 + $0xa8] sm:$0xe]
        %v3853 = vld [vmem:[%s2697 + $0xb4] sm:$0xe]
        %v3902 = vrot.slane %v3838, 5
        %v3903 = vrot.slane %v3902, 4
        %v3904 = vrot.slane %v3085, 5
        %v3905 = vsel %vm2262, %v3903, %v3904
        %v3906 = vrot.slane %v3904, 4
        %v3907 = vrot.slane %v3086, 5
        %v3908 = vsel %vm2262, %v3906, %v3907
        %v3909 = vrot.slane %v3839, 5
        %v3910 = vrot.slane %v3909, 4
        %v3911 = vrot.slane %v3088, 5
        %v3912 = vsel %vm2262, %v3910, %v3911
        %v3913 = vrot.slane %v3911, 4
        %v3914 = vrot.slane %v3089, 5
        %v3915 = vsel %vm2262, %v3913, %v3914
        %v3916 = vrot.slane %v3840, 5
        %v3917 = vrot.slane %v3916, 4
        %v3918 = vrot.slane %v3091, 5
        %v3919 = vsel %vm2262, %v3917, %v3918
        %v3920 = vrot.slane %v3918, 4
        %v3921 = vrot.slane %v3092, 5
        %v3922 = vsel %vm2262, %v3920, %v3921
        %v3923 = vrot.slane %v3841, 5
        %v3924 = vrot.slane %v3923, 4
        %v3925 = vrot.slane %v3094, 5
        %v3926 = vsel %vm2262, %v3924, %v3925
        %v3927 = vrot.slane %v3925, 4
        %v3928 = vrot.slane %v3095, 5
        %v3929 = vsel %vm2262, %v3927, %v3928
        %v3930 = vrot.slane %v3842, 5
        %v3931 = vrot.slane %v3930, 4
        %v3932 = vrot.slane %v3097, 5
        %v3933 = vsel %vm2262, %v3931, %v3932
        %v3934 = vrot.slane %v3932, 4
        %v3935 = vrot.slane %v3098, 5
        %v3936 = vsel %vm2262, %v3934, %v3935
        %v3937 = vrot.slane %v3843, 5
        %v3938 = vrot.slane %v3937, 4
        %v3939 = vrot.slane %v3100, 5
        %v3940 = vsel %vm2262, %v3938, %v3939
        %v3941 = vrot.slane %v3939, 4
        %v3942 = vrot.slane %v3101, 5
        %v3943 = vsel %vm2262, %v3941, %v3942
        %v3944 = vrot.slane %v3844, 5
        %v3945 = vrot.slane %v3944, 4
        %v3946 = vrot.slane %v3103, 5
        %v3947 = vsel %vm2262, %v3945, %v3946
        %v3948 = vrot.slane %v3946, 4
        %v3949 = vrot.slane %v3104, 5
        %v3950 = vsel %vm2262, %v3948, %v3949
        %v3951 = vrot.slane %v3845, 5
        %v3952 = vrot.slane %v3951, 4
        %v3953 = vrot.slane %v3106, 5
        %v3954 = vsel %vm2262, %v3952, %v3953
        %v3955 = vrot.slane %v3953, 4
        %v3956 = vrot.slane %v3107, 5
        %v3957 = vsel %vm2262, %v3955, %v3956
        %v3958 = vrot.slane %v3846, 5
        %v3959 = vrot.slane %v3958, 4
        %v3960 = vrot.slane %v3109, 5
        %v3961 = vsel %vm2262, %v3959, %v3960
        %v3962 = vrot.slane %v3960, 4
        %v3963 = vrot.slane %v3110, 5
        %v3964 = vsel %vm2262, %v3962, %v3963
        %v3965 = vrot.slane %v3847, 5
        %v3966 = vrot.slane %v3965, 4
        %v3967 = vrot.slane %v3112, 5
        %v3968 = vsel %vm2262, %v3966, %v3967
        %v3969 = vrot.slane %v3967, 4
        %v3970 = vrot.slane %v3113, 5
        %v3971 = vsel %vm2262, %v3969, %v3970
        %v3972 = vrot.slane %v3848, 5
        %v3973 = vrot.slane %v3972, 4
        %v3974 = vrot.slane %v3115, 5
        %v3975 = vsel %vm2262, %v3973, %v3974
        %v3976 = vrot.slane %v3974, 4
        %v3977 = vrot.slane %v3116, 5
        %v3978 = vsel %vm2262, %v3976, %v3977
        %v3979 = vrot.slane %v3849, 5
        %v3980 = vrot.slane %v3979, 4
        %v3981 = vrot.slane %v3118, 5
        %v3982 = vsel %vm2262, %v3980, %v3981
        %v3983 = vrot.slane %v3981, 4
        %v3984 = vrot.slane %v3119, 5
        %v3985 = vsel %vm2262, %v3983, %v3984
        %v3986 = vrot.slane %v3850, 5
        %v3987 = vrot.slane %v3986, 4
        %v3988 = vrot.slane %v3121, 5
        %v3989 = vsel %vm2262, %v3987, %v3988
        %v3990 = vrot.slane %v3988, 4
        %v3991 = vrot.slane %v3122, 5
        %v3992 = vsel %vm2262, %v3990, %v3991
        %v3993 = vrot.slane %v3851, 5
        %v3994 = vrot.slane %v3993, 4
        %v3995 = vrot.slane %v3124, 5
        %v3996 = vsel %vm2262, %v3994, %v3995
        %v3997 = vrot.slane %v3995, 4
        %v3998 = vrot.slane %v3125, 5
        %v3999 = vsel %vm2262, %v3997, %v3998
        %v4000 = vrot.slane %v3852, 5
        %v4001 = vrot.slane %v4000, 4
        %v4002 = vrot.slane %v3127, 5
        %v4003 = vsel %vm2262, %v4001, %v4002
        %v4004 = vrot.slane %v4002, 4
        %v4005 = vrot.slane %v3128, 5
        %v4006 = vsel %vm2262, %v4004, %v4005
        %v4007 = vrot.slane %v3853, 5
        %v4008 = vrot.slane %v4007, 4
        %v4009 = vrot.slane %v3130, 5
        %v4010 = vsel %vm2262, %v4008, %v4009
        %v4011 = vrot.slane %v4009, 4
        %v4012 = vrot.slane %v3131, 5
        %v4013 = vsel %vm2262, %v4011, %v4012
        %s4014 = scalar_lea.vmem [#allocation8], 320
        %v4015 = vld [vmem:[%s4014] sm:$0xf]
        %v4016 = vld [vmem:[%s4014 + $0x4] sm:$0xf]
        %v4017 = vld [vmem:[%s4014 + $0x8] sm:$0xf]
        %v4018 = vld [vmem:[%s4014 + $0xc] sm:$0xf]
        %v4019 = vld [vmem:[%s4014 + $0x10] sm:$0xf]
        %v4020 = vld [vmem:[%s4014 + $0x14] sm:$0xf]
        %v4021 = vld [vmem:[%s4014 + $0x18] sm:$0xf]
        %v4022 = vld [vmem:[%s4014 + $0x1c] sm:$0xf]
        %v4023 = vld [vmem:[%s4014 + $0x20] sm:$0xf]
        %v4024 = vld [vmem:[%s4014 + $0x24] sm:$0xf]
        %v4025 = vld [vmem:[%s4014 + $0x28] sm:$0xf]
        %v4026 = vld [vmem:[%s4014 + $0x2c] sm:$0xf]
        %v4027 = vld [vmem:[%s4014 + $0x30] sm:$0xf]
        %v4028 = vld [vmem:[%s4014 + $0x34] sm:$0xf]
        %v4029 = vld [vmem:[%s4014 + $0x38] sm:$0xf]
        %v4030 = vld [vmem:[%s4014 + $0x3c] sm:$0xf]
        %v4031 = vunpack.c.l.b16 %v3905
        %v4032 = vunpack.c.l.b16 %v3908
        %v4033 = vunpack.c.l.b16 %v3912
        %v4034 = vunpack.c.l.b16 %v3915
        %v4035 = vunpack.c.l.b16 %v3919
        %v4036 = vunpack.c.l.b16 %v3922
        %v4037 = vunpack.c.l.b16 %v3926
        %v4038 = vunpack.c.l.b16 %v3929
        %v4039 = vunpack.c.l.b16 %v3933
        %v4040 = vunpack.c.l.b16 %v3936
        %v4041 = vunpack.c.l.b16 %v3940
        %v4042 = vunpack.c.l.b16 %v3943
        %v4043 = vunpack.c.l.b16 %v3947
        %v4044 = vunpack.c.l.b16 %v3950
        %v4045 = vunpack.c.l.b16 %v3954
        %v4046 = vunpack.c.l.b16 %v3957
        %v4047 = vunpack.c.l.b16 %v3961
        %v4048 = vunpack.c.l.b16 %v3964
        %v4049 = vunpack.c.l.b16 %v3968
        %v4050 = vunpack.c.l.b16 %v3971
        %v4051 = vunpack.c.l.b16 %v3975
        %v4052 = vunpack.c.l.b16 %v3978
        %v4053 = vunpack.c.l.b16 %v3982
        %v4054 = vunpack.c.l.b16 %v3985
        %v4055 = vunpack.c.l.b16 %v3989
        %v4056 = vunpack.c.l.b16 %v3992
        %v4057 = vunpack.c.l.b16 %v3996
        %v4058 = vunpack.c.l.b16 %v3999
        %v4059 = vunpack.c.l.b16 %v4003
        %v4060 = vunpack.c.l.b16 %v4006
        %v4061 = vunpack.c.l.b16 %v4010
        %v4062 = vunpack.c.l.b16 %v4013
        %v4063 = vpack.c.b16 %v4032, %v4031
        %v4064 = vpack.c.b16 %v4034, %v4033
        %v4065 = vpack.c.b16 %v4036, %v4035
        %v4066 = vpack.c.b16 %v4038, %v4037
        %v4067 = vpack.c.b16 %v4040, %v4039
        %v4068 = vpack.c.b16 %v4042, %v4041
        %v4069 = vpack.c.b16 %v4044, %v4043
        %v4070 = vpack.c.b16 %v4046, %v4045
        %v4071 = vpack.c.b16 %v4048, %v4047
        %v4072 = vpack.c.b16 %v4050, %v4049
        %v4073 = vpack.c.b16 %v4052, %v4051
        %v4074 = vpack.c.b16 %v4054, %v4053
        %v4075 = vpack.c.b16 %v4056, %v4055
        %v4076 = vpack.c.b16 %v4058, %v4057
        %v4077 = vpack.c.b16 %v4060, %v4059
        %v4078 = vpack.c.b16 %v4062, %v4061
        %v4111 = vunpack.c.l.b16 %v4015
        %v4112 = vunpack.c.l.b16 %v4016
        %v4113 = vunpack.c.l.b16 %v4017
        %v4114 = vunpack.c.l.b16 %v4018
        %v4115 = vunpack.c.l.b16 %v4019
        %v4116 = vunpack.c.l.b16 %v4020
        %v4117 = vunpack.c.l.b16 %v4021
        %v4118 = vunpack.c.l.b16 %v4022
        %v4119 = vunpack.c.l.b16 %v4023
        %v4120 = vunpack.c.l.b16 %v4024
        %v4121 = vunpack.c.l.b16 %v4025
        %v4122 = vunpack.c.l.b16 %v4026
        %v4123 = vunpack.c.l.b16 %v4027
        %v4124 = vunpack.c.l.b16 %v4028
        %v4125 = vunpack.c.l.b16 %v4029
        %v4126 = vunpack.c.l.b16 %v4030
        %v4127 = vpack.c.b16 %v4112, %v4111
        %v4128 = vpack.c.b16 %v4114, %v4113
        %v4129 = vpack.c.b16 %v4116, %v4115
        %v4130 = vpack.c.b16 %v4118, %v4117
        %v4131 = vpack.c.b16 %v4120, %v4119
        %v4132 = vpack.c.b16 %v4122, %v4121
        %v4133 = vpack.c.b16 %v4124, %v4123
        %v4134 = vpack.c.b16 %v4126, %v4125
        %4143 = vmatprep.subr.bf16.mxu0 0
        %4144 = vmatpush1.bf16.msra.mxu0 %v4134
        %4145 = vmatprep.subr.bf16.mxu0 0
        %4146 = vmatpush1.bf16.msra.mxu0 %v4133
        %4147 = vmatprep.subr.bf16.mxu0 0
        %4148 = vmatpush1.bf16.msra.mxu0 %v4132
        %4149 = vmatprep.subr.bf16.mxu0 0
        %4150 = vmatpush1.bf16.msra.mxu0 %v4131
        %4151 = vmatprep.subr.bf16.mxu0 0
        %4152 = vmatpush1.bf16.msra.mxu0 %v4130
        %4153 = vmatprep.subr.bf16.mxu0 0
        %4154 = vmatpush1.bf16.msra.mxu0 %v4129
        %4155 = vmatprep.subr.bf16.mxu0 0
        %4156 = vmatpush1.bf16.msra.mxu0 %v4128
        %4157 = vmatprep.subr.bf16.mxu0 0
        %4158 = vmatpush1.bf16.msra.mxu0 %v4127
        %4159 = vmatprep.subr.bf16.mxu0 0
        %4160 = vmatpush2.bf16.msra.mxu0 0
        %4161 = vmatprep.subr.bf16.mxu0 0
        %4162 = vmatpush2.bf16.msra.mxu0 0
        %4163 = vmatprep.subr.bf16.mxu0 0
        %4164 = vmatpush2.bf16.msra.mxu0 0
        %4165 = vmatprep.subr.bf16.mxu0 0
        %4166 = vmatpush2.bf16.msra.mxu0 0
        %4167 = vmatprep.subr.bf16.mxu0 0
        %4168 = vmatpush2.bf16.msra.mxu0 0
        %4169 = vmatprep.subr.bf16.mxu0 0
        %4170 = vmatpush2.bf16.msra.mxu0 0
        %4171 = vmatprep.subr.bf16.mxu0 0
        %4172 = vmatpush2.bf16.msra.mxu0 0
        %4173 = vmatprep.subr.bf16.mxu0 0
        %4174 = vmatpush2.bf16.msra.mxu0 0
        %4175 = vmatprep.mubr.bf16.mxu0 0
        %4176 = vmatmul.mubr.bf16.gmra.mxu0 %v4063
        %v4177 = vpop.f32.mrf.mxu0
        %v4178 = vadd.f32 0.0, %v4177
        %v4179 = vpop.f32.mrf.mxu0
        %v4180 = vpop.f32.mrf.mxu0
        %v4181 = vadd.f32 0.0, %v4180
        %v4182 = vpop.f32.mrf.mxu0
        %4183 = vmatprep.mubr.bf16.mxu0 0
        %4184 = vmatmul.mubr.bf16.gmra.mxu0 %v4064
        %v4185 = vpop.f32.mrf.mxu0
        %v4186 = vadd.f32 0.0, %v4185
        %v4187 = vpop.f32.mrf.mxu0
        %v4188 = vpop.f32.mrf.mxu0
        %v4189 = vadd.f32 0.0, %v4188
        %v4190 = vpop.f32.mrf.mxu0
        %4191 = vmatprep.mubr.bf16.mxu0 0
        %4192 = vmatmul.mubr.bf16.gmra.mxu0 %v4065
        %v4193 = vpop.f32.mrf.mxu0
        %v4194 = vadd.f32 0.0, %v4193
        %v4195 = vpop.f32.mrf.mxu0
        %v4196 = vpop.f32.mrf.mxu0
        %v4197 = vadd.f32 0.0, %v4196
        %v4198 = vpop.f32.mrf.mxu0
        %4199 = vmatprep.mubr.bf16.mxu0 0
        %4200 = vmatmul.mubr.bf16.gmra.mxu0 %v4066
        %v4201 = vpop.f32.mrf.mxu0
        %v4202 = vadd.f32 0.0, %v4201
        %v4203 = vpop.f32.mrf.mxu0
        %v4204 = vpop.f32.mrf.mxu0
        %v4205 = vadd.f32 0.0, %v4204
        %v4206 = vpop.f32.mrf.mxu0
        %4207 = vmatprep.mubr.bf16.mxu0 0
        %4208 = vmatmul.mubr.bf16.gmra.mxu0 %v4067
        %v4209 = vpop.f32.mrf.mxu0
        %v4210 = vadd.f32 0.0, %v4209
        %v4211 = vpop.f32.mrf.mxu0
        %v4212 = vpop.f32.mrf.mxu0
        %v4213 = vadd.f32 0.0, %v4212
        %v4214 = vpop.f32.mrf.mxu0
        %4215 = vmatprep.mubr.bf16.mxu0 0
        %4216 = vmatmul.mubr.bf16.gmra.mxu0 %v4068
        %v4217 = vpop.f32.mrf.mxu0
        %v4218 = vadd.f32 0.0, %v4217
        %v4219 = vpop.f32.mrf.mxu0
        %v4220 = vpop.f32.mrf.mxu0
        %v4221 = vadd.f32 0.0, %v4220
        %v4222 = vpop.f32.mrf.mxu0
        %4223 = vmatprep.mubr.bf16.mxu0 0
        %4224 = vmatmul.mubr.bf16.gmra.mxu0 %v4069
        %v4225 = vpop.f32.mrf.mxu0
        %v4226 = vadd.f32 0.0, %v4225
        %v4227 = vpop.f32.mrf.mxu0
        %v4228 = vpop.f32.mrf.mxu0
        %v4229 = vadd.f32 0.0, %v4228
        %v4230 = vpop.f32.mrf.mxu0
        %4231 = vmatprep.mubr.bf16.mxu0 0
        %4232 = vmatmul.mubr.bf16.gmra.mxu0 %v4070
        %v4233 = vpop.f32.mrf.mxu0
        %v4234 = vadd.f32 0.0, %v4233
        %v4235 = vpop.f32.mrf.mxu0
        %v4236 = vpop.f32.mrf.mxu0
        %v4237 = vadd.f32 0.0, %v4236
        %v4238 = vpop.f32.mrf.mxu0
        %4239 = vmatprep.mubr.bf16.mxu0 0
        %4240 = vmatmul.mubr.bf16.gmra.mxu0 %v4071
        %v4241 = vpop.f32.mrf.mxu0
        %v4242 = vadd.f32 0.0, %v4241
        %v4243 = vpop.f32.mrf.mxu0
        %v4244 = vpop.f32.mrf.mxu0
        %v4245 = vadd.f32 0.0, %v4244
        %v4246 = vpop.f32.mrf.mxu0
        %4247 = vmatprep.mubr.bf16.mxu0 0
        %4248 = vmatmul.mubr.bf16.gmra.mxu0 %v4072
        %v4249 = vpop.f32.mrf.mxu0
        %v4250 = vadd.f32 0.0, %v4249
        %v4251 = vpop.f32.mrf.mxu0
        %v4252 = vpop.f32.mrf.mxu0
        %v4253 = vadd.f32 0.0, %v4252
        %v4254 = vpop.f32.mrf.mxu0
        %4255 = vmatprep.mubr.bf16.mxu0 0
        %4256 = vmatmul.mubr.bf16.gmra.mxu0 %v4073
        %v4257 = vpop.f32.mrf.mxu0
        %v4258 = vadd.f32 0.0, %v4257
        %v4259 = vpop.f32.mrf.mxu0
        %v4260 = vpop.f32.mrf.mxu0
        %v4261 = vadd.f32 0.0, %v4260
        %v4262 = vpop.f32.mrf.mxu0
        %4263 = vmatprep.mubr.bf16.mxu0 0
        %4264 = vmatmul.mubr.bf16.gmra.mxu0 %v4074
        %v4265 = vpop.f32.mrf.mxu0
        %v4266 = vadd.f32 0.0, %v4265
        %v4267 = vpop.f32.mrf.mxu0
        %v4268 = vpop.f32.mrf.mxu0
        %v4269 = vadd.f32 0.0, %v4268
        %v4270 = vpop.f32.mrf.mxu0
        %4271 = vmatprep.mubr.bf16.mxu0 0
        %4272 = vmatmul.mubr.bf16.gmra.mxu0 %v4075
        %v4273 = vpop.f32.mrf.mxu0
        %v4274 = vadd.f32 0.0, %v4273
        %v4275 = vpop.f32.mrf.mxu0
        %v4276 = vpop.f32.mrf.mxu0
        %v4277 = vadd.f32 0.0, %v4276
        %v4278 = vpop.f32.mrf.mxu0
        %4279 = vmatprep.mubr.bf16.mxu0 0
        %4280 = vmatmul.mubr.bf16.gmra.mxu0 %v4076
        %v4281 = vpop.f32.mrf.mxu0
        %v4282 = vadd.f32 0.0, %v4281
        %v4283 = vpop.f32.mrf.mxu0
        %v4284 = vpop.f32.mrf.mxu0
        %v4285 = vadd.f32 0.0, %v4284
        %v4286 = vpop.f32.mrf.mxu0
        %4287 = vmatprep.mubr.bf16.mxu0 0
        %4288 = vmatmul.mubr.bf16.gmra.mxu0 %v4077
        %v4289 = vpop.f32.mrf.mxu0
        %v4290 = vadd.f32 0.0, %v4289
        %v4291 = vpop.f32.mrf.mxu0
        %v4292 = vpop.f32.mrf.mxu0
        %v4293 = vadd.f32 0.0, %v4292
        %v4294 = vpop.f32.mrf.mxu0
        %4295 = vmatprep.mubr.bf16.mxu0 0
        %4296 = vmatmul.mubr.bf16.gmra.mxu0 %v4078
        %v4297 = vpop.f32.mrf.mxu0
        %v4298 = vadd.f32 0.0, %v4297
        %v4299 = vpop.f32.mrf.mxu0
        %v4300 = vpop.f32.mrf.mxu0
        %v4301 = vadd.f32 0.0, %v4300
        %v4302 = vpop.f32.mrf.mxu0
        %4303 = vdwg.mxu0
        %v4304 = vadd.f32 %v3806, %v4178
        %v4305 = vadd.f32 %v3807, %v4181
        %v4306 = vadd.f32 %v3808, %v4186
        %v4307 = vadd.f32 %v3809, %v4189
        %v4308 = vadd.f32 %v3810, %v4194
        %v4309 = vadd.f32 %v3811, %v4197
        %v4310 = vadd.f32 %v3812, %v4202
        %v4311 = vadd.f32 %v3813, %v4205
        %v4312 = vadd.f32 %v3814, %v4210
        %v4313 = vadd.f32 %v3815, %v4213
        %v4314 = vadd.f32 %v3816, %v4218
        %v4315 = vadd.f32 %v3817, %v4221
        %v4316 = vadd.f32 %v3818, %v4226
        %v4317 = vadd.f32 %v3819, %v4229
        %v4318 = vadd.f32 %v3820, %v4234
        %v4319 = vadd.f32 %v3821, %v4237
        %v4320 = vadd.f32 %v3822, %v4242
        %v4321 = vadd.f32 %v3823, %v4245
        %v4322 = vadd.f32 %v3824, %v4250
        %v4323 = vadd.f32 %v3825, %v4253
        %v4324 = vadd.f32 %v3826, %v4258
        %v4325 = vadd.f32 %v3827, %v4261
        %v4326 = vadd.f32 %v3828, %v4266
        %v4327 = vadd.f32 %v3829, %v4269
        %v4328 = vadd.f32 %v3830, %v4274
        %v4329 = vadd.f32 %v3831, %v4277
        %v4330 = vadd.f32 %v3832, %v4282
        %v4331 = vadd.f32 %v3833, %v4285
        %v4332 = vadd.f32 %v3834, %v4290
        %v4333 = vadd.f32 %v3835, %v4293
        %v4334 = vadd.f32 %v3836, %v4298
        %v4335 = vadd.f32 %v3837, %v4301
        %s4336 = scalar_lea.vmem [#allocation2], 24
        %v4337 = vld [vmem:[%s4336] sm:$0xf]
        %v4338 = vld [vmem:[%s4336 + $0x4] sm:$0xf]
        %v4339 = vld [vmem:[%s4336 + $0xc] sm:$0xf]
        %v4340 = vld [vmem:[%s4336 + $0x10] sm:$0xf]
        %v4341 = vld [vmem:[%s4336 + $0x18] sm:$0xf]
        %v4342 = vld [vmem:[%s4336 + $0x1c] sm:$0xf]
        %v4343 = vld [vmem:[%s4336 + $0x24] sm:$0xf]
        %v4344 = vld [vmem:[%s4336 + $0x28] sm:$0xf]
        %v4345 = vld [vmem:[%s4336 + $0x30] sm:$0xf]
        %v4346 = vld [vmem:[%s4336 + $0x34] sm:$0xf]
        %v4347 = vld [vmem:[%s4336 + $0x3c] sm:$0xf]
        %v4348 = vld [vmem:[%s4336 + $0x40] sm:$0xf]
        %v4349 = vld [vmem:[%s4336 + $0x48] sm:$0xf]
        %v4350 = vld [vmem:[%s4336 + $0x4c] sm:$0xf]
        %v4351 = vld [vmem:[%s4336 + $0x54] sm:$0xf]
        %v4352 = vld [vmem:[%s4336 + $0x58] sm:$0xf]
        %v4353 = vld [vmem:[%s4336 + $0x60] sm:$0xf]
        %v4354 = vld [vmem:[%s4336 + $0x64] sm:$0xf]
        %v4355 = vld [vmem:[%s4336 + $0x6c] sm:$0xf]
        %v4356 = vld [vmem:[%s4336 + $0x70] sm:$0xf]
        %v4357 = vld [vmem:[%s4336 + $0x78] sm:$0xf]
        %v4358 = vld [vmem:[%s4336 + $0x7c] sm:$0xf]
        %v4359 = vld [vmem:[%s4336 + $0x84] sm:$0xf]
        %v4360 = vld [vmem:[%s4336 + $0x88] sm:$0xf]
        %v4361 = vld [vmem:[%s4336 + $0x90] sm:$0xf]
        %v4362 = vld [vmem:[%s4336 + $0x94] sm:$0xf]
        %v4363 = vld [vmem:[%s4336 + $0x9c] sm:$0xf]
        %v4364 = vld [vmem:[%s4336 + $0xa0] sm:$0xf]
        %v4365 = vld [vmem:[%s4336 + $0xa8] sm:$0xf]
        %v4366 = vld [vmem:[%s4336 + $0xac] sm:$0xf]
        %v4367 = vld [vmem:[%s4336 + $0xb4] sm:$0xf]
        %v4368 = vld [vmem:[%s4336 + $0xb8] sm:$0xf]
        %s4369 = scalar_lea.vmem [#allocation8], 384
        %v4370 = vld [vmem:[%s4369] sm:$0xf]
        %v4371 = vld [vmem:[%s4369 + $0x4] sm:$0xf]
        %v4372 = vld [vmem:[%s4369 + $0x8] sm:$0xf]
        %v4373 = vld [vmem:[%s4369 + $0xc] sm:$0xf]
        %v4374 = vld [vmem:[%s4369 + $0x10] sm:$0xf]
        %v4375 = vld [vmem:[%s4369 + $0x14] sm:$0xf]
        %v4376 = vld [vmem:[%s4369 + $0x18] sm:$0xf]
        %v4377 = vld [vmem:[%s4369 + $0x1c] sm:$0xf]
        %v4378 = vld [vmem:[%s4369 + $0x20] sm:$0xf]
        %v4379 = vld [vmem:[%s4369 + $0x24] sm:$0xf]
        %v4380 = vld [vmem:[%s4369 + $0x28] sm:$0xf]
        %v4381 = vld [vmem:[%s4369 + $0x2c] sm:$0xf]
        %v4382 = vld [vmem:[%s4369 + $0x30] sm:$0xf]
        %v4383 = vld [vmem:[%s4369 + $0x34] sm:$0xf]
        %v4384 = vld [vmem:[%s4369 + $0x38] sm:$0xf]
        %v4385 = vld [vmem:[%s4369 + $0x3c] sm:$0xf]
        %v4418 = vunpack.c.l.b16 %v4337
        %v4419 = vunpack.c.l.b16 %v4338
        %v4420 = vunpack.c.l.b16 %v4339
        %v4421 = vunpack.c.l.b16 %v4340
        %v4422 = vunpack.c.l.b16 %v4341
        %v4423 = vunpack.c.l.b16 %v4342
        %v4424 = vunpack.c.l.b16 %v4343
        %v4425 = vunpack.c.l.b16 %v4344
        %v4426 = vunpack.c.l.b16 %v4345
        %v4427 = vunpack.c.l.b16 %v4346
        %v4428 = vunpack.c.l.b16 %v4347
        %v4429 = vunpack.c.l.b16 %v4348
        %v4430 = vunpack.c.l.b16 %v4349
        %v4431 = vunpack.c.l.b16 %v4350
        %v4432 = vunpack.c.l.b16 %v4351
        %v4433 = vunpack.c.l.b16 %v4352
        %v4434 = vunpack.c.l.b16 %v4353
        %v4435 = vunpack.c.l.b16 %v4354
        %v4436 = vunpack.c.l.b16 %v4355
        %v4437 = vunpack.c.l.b16 %v4356
        %v4438 = vunpack.c.l.b16 %v4357
        %v4439 = vunpack.c.l.b16 %v4358
        %v4440 = vunpack.c.l.b16 %v4359
        %v4441 = vunpack.c.l.b16 %v4360
        %v4442 = vunpack.c.l.b16 %v4361
        %v4443 = vunpack.c.l.b16 %v4362
        %v4444 = vunpack.c.l.b16 %v4363
        %v4445 = vunpack.c.l.b16 %v4364
        %v4446 = vunpack.c.l.b16 %v4365
        %v4447 = vunpack.c.l.b16 %v4366
        %v4448 = vunpack.c.l.b16 %v4367
        %v4449 = vunpack.c.l.b16 %v4368
        %v4450 = vpack.c.b16 %v4419, %v4418
        %v4451 = vpack.c.b16 %v4421, %v4420
        %v4452 = vpack.c.b16 %v4423, %v4422
        %v4453 = vpack.c.b16 %v4425, %v4424
        %v4454 = vpack.c.b16 %v4427, %v4426
        %v4455 = vpack.c.b16 %v4429, %v4428
        %v4456 = vpack.c.b16 %v4431, %v4430
        %v4457 = vpack.c.b16 %v4433, %v4432
        %v4458 = vpack.c.b16 %v4435, %v4434
        %v4459 = vpack.c.b16 %v4437, %v4436
        %v4460 = vpack.c.b16 %v4439, %v4438
        %v4461 = vpack.c.b16 %v4441, %v4440
        %v4462 = vpack.c.b16 %v4443, %v4442
        %v4463 = vpack.c.b16 %v4445, %v4444
        %v4464 = vpack.c.b16 %v4447, %v4446
        %v4465 = vpack.c.b16 %v4449, %v4448
        %v4498 = vunpack.c.l.b16 %v4370
        %v4499 = vunpack.c.l.b16 %v4371
        %v4500 = vunpack.c.l.b16 %v4372
        %v4501 = vunpack.c.l.b16 %v4373
        %v4502 = vunpack.c.l.b16 %v4374
        %v4503 = vunpack.c.l.b16 %v4375
        %v4504 = vunpack.c.l.b16 %v4376
        %v4505 = vunpack.c.l.b16 %v4377
        %v4506 = vunpack.c.l.b16 %v4378
        %v4507 = vunpack.c.l.b16 %v4379
        %v4508 = vunpack.c.l.b16 %v4380
        %v4509 = vunpack.c.l.b16 %v4381
        %v4510 = vunpack.c.l.b16 %v4382
        %v4511 = vunpack.c.l.b16 %v4383
        %v4512 = vunpack.c.l.b16 %v4384
        %v4513 = vunpack.c.l.b16 %v4385
        %v4514 = vpack.c.b16 %v4499, %v4498
        %v4515 = vpack.c.b16 %v4501, %v4500
        %v4516 = vpack.c.b16 %v4503, %v4502
        %v4517 = vpack.c.b16 %v4505, %v4504
        %v4518 = vpack.c.b16 %v4507, %v4506
        %v4519 = vpack.c.b16 %v4509, %v4508
        %v4520 = vpack.c.b16 %v4511, %v4510
        %v4521 = vpack.c.b16 %v4513, %v4512
        %4530 = vmatprep.subr.bf16.mxu0 0
        %4531 = vmatpush1.bf16.msra.mxu0 %v4521
        %4532 = vmatprep.subr.bf16.mxu0 0
        %4533 = vmatpush1.bf16.msra.mxu0 %v4520
        %4534 = vmatprep.subr.bf16.mxu0 0
        %4535 = vmatpush1.bf16.msra.mxu0 %v4519
        %4536 = vmatprep.subr.bf16.mxu0 0
        %4537 = vmatpush1.bf16.msra.mxu0 %v4518
        %4538 = vmatprep.subr.bf16.mxu0 0
        %4539 = vmatpush1.bf16.msra.mxu0 %v4517
        %4540 = vmatprep.subr.bf16.mxu0 0
        %4541 = vmatpush1.bf16.msra.mxu0 %v4516
        %4542 = vmatprep.subr.bf16.mxu0 0
        %4543 = vmatpush1.bf16.msra.mxu0 %v4515
        %4544 = vmatprep.subr.bf16.mxu0 0
        %4545 = vmatpush1.bf16.msra.mxu0 %v4514
        %4546 = vmatprep.subr.bf16.mxu0 0
        %4547 = vmatpush2.bf16.msra.mxu0 0
        %4548 = vmatprep.subr.bf16.mxu0 0
        %4549 = vmatpush2.bf16.msra.mxu0 0
        %4550 = vmatprep.subr.bf16.mxu0 0
        %4551 = vmatpush2.bf16.msra.mxu0 0
        %4552 = vmatprep.subr.bf16.mxu0 0
        %4553 = vmatpush2.bf16.msra.mxu0 0
        %4554 = vmatprep.subr.bf16.mxu0 0
        %4555 = vmatpush2.bf16.msra.mxu0 0
        %4556 = vmatprep.subr.bf16.mxu0 0
        %4557 = vmatpush2.bf16.msra.mxu0 0
        %4558 = vmatprep.subr.bf16.mxu0 0
        %4559 = vmatpush2.bf16.msra.mxu0 0
        %4560 = vmatprep.subr.bf16.mxu0 0
        %4561 = vmatpush2.bf16.msra.mxu0 0
        %4562 = vmatprep.mubr.bf16.mxu0 0
        %4563 = vmatmul.mubr.bf16.gmra.mxu0 %v4450
        %v4564 = vpop.f32.mrf.mxu0
        %v4565 = vadd.f32 0.0, %v4564
        %v4566 = vpop.f32.mrf.mxu0
        %v4567 = vpop.f32.mrf.mxu0
        %v4568 = vadd.f32 0.0, %v4567
        %v4569 = vpop.f32.mrf.mxu0
        %4570 = vmatprep.mubr.bf16.mxu0 0
        %4571 = vmatmul.mubr.bf16.gmra.mxu0 %v4451
        %v4572 = vpop.f32.mrf.mxu0
        %v4573 = vadd.f32 0.0, %v4572
        %v4574 = vpop.f32.mrf.mxu0
        %v4575 = vpop.f32.mrf.mxu0
        %v4576 = vadd.f32 0.0, %v4575
        %v4577 = vpop.f32.mrf.mxu0
        %4578 = vmatprep.mubr.bf16.mxu0 0
        %4579 = vmatmul.mubr.bf16.gmra.mxu0 %v4452
        %v4580 = vpop.f32.mrf.mxu0
        %v4581 = vadd.f32 0.0, %v4580
        %v4582 = vpop.f32.mrf.mxu0
        %v4583 = vpop.f32.mrf.mxu0
        %v4584 = vadd.f32 0.0, %v4583
        %v4585 = vpop.f32.mrf.mxu0
        %4586 = vmatprep.mubr.bf16.mxu0 0
        %4587 = vmatmul.mubr.bf16.gmra.mxu0 %v4453
        %v4588 = vpop.f32.mrf.mxu0
        %v4589 = vadd.f32 0.0, %v4588
        %v4590 = vpop.f32.mrf.mxu0
        %v4591 = vpop.f32.mrf.mxu0
        %v4592 = vadd.f32 0.0, %v4591
        %v4593 = vpop.f32.mrf.mxu0
        %4594 = vmatprep.mubr.bf16.mxu0 0
        %4595 = vmatmul.mubr.bf16.gmra.mxu0 %v4454
        %v4596 = vpop.f32.mrf.mxu0
        %v4597 = vadd.f32 0.0, %v4596
        %v4598 = vpop.f32.mrf.mxu0
        %v4599 = vpop.f32.mrf.mxu0
        %v4600 = vadd.f32 0.0, %v4599
        %v4601 = vpop.f32.mrf.mxu0
        %4602 = vmatprep.mubr.bf16.mxu0 0
        %4603 = vmatmul.mubr.bf16.gmra.mxu0 %v4455
        %v4604 = vpop.f32.mrf.mxu0
        %v4605 = vadd.f32 0.0, %v4604
        %v4606 = vpop.f32.mrf.mxu0
        %v4607 = vpop.f32.mrf.mxu0
        %v4608 = vadd.f32 0.0, %v4607
        %v4609 = vpop.f32.mrf.mxu0
        %4610 = vmatprep.mubr.bf16.mxu0 0
        %4611 = vmatmul.mubr.bf16.gmra.mxu0 %v4456
        %v4612 = vpop.f32.mrf.mxu0
        %v4613 = vadd.f32 0.0, %v4612
        %v4614 = vpop.f32.mrf.mxu0
        %v4615 = vpop.f32.mrf.mxu0
        %v4616 = vadd.f32 0.0, %v4615
        %v4617 = vpop.f32.mrf.mxu0
        %4618 = vmatprep.mubr.bf16.mxu0 0
        %4619 = vmatmul.mubr.bf16.gmra.mxu0 %v4457
        %v4620 = vpop.f32.mrf.mxu0
        %v4621 = vadd.f32 0.0, %v4620
        %v4622 = vpop.f32.mrf.mxu0
        %v4623 = vpop.f32.mrf.mxu0
        %v4624 = vadd.f32 0.0, %v4623
        %v4625 = vpop.f32.mrf.mxu0
        %4626 = vmatprep.mubr.bf16.mxu0 0
        %4627 = vmatmul.mubr.bf16.gmra.mxu0 %v4458
        %v4628 = vpop.f32.mrf.mxu0
        %v4629 = vadd.f32 0.0, %v4628
        %v4630 = vpop.f32.mrf.mxu0
        %v4631 = vpop.f32.mrf.mxu0
        %v4632 = vadd.f32 0.0, %v4631
        %v4633 = vpop.f32.mrf.mxu0
        %4634 = vmatprep.mubr.bf16.mxu0 0
        %4635 = vmatmul.mubr.bf16.gmra.mxu0 %v4459
        %v4636 = vpop.f32.mrf.mxu0
        %v4637 = vadd.f32 0.0, %v4636
        %v4638 = vpop.f32.mrf.mxu0
        %v4639 = vpop.f32.mrf.mxu0
        %v4640 = vadd.f32 0.0, %v4639
        %v4641 = vpop.f32.mrf.mxu0
        %4642 = vmatprep.mubr.bf16.mxu0 0
        %4643 = vmatmul.mubr.bf16.gmra.mxu0 %v4460
        %v4644 = vpop.f32.mrf.mxu0
        %v4645 = vadd.f32 0.0, %v4644
        %v4646 = vpop.f32.mrf.mxu0
        %v4647 = vpop.f32.mrf.mxu0
        %v4648 = vadd.f32 0.0, %v4647
        %v4649 = vpop.f32.mrf.mxu0
        %4650 = vmatprep.mubr.bf16.mxu0 0
        %4651 = vmatmul.mubr.bf16.gmra.mxu0 %v4461
        %v4652 = vpop.f32.mrf.mxu0
        %v4653 = vadd.f32 0.0, %v4652
        %v4654 = vpop.f32.mrf.mxu0
        %v4655 = vpop.f32.mrf.mxu0
        %v4656 = vadd.f32 0.0, %v4655
        %v4657 = vpop.f32.mrf.mxu0
        %4658 = vmatprep.mubr.bf16.mxu0 0
        %4659 = vmatmul.mubr.bf16.gmra.mxu0 %v4462
        %v4660 = vpop.f32.mrf.mxu0
        %v4661 = vadd.f32 0.0, %v4660
        %v4662 = vpop.f32.mrf.mxu0
        %v4663 = vpop.f32.mrf.mxu0
        %v4664 = vadd.f32 0.0, %v4663
        %v4665 = vpop.f32.mrf.mxu0
        %4666 = vmatprep.mubr.bf16.mxu0 0
        %4667 = vmatmul.mubr.bf16.gmra.mxu0 %v4463
        %v4668 = vpop.f32.mrf.mxu0
        %v4669 = vadd.f32 0.0, %v4668
        %v4670 = vpop.f32.mrf.mxu0
        %v4671 = vpop.f32.mrf.mxu0
        %v4672 = vadd.f32 0.0, %v4671
        %v4673 = vpop.f32.mrf.mxu0
        %4674 = vmatprep.mubr.bf16.mxu0 0
        %4675 = vmatmul.mubr.bf16.gmra.mxu0 %v4464
        %v4676 = vpop.f32.mrf.mxu0
        %v4677 = vadd.f32 0.0, %v4676
        %v4678 = vpop.f32.mrf.mxu0
        %v4679 = vpop.f32.mrf.mxu0
        %v4680 = vadd.f32 0.0, %v4679
        %v4681 = vpop.f32.mrf.mxu0
        %4682 = vmatprep.mubr.bf16.mxu0 0
        %4683 = vmatmul.mubr.bf16.gmra.mxu0 %v4465
        %v4684 = vpop.f32.mrf.mxu0
        %v4685 = vadd.f32 0.0, %v4684
        %v4686 = vpop.f32.mrf.mxu0
        %v4687 = vpop.f32.mrf.mxu0
        %v4688 = vadd.f32 0.0, %v4687
        %v4689 = vpop.f32.mrf.mxu0
        %4690 = vdwg.mxu0
        %v4691 = vadd.f32 %v4304, %v4565
        %v4692 = vadd.f32 %v4305, %v4568
        %v4693 = vadd.f32 %v4306, %v4573
        %v4694 = vadd.f32 %v4307, %v4576
        %v4695 = vadd.f32 %v4308, %v4581
        %v4696 = vadd.f32 %v4309, %v4584
        %v4697 = vadd.f32 %v4310, %v4589
        %v4698 = vadd.f32 %v4311, %v4592
        %v4699 = vadd.f32 %v4312, %v4597
        %v4700 = vadd.f32 %v4313, %v4600
        %v4701 = vadd.f32 %v4314, %v4605
        %v4702 = vadd.f32 %v4315, %v4608
        %v4703 = vadd.f32 %v4316, %v4613
        %v4704 = vadd.f32 %v4317, %v4616
        %v4705 = vadd.f32 %v4318, %v4621
        %v4706 = vadd.f32 %v4319, %v4624
        %v4707 = vadd.f32 %v4320, %v4629
        %v4708 = vadd.f32 %v4321, %v4632
        %v4709 = vadd.f32 %v4322, %v4637
        %v4710 = vadd.f32 %v4323, %v4640
        %v4711 = vadd.f32 %v4324, %v4645
        %v4712 = vadd.f32 %v4325, %v4648
        %v4713 = vadd.f32 %v4326, %v4653
        %v4714 = vadd.f32 %v4327, %v4656
        %v4715 = vadd.f32 %v4328, %v4661
        %v4716 = vadd.f32 %v4329, %v4664
        %v4717 = vadd.f32 %v4330, %v4669
        %v4718 = vadd.f32 %v4331, %v4672
        %v4719 = vadd.f32 %v4332, %v4677
        %v4720 = vadd.f32 %v4333, %v4680
        %v4721 = vadd.f32 %v4334, %v4685
        %v4722 = vadd.f32 %v4335, %v4688
        %v4723 = vld [vmem:[%s4336] sm:$0xf]
        %v4724 = vld [vmem:[%s4336 + $0x4] sm:$0xf]
        %v4725 = vld [vmem:[%s4336 + $0x8] sm:$0x1]
        %v4726 = vld [vmem:[%s4336 + $0xc] sm:$0xf]
        %v4727 = vld [vmem:[%s4336 + $0x10] sm:$0xf]
        %v4728 = vld [vmem:[%s4336 + $0x14] sm:$0x1]
        %v4729 = vld [vmem:[%s4336 + $0x18] sm:$0xf]
        %v4730 = vld [vmem:[%s4336 + $0x1c] sm:$0xf]
        %v4731 = vld [vmem:[%s4336 + $0x20] sm:$0x1]
        %v4732 = vld [vmem:[%s4336 + $0x24] sm:$0xf]
        %v4733 = vld [vmem:[%s4336 + $0x28] sm:$0xf]
        %v4734 = vld [vmem:[%s4336 + $0x2c] sm:$0x1]
        %v4735 = vld [vmem:[%s4336 + $0x30] sm:$0xf]
        %v4736 = vld [vmem:[%s4336 + $0x34] sm:$0xf]
        %v4737 = vld [vmem:[%s4336 + $0x38] sm:$0x1]
        %v4738 = vld [vmem:[%s4336 + $0x3c] sm:$0xf]
        %v4739 = vld [vmem:[%s4336 + $0x40] sm:$0xf]
        %v4740 = vld [vmem:[%s4336 + $0x44] sm:$0x1]
        %v4741 = vld [vmem:[%s4336 + $0x48] sm:$0xf]
        %v4742 = vld [vmem:[%s4336 + $0x4c] sm:$0xf]
        %v4743 = vld [vmem:[%s4336 + $0x50] sm:$0x1]
        %v4744 = vld [vmem:[%s4336 + $0x54] sm:$0xf]
        %v4745 = vld [vmem:[%s4336 + $0x58] sm:$0xf]
        %v4746 = vld [vmem:[%s4336 + $0x5c] sm:$0x1]
        %v4747 = vld [vmem:[%s4336 + $0x60] sm:$0xf]
        %v4748 = vld [vmem:[%s4336 + $0x64] sm:$0xf]
        %v4749 = vld [vmem:[%s4336 + $0x68] sm:$0x1]
        %v4750 = vld [vmem:[%s4336 + $0x6c] sm:$0xf]
        %v4751 = vld [vmem:[%s4336 + $0x70] sm:$0xf]
        %v4752 = vld [vmem:[%s4336 + $0x74] sm:$0x1]
        %v4753 = vld [vmem:[%s4336 + $0x78] sm:$0xf]
        %v4754 = vld [vmem:[%s4336 + $0x7c] sm:$0xf]
        %v4755 = vld [vmem:[%s4336 + $0x80] sm:$0x1]
        %v4756 = vld [vmem:[%s4336 + $0x84] sm:$0xf]
        %v4757 = vld [vmem:[%s4336 + $0x88] sm:$0xf]
        %v4758 = vld [vmem:[%s4336 + $0x8c] sm:$0x1]
        %v4759 = vld [vmem:[%s4336 + $0x90] sm:$0xf]
        %v4760 = vld [vmem:[%s4336 + $0x94] sm:$0xf]
        %v4761 = vld [vmem:[%s4336 + $0x98] sm:$0x1]
        %v4762 = vld [vmem:[%s4336 + $0x9c] sm:$0xf]
        %v4763 = vld [vmem:[%s4336 + $0xa0] sm:$0xf]
        %v4764 = vld [vmem:[%s4336 + $0xa4] sm:$0x1]
        %v4765 = vld [vmem:[%s4336 + $0xa8] sm:$0xf]
        %v4766 = vld [vmem:[%s4336 + $0xac] sm:$0xf]
        %v4767 = vld [vmem:[%s4336 + $0xb0] sm:$0x1]
        %v4768 = vld [vmem:[%s4336 + $0xb4] sm:$0xf]
        %v4769 = vld [vmem:[%s4336 + $0xb8] sm:$0xf]
        %v4770 = vld [vmem:[%s4336 + $0xbc] sm:$0x1]
        %v4772 = vshrl.u32 %v4723, 16
        %v4774 = vrot.slane %v4772, 4
        %v4775 = vshll.u32 %v4723, 16
        %v4777 = vrot.slane %v4775, 5
        %v4778 = vor.u32 %v4774, %v4777
        %v4779 = vrot.slane %v4778, 4
        %v4781 = vshll.u32 %v4724, 16
        %v4783 = vrot.slane %v4781, 5
        %v4784 = vsel %vm1232, %v4779, %v4783
        %v4785 = vshrl.u32 %v4724, 16
        %v4787 = vrot.slane %v4785, 4
        %v4788 = vor.u32 %v4787, %v4783
        %v4789 = vrot.slane %v4788, 4
        %v4791 = vshll.u32 %v4725, 16
        %v4793 = vrot.slane %v4791, 5
        %v4794 = vsel %vm1232, %v4789, %v4793
        %v4796 = vshrl.u32 %v4726, 16
        %v4798 = vrot.slane %v4796, 4
        %v4799 = vshll.u32 %v4726, 16
        %v4801 = vrot.slane %v4799, 5
        %v4802 = vor.u32 %v4798, %v4801
        %v4803 = vrot.slane %v4802, 4
        %v4805 = vshll.u32 %v4727, 16
        %v4807 = vrot.slane %v4805, 5
        %v4808 = vsel %vm1232, %v4803, %v4807
        %v4809 = vshrl.u32 %v4727, 16
        %v4811 = vrot.slane %v4809, 4
        %v4812 = vor.u32 %v4811, %v4807
        %v4813 = vrot.slane %v4812, 4
        %v4815 = vshll.u32 %v4728, 16
        %v4817 = vrot.slane %v4815, 5
        %v4818 = vsel %vm1232, %v4813, %v4817
        %v4820 = vshrl.u32 %v4729, 16
        %v4822 = vrot.slane %v4820, 4
        %v4823 = vshll.u32 %v4729, 16
        %v4825 = vrot.slane %v4823, 5
        %v4826 = vor.u32 %v4822, %v4825
        %v4827 = vrot.slane %v4826, 4
        %v4829 = vshll.u32 %v4730, 16
        %v4831 = vrot.slane %v4829, 5
        %v4832 = vsel %vm1232, %v4827, %v4831
        %v4833 = vshrl.u32 %v4730, 16
        %v4835 = vrot.slane %v4833, 4
        %v4836 = vor.u32 %v4835, %v4831
        %v4837 = vrot.slane %v4836, 4
        %v4839 = vshll.u32 %v4731, 16
        %v4841 = vrot.slane %v4839, 5
        %v4842 = vsel %vm1232, %v4837, %v4841
        %v4844 = vshrl.u32 %v4732, 16
        %v4846 = vrot.slane %v4844, 4
        %v4847 = vshll.u32 %v4732, 16
        %v4849 = vrot.slane %v4847, 5
        %v4850 = vor.u32 %v4846, %v4849
        %v4851 = vrot.slane %v4850, 4
        %v4853 = vshll.u32 %v4733, 16
        %v4855 = vrot.slane %v4853, 5
        %v4856 = vsel %vm1232, %v4851, %v4855
        %v4857 = vshrl.u32 %v4733, 16
        %v4859 = vrot.slane %v4857, 4
        %v4860 = vor.u32 %v4859, %v4855
        %v4861 = vrot.slane %v4860, 4
        %v4863 = vshll.u32 %v4734, 16
        %v4865 = vrot.slane %v4863, 5
        %v4866 = vsel %vm1232, %v4861, %v4865
        %v4868 = vshrl.u32 %v4735, 16
        %v4870 = vrot.slane %v4868, 4
        %v4871 = vshll.u32 %v4735, 16
        %v4873 = vrot.slane %v4871, 5
        %v4874 = vor.u32 %v4870, %v4873
        %v4875 = vrot.slane %v4874, 4
        %v4877 = vshll.u32 %v4736, 16
        %v4879 = vrot.slane %v4877, 5
        %v4880 = vsel %vm1232, %v4875, %v4879
        %v4881 = vshrl.u32 %v4736, 16
        %v4883 = vrot.slane %v4881, 4
        %v4884 = vor.u32 %v4883, %v4879
        %v4885 = vrot.slane %v4884, 4
        %v4887 = vshll.u32 %v4737, 16
        %v4889 = vrot.slane %v4887, 5
        %v4890 = vsel %vm1232, %v4885, %v4889
        %v4892 = vshrl.u32 %v4738, 16
        %v4894 = vrot.slane %v4892, 4
        %v4895 = vshll.u32 %v4738, 16
        %v4897 = vrot.slane %v4895, 5
        %v4898 = vor.u32 %v4894, %v4897
        %v4899 = vrot.slane %v4898, 4
        %v4901 = vshll.u32 %v4739, 16
        %v4903 = vrot.slane %v4901, 5
        %v4904 = vsel %vm1232, %v4899, %v4903
        %v4905 = vshrl.u32 %v4739, 16
        %v4907 = vrot.slane %v4905, 4
        %v4908 = vor.u32 %v4907, %v4903
        %v4909 = vrot.slane %v4908, 4
        %v4911 = vshll.u32 %v4740, 16
        %v4913 = vrot.slane %v4911, 5
        %v4914 = vsel %vm1232, %v4909, %v4913
        %v4916 = vshrl.u32 %v4741, 16
        %v4918 = vrot.slane %v4916, 4
        %v4919 = vshll.u32 %v4741, 16
        %v4921 = vrot.slane %v4919, 5
        %v4922 = vor.u32 %v4918, %v4921
        %v4923 = vrot.slane %v4922, 4
        %v4925 = vshll.u32 %v4742, 16
        %v4927 = vrot.slane %v4925, 5
        %v4928 = vsel %vm1232, %v4923, %v4927
        %v4929 = vshrl.u32 %v4742, 16
        %v4931 = vrot.slane %v4929, 4
        %v4932 = vor.u32 %v4931, %v4927
        %v4933 = vrot.slane %v4932, 4
        %v4935 = vshll.u32 %v4743, 16
        %v4937 = vrot.slane %v4935, 5
        %v4938 = vsel %vm1232, %v4933, %v4937
        %v4940 = vshrl.u32 %v4744, 16
        %v4942 = vrot.slane %v4940, 4
        %v4943 = vshll.u32 %v4744, 16
        %v4945 = vrot.slane %v4943, 5
        %v4946 = vor.u32 %v4942, %v4945
        %v4947 = vrot.slane %v4946, 4
        %v4949 = vshll.u32 %v4745, 16
        %v4951 = vrot.slane %v4949, 5
        %v4952 = vsel %vm1232, %v4947, %v4951
        %v4953 = vshrl.u32 %v4745, 16
        %v4955 = vrot.slane %v4953, 4
        %v4956 = vor.u32 %v4955, %v4951
        %v4957 = vrot.slane %v4956, 4
        %v4959 = vshll.u32 %v4746, 16
        %v4961 = vrot.slane %v4959, 5
        %v4962 = vsel %vm1232, %v4957, %v4961
        %v4964 = vshrl.u32 %v4747, 16
        %v4966 = vrot.slane %v4964, 4
        %v4967 = vshll.u32 %v4747, 16
        %v4969 = vrot.slane %v4967, 5
        %v4970 = vor.u32 %v4966, %v4969
        %v4971 = vrot.slane %v4970, 4
        %v4973 = vshll.u32 %v4748, 16
        %v4975 = vrot.slane %v4973, 5
        %v4976 = vsel %vm1232, %v4971, %v4975
        %v4977 = vshrl.u32 %v4748, 16
        %v4979 = vrot.slane %v4977, 4
        %v4980 = vor.u32 %v4979, %v4975
        %v4981 = vrot.slane %v4980, 4
        %v4983 = vshll.u32 %v4749, 16
        %v4985 = vrot.slane %v4983, 5
        %v4986 = vsel %vm1232, %v4981, %v4985
        %v4988 = vshrl.u32 %v4750, 16
        %v4990 = vrot.slane %v4988, 4
        %v4991 = vshll.u32 %v4750, 16
        %v4993 = vrot.slane %v4991, 5
        %v4994 = vor.u32 %v4990, %v4993
        %v4995 = vrot.slane %v4994, 4
        %v4997 = vshll.u32 %v4751, 16
        %v4999 = vrot.slane %v4997, 5
        %v5000 = vsel %vm1232, %v4995, %v4999
        %v5001 = vshrl.u32 %v4751, 16
        %v5003 = vrot.slane %v5001, 4
        %v5004 = vor.u32 %v5003, %v4999
        %v5005 = vrot.slane %v5004, 4
        %v5007 = vshll.u32 %v4752, 16
        %v5009 = vrot.slane %v5007, 5
        %v5010 = vsel %vm1232, %v5005, %v5009
        %v5012 = vshrl.u32 %v4753, 16
        %v5014 = vrot.slane %v5012, 4
        %v5015 = vshll.u32 %v4753, 16
        %v5017 = vrot.slane %v5015, 5
        %v5018 = vor.u32 %v5014, %v5017
        %v5019 = vrot.slane %v5018, 4
        %v5021 = vshll.u32 %v4754, 16
        %v5023 = vrot.slane %v5021, 5
        %v5024 = vsel %vm1232, %v5019, %v5023
        %v5025 = vshrl.u32 %v4754, 16
        %v5027 = vrot.slane %v5025, 4
        %v5028 = vor.u32 %v5027, %v5023
        %v5029 = vrot.slane %v5028, 4
        %v5031 = vshll.u32 %v4755, 16
        %v5033 = vrot.slane %v5031, 5
        %v5034 = vsel %vm1232, %v5029, %v5033
        %v5036 = vshrl.u32 %v4756, 16
        %v5038 = vrot.slane %v5036, 4
        %v5039 = vshll.u32 %v4756, 16
        %v5041 = vrot.slane %v5039, 5
        %v5042 = vor.u32 %v5038, %v5041
        %v5043 = vrot.slane %v5042, 4
        %v5045 = vshll.u32 %v4757, 16
        %v5047 = vrot.slane %v5045, 5
        %v5048 = vsel %vm1232, %v5043, %v5047
        %v5049 = vshrl.u32 %v4757, 16
        %v5051 = vrot.slane %v5049, 4
        %v5052 = vor.u32 %v5051, %v5047
        %v5053 = vrot.slane %v5052, 4
        %v5055 = vshll.u32 %v4758, 16
        %v5057 = vrot.slane %v5055, 5
        %v5058 = vsel %vm1232, %v5053, %v5057
        %v5060 = vshrl.u32 %v4759, 16
        %v5062 = vrot.slane %v5060, 4
        %v5063 = vshll.u32 %v4759, 16
        %v5065 = vrot.slane %v5063, 5
        %v5066 = vor.u32 %v5062, %v5065
        %v5067 = vrot.slane %v5066, 4
        %v5069 = vshll.u32 %v4760, 16
        %v5071 = vrot.slane %v5069, 5
        %v5072 = vsel %vm1232, %v5067, %v5071
        %v5073 = vshrl.u32 %v4760, 16
        %v5075 = vrot.slane %v5073, 4
        %v5076 = vor.u32 %v5075, %v5071
        %v5077 = vrot.slane %v5076, 4
        %v5079 = vshll.u32 %v4761, 16
        %v5081 = vrot.slane %v5079, 5
        %v5082 = vsel %vm1232, %v5077, %v5081
        %v5084 = vshrl.u32 %v4762, 16
        %v5086 = vrot.slane %v5084, 4
        %v5087 = vshll.u32 %v4762, 16
        %v5089 = vrot.slane %v5087, 5
        %v5090 = vor.u32 %v5086, %v5089
        %v5091 = vrot.slane %v5090, 4
        %v5093 = vshll.u32 %v4763, 16
        %v5095 = vrot.slane %v5093, 5
        %v5096 = vsel %vm1232, %v5091, %v5095
        %v5097 = vshrl.u32 %v4763, 16
        %v5099 = vrot.slane %v5097, 4
        %v5100 = vor.u32 %v5099, %v5095
        %v5101 = vrot.slane %v5100, 4
        %v5103 = vshll.u32 %v4764, 16
        %v5105 = vrot.slane %v5103, 5
        %v5106 = vsel %vm1232, %v5101, %v5105
        %v5108 = vshrl.u32 %v4765, 16
        %v5110 = vrot.slane %v5108, 4
        %v5111 = vshll.u32 %v4765, 16
        %v5113 = vrot.slane %v5111, 5
        %v5114 = vor.u32 %v5110, %v5113
        %v5115 = vrot.slane %v5114, 4
        %v5117 = vshll.u32 %v4766, 16
        %v5119 = vrot.slane %v5117, 5
        %v5120 = vsel %vm1232, %v5115, %v5119
        %v5121 = vshrl.u32 %v4766, 16
        %v5123 = vrot.slane %v5121, 4
        %v5124 = vor.u32 %v5123, %v5119
        %v5125 = vrot.slane %v5124, 4
        %v5127 = vshll.u32 %v4767, 16
        %v5129 = vrot.slane %v5127, 5
        %v5130 = vsel %vm1232, %v5125, %v5129
        %v5132 = vshrl.u32 %v4768, 16
        %v5134 = vrot.slane %v5132, 4
        %v5135 = vshll.u32 %v4768, 16
        %v5137 = vrot.slane %v5135, 5
        %v5138 = vor.u32 %v5134, %v5137
        %v5139 = vrot.slane %v5138, 4
        %v5141 = vshll.u32 %v4769, 16
        %v5143 = vrot.slane %v5141, 5
        %v5144 = vsel %vm1232, %v5139, %v5143
        %v5145 = vshrl.u32 %v4769, 16
        %v5147 = vrot.slane %v5145, 4
        %v5148 = vor.u32 %v5147, %v5143
        %v5149 = vrot.slane %v5148, 4
        %v5151 = vshll.u32 %v4770, 16
        %v5153 = vrot.slane %v5151, 5
        %v5154 = vsel %vm1232, %v5149, %v5153
        %s5155 = scalar_lea.vmem [#allocation8], 448
        %v5156 = vld [vmem:[%s5155] sm:$0xf]
        %v5157 = vld [vmem:[%s5155 + $0x4] sm:$0xf]
        %v5158 = vld [vmem:[%s5155 + $0x8] sm:$0xf]
        %v5159 = vld [vmem:[%s5155 + $0xc] sm:$0xf]
        %v5160 = vld [vmem:[%s5155 + $0x10] sm:$0xf]
        %v5161 = vld [vmem:[%s5155 + $0x14] sm:$0xf]
        %v5162 = vld [vmem:[%s5155 + $0x18] sm:$0xf]
        %v5163 = vld [vmem:[%s5155 + $0x1c] sm:$0xf]
        %v5164 = vld [vmem:[%s5155 + $0x20] sm:$0xf]
        %v5165 = vld [vmem:[%s5155 + $0x24] sm:$0xf]
        %v5166 = vld [vmem:[%s5155 + $0x28] sm:$0xf]
        %v5167 = vld [vmem:[%s5155 + $0x2c] sm:$0xf]
        %v5168 = vld [vmem:[%s5155 + $0x30] sm:$0xf]
        %v5169 = vld [vmem:[%s5155 + $0x34] sm:$0xf]
        %v5170 = vld [vmem:[%s5155 + $0x38] sm:$0xf]
        %v5171 = vld [vmem:[%s5155 + $0x3c] sm:$0xf]
        %v5172 = vunpack.c.l.b16 %v4784
        %v5173 = vunpack.c.l.b16 %v4794
        %v5174 = vunpack.c.l.b16 %v4808
        %v5175 = vunpack.c.l.b16 %v4818
        %v5176 = vunpack.c.l.b16 %v4832
        %v5177 = vunpack.c.l.b16 %v4842
        %v5178 = vunpack.c.l.b16 %v4856
        %v5179 = vunpack.c.l.b16 %v4866
        %v5180 = vunpack.c.l.b16 %v4880
        %v5181 = vunpack.c.l.b16 %v4890
        %v5182 = vunpack.c.l.b16 %v4904
        %v5183 = vunpack.c.l.b16 %v4914
        %v5184 = vunpack.c.l.b16 %v4928
        %v5185 = vunpack.c.l.b16 %v4938
        %v5186 = vunpack.c.l.b16 %v4952
        %v5187 = vunpack.c.l.b16 %v4962
        %v5188 = vunpack.c.l.b16 %v4976
        %v5189 = vunpack.c.l.b16 %v4986
        %v5190 = vunpack.c.l.b16 %v5000
        %v5191 = vunpack.c.l.b16 %v5010
        %v5192 = vunpack.c.l.b16 %v5024
        %v5193 = vunpack.c.l.b16 %v5034
        %v5194 = vunpack.c.l.b16 %v5048
        %v5195 = vunpack.c.l.b16 %v5058
        %v5196 = vunpack.c.l.b16 %v5072
        %v5197 = vunpack.c.l.b16 %v5082
        %v5198 = vunpack.c.l.b16 %v5096
        %v5199 = vunpack.c.l.b16 %v5106
        %v5200 = vunpack.c.l.b16 %v5120
        %v5201 = vunpack.c.l.b16 %v5130
        %v5202 = vunpack.c.l.b16 %v5144
        %v5203 = vunpack.c.l.b16 %v5154
        %v5204 = vpack.c.b16 %v5173, %v5172
        %v5205 = vpack.c.b16 %v5175, %v5174
        %v5206 = vpack.c.b16 %v5177, %v5176
        %v5207 = vpack.c.b16 %v5179, %v5178
        %v5208 = vpack.c.b16 %v5181, %v5180
        %v5209 = vpack.c.b16 %v5183, %v5182
        %v5210 = vpack.c.b16 %v5185, %v5184
        %v5211 = vpack.c.b16 %v5187, %v5186
        %v5212 = vpack.c.b16 %v5189, %v5188
        %v5213 = vpack.c.b16 %v5191, %v5190
        %v5214 = vpack.c.b16 %v5193, %v5192
        %v5215 = vpack.c.b16 %v5195, %v5194
        %v5216 = vpack.c.b16 %v5197, %v5196
        %v5217 = vpack.c.b16 %v5199, %v5198
        %v5218 = vpack.c.b16 %v5201, %v5200
        %v5219 = vpack.c.b16 %v5203, %v5202
        %v5252 = vunpack.c.l.b16 %v5156
        %v5253 = vunpack.c.l.b16 %v5157
        %v5254 = vunpack.c.l.b16 %v5158
        %v5255 = vunpack.c.l.b16 %v5159
        %v5256 = vunpack.c.l.b16 %v5160
        %v5257 = vunpack.c.l.b16 %v5161
        %v5258 = vunpack.c.l.b16 %v5162
        %v5259 = vunpack.c.l.b16 %v5163
        %v5260 = vunpack.c.l.b16 %v5164
        %v5261 = vunpack.c.l.b16 %v5165
        %v5262 = vunpack.c.l.b16 %v5166
        %v5263 = vunpack.c.l.b16 %v5167
        %v5264 = vunpack.c.l.b16 %v5168
        %v5265 = vunpack.c.l.b16 %v5169
        %v5266 = vunpack.c.l.b16 %v5170
        %v5267 = vunpack.c.l.b16 %v5171
        %v5268 = vpack.c.b16 %v5253, %v5252
        %v5269 = vpack.c.b16 %v5255, %v5254
        %v5270 = vpack.c.b16 %v5257, %v5256
        %v5271 = vpack.c.b16 %v5259, %v5258
        %v5272 = vpack.c.b16 %v5261, %v5260
        %v5273 = vpack.c.b16 %v5263, %v5262
        %v5274 = vpack.c.b16 %v5265, %v5264
        %v5275 = vpack.c.b16 %v5267, %v5266
        %5284 = vmatprep.subr.bf16.mxu0 0
        %5285 = vmatpush1.bf16.msra.mxu0 %v5275
        %5286 = vmatprep.subr.bf16.mxu0 0
        %5287 = vmatpush1.bf16.msra.mxu0 %v5274
        %5288 = vmatprep.subr.bf16.mxu0 0
        %5289 = vmatpush1.bf16.msra.mxu0 %v5273
        %5290 = vmatprep.subr.bf16.mxu0 0
        %5291 = vmatpush1.bf16.msra.mxu0 %v5272
        %5292 = vmatprep.subr.bf16.mxu0 0
        %5293 = vmatpush1.bf16.msra.mxu0 %v5271
        %5294 = vmatprep.subr.bf16.mxu0 0
        %5295 = vmatpush1.bf16.msra.mxu0 %v5270
        %5296 = vmatprep.subr.bf16.mxu0 0
        %5297 = vmatpush1.bf16.msra.mxu0 %v5269
        %5298 = vmatprep.subr.bf16.mxu0 0
        %5299 = vmatpush1.bf16.msra.mxu0 %v5268
        %5300 = vmatprep.subr.bf16.mxu0 0
        %5301 = vmatpush2.bf16.msra.mxu0 0
        %5302 = vmatprep.subr.bf16.mxu0 0
        %5303 = vmatpush2.bf16.msra.mxu0 0
        %5304 = vmatprep.subr.bf16.mxu0 0
        %5305 = vmatpush2.bf16.msra.mxu0 0
        %5306 = vmatprep.subr.bf16.mxu0 0
        %5307 = vmatpush2.bf16.msra.mxu0 0
        %5308 = vmatprep.subr.bf16.mxu0 0
        %5309 = vmatpush2.bf16.msra.mxu0 0
        %5310 = vmatprep.subr.bf16.mxu0 0
        %5311 = vmatpush2.bf16.msra.mxu0 0
        %5312 = vmatprep.subr.bf16.mxu0 0
        %5313 = vmatpush2.bf16.msra.mxu0 0
        %5314 = vmatprep.subr.bf16.mxu0 0
        %5315 = vmatpush2.bf16.msra.mxu0 0
        %5316 = vmatprep.mubr.bf16.mxu0 0
        %5317 = vmatmul.mubr.bf16.gmra.mxu0 %v5204
        %v5318 = vpop.f32.mrf.mxu0
        %v5319 = vadd.f32 0.0, %v5318
        %v5320 = vpop.f32.mrf.mxu0
        %v5321 = vpop.f32.mrf.mxu0
        %v5322 = vadd.f32 0.0, %v5321
        %v5323 = vpop.f32.mrf.mxu0
        %5324 = vmatprep.mubr.bf16.mxu0 0
        %5325 = vmatmul.mubr.bf16.gmra.mxu0 %v5205
        %v5326 = vpop.f32.mrf.mxu0
        %v5327 = vadd.f32 0.0, %v5326
        %v5328 = vpop.f32.mrf.mxu0
        %v5329 = vpop.f32.mrf.mxu0
        %v5330 = vadd.f32 0.0, %v5329
        %v5331 = vpop.f32.mrf.mxu0
        %5332 = vmatprep.mubr.bf16.mxu0 0
        %5333 = vmatmul.mubr.bf16.gmra.mxu0 %v5206
        %v5334 = vpop.f32.mrf.mxu0
        %v5335 = vadd.f32 0.0, %v5334
        %v5336 = vpop.f32.mrf.mxu0
        %v5337 = vpop.f32.mrf.mxu0
        %v5338 = vadd.f32 0.0, %v5337
        %v5339 = vpop.f32.mrf.mxu0
        %5340 = vmatprep.mubr.bf16.mxu0 0
        %5341 = vmatmul.mubr.bf16.gmra.mxu0 %v5207
        %v5342 = vpop.f32.mrf.mxu0
        %v5343 = vadd.f32 0.0, %v5342
        %v5344 = vpop.f32.mrf.mxu0
        %v5345 = vpop.f32.mrf.mxu0
        %v5346 = vadd.f32 0.0, %v5345
        %v5347 = vpop.f32.mrf.mxu0
        %5348 = vmatprep.mubr.bf16.mxu0 0
        %5349 = vmatmul.mubr.bf16.gmra.mxu0 %v5208
        %v5350 = vpop.f32.mrf.mxu0
        %v5351 = vadd.f32 0.0, %v5350
        %v5352 = vpop.f32.mrf.mxu0
        %v5353 = vpop.f32.mrf.mxu0
        %v5354 = vadd.f32 0.0, %v5353
        %v5355 = vpop.f32.mrf.mxu0
        %5356 = vmatprep.mubr.bf16.mxu0 0
        %5357 = vmatmul.mubr.bf16.gmra.mxu0 %v5209
        %v5358 = vpop.f32.mrf.mxu0
        %v5359 = vadd.f32 0.0, %v5358
        %v5360 = vpop.f32.mrf.mxu0
        %v5361 = vpop.f32.mrf.mxu0
        %v5362 = vadd.f32 0.0, %v5361
        %v5363 = vpop.f32.mrf.mxu0
        %5364 = vmatprep.mubr.bf16.mxu0 0
        %5365 = vmatmul.mubr.bf16.gmra.mxu0 %v5210
        %v5366 = vpop.f32.mrf.mxu0
        %v5367 = vadd.f32 0.0, %v5366
        %v5368 = vpop.f32.mrf.mxu0
        %v5369 = vpop.f32.mrf.mxu0
        %v5370 = vadd.f32 0.0, %v5369
        %v5371 = vpop.f32.mrf.mxu0
        %5372 = vmatprep.mubr.bf16.mxu0 0
        %5373 = vmatmul.mubr.bf16.gmra.mxu0 %v5211
        %v5374 = vpop.f32.mrf.mxu0
        %v5375 = vadd.f32 0.0, %v5374
        %v5376 = vpop.f32.mrf.mxu0
        %v5377 = vpop.f32.mrf.mxu0
        %v5378 = vadd.f32 0.0, %v5377
        %v5379 = vpop.f32.mrf.mxu0
        %5380 = vmatprep.mubr.bf16.mxu0 0
        %5381 = vmatmul.mubr.bf16.gmra.mxu0 %v5212
        %v5382 = vpop.f32.mrf.mxu0
        %v5383 = vadd.f32 0.0, %v5382
        %v5384 = vpop.f32.mrf.mxu0
        %v5385 = vpop.f32.mrf.mxu0
        %v5386 = vadd.f32 0.0, %v5385
        %v5387 = vpop.f32.mrf.mxu0
        %5388 = vmatprep.mubr.bf16.mxu0 0
        %5389 = vmatmul.mubr.bf16.gmra.mxu0 %v5213
        %v5390 = vpop.f32.mrf.mxu0
        %v5391 = vadd.f32 0.0, %v5390
        %v5392 = vpop.f32.mrf.mxu0
        %v5393 = vpop.f32.mrf.mxu0
        %v5394 = vadd.f32 0.0, %v5393
        %v5395 = vpop.f32.mrf.mxu0
        %5396 = vmatprep.mubr.bf16.mxu0 0
        %5397 = vmatmul.mubr.bf16.gmra.mxu0 %v5214
        %v5398 = vpop.f32.mrf.mxu0
        %v5399 = vadd.f32 0.0, %v5398
        %v5400 = vpop.f32.mrf.mxu0
        %v5401 = vpop.f32.mrf.mxu0
        %v5402 = vadd.f32 0.0, %v5401
        %v5403 = vpop.f32.mrf.mxu0
        %5404 = vmatprep.mubr.bf16.mxu0 0
        %5405 = vmatmul.mubr.bf16.gmra.mxu0 %v5215
        %v5406 = vpop.f32.mrf.mxu0
        %v5407 = vadd.f32 0.0, %v5406
        %v5408 = vpop.f32.mrf.mxu0
        %v5409 = vpop.f32.mrf.mxu0
        %v5410 = vadd.f32 0.0, %v5409
        %v5411 = vpop.f32.mrf.mxu0
        %5412 = vmatprep.mubr.bf16.mxu0 0
        %5413 = vmatmul.mubr.bf16.gmra.mxu0 %v5216
        %v5414 = vpop.f32.mrf.mxu0
        %v5415 = vadd.f32 0.0, %v5414
        %v5416 = vpop.f32.mrf.mxu0
        %v5417 = vpop.f32.mrf.mxu0
        %v5418 = vadd.f32 0.0, %v5417
        %v5419 = vpop.f32.mrf.mxu0
        %5420 = vmatprep.mubr.bf16.mxu0 0
        %5421 = vmatmul.mubr.bf16.gmra.mxu0 %v5217
        %v5422 = vpop.f32.mrf.mxu0
        %v5423 = vadd.f32 0.0, %v5422
        %v5424 = vpop.f32.mrf.mxu0
        %v5425 = vpop.f32.mrf.mxu0
        %v5426 = vadd.f32 0.0, %v5425
        %v5427 = vpop.f32.mrf.mxu0
        %5428 = vmatprep.mubr.bf16.mxu0 0
        %5429 = vmatmul.mubr.bf16.gmra.mxu0 %v5218
        %v5430 = vpop.f32.mrf.mxu0
        %v5431 = vadd.f32 0.0, %v5430
        %v5432 = vpop.f32.mrf.mxu0
        %v5433 = vpop.f32.mrf.mxu0
        %v5434 = vadd.f32 0.0, %v5433
        %v5435 = vpop.f32.mrf.mxu0
        %5436 = vmatprep.mubr.bf16.mxu0 0
        %5437 = vmatmul.mubr.bf16.gmra.mxu0 %v5219
        %v5438 = vpop.f32.mrf.mxu0
        %v5439 = vadd.f32 0.0, %v5438
        %v5440 = vpop.f32.mrf.mxu0
        %v5441 = vpop.f32.mrf.mxu0
        %v5442 = vadd.f32 0.0, %v5441
        %v5443 = vpop.f32.mrf.mxu0
        %5444 = vdwg.mxu0
        %v5445 = vadd.f32 %v4691, %v5319
        %v5446 = vadd.f32 %v4692, %v5322
        %v5447 = vadd.f32 %v4693, %v5327
        %v5448 = vadd.f32 %v4694, %v5330
        %v5449 = vadd.f32 %v4695, %v5335
        %v5450 = vadd.f32 %v4696, %v5338
        %v5451 = vadd.f32 %v4697, %v5343
        %v5452 = vadd.f32 %v4698, %v5346
        %v5453 = vadd.f32 %v4699, %v5351
        %v5454 = vadd.f32 %v4700, %v5354
        %v5455 = vadd.f32 %v4701, %v5359
        %v5456 = vadd.f32 %v4702, %v5362
        %v5457 = vadd.f32 %v4703, %v5367
        %v5458 = vadd.f32 %v4704, %v5370
        %v5459 = vadd.f32 %v4705, %v5375
        %v5460 = vadd.f32 %v4706, %v5378
        %v5461 = vadd.f32 %v4707, %v5383
        %v5462 = vadd.f32 %v4708, %v5386
        %v5463 = vadd.f32 %v4709, %v5391
        %v5464 = vadd.f32 %v4710, %v5394
        %v5465 = vadd.f32 %v4711, %v5399
        %v5466 = vadd.f32 %v4712, %v5402
        %v5467 = vadd.f32 %v4713, %v5407
        %v5468 = vadd.f32 %v4714, %v5410
        %v5469 = vadd.f32 %v4715, %v5415
        %v5470 = vadd.f32 %v4716, %v5418
        %v5471 = vadd.f32 %v4717, %v5423
        %v5472 = vadd.f32 %v4718, %v5426
        %v5473 = vadd.f32 %v4719, %v5431
        %v5474 = vadd.f32 %v4720, %v5434
        %v5475 = vadd.f32 %v4721, %v5439
        %v5476 = vadd.f32 %v4722, %v5442
        %v5477 = vld [vmem:[%s4336] sm:$0xe]
        %v5478 = vld [vmem:[%s4336 + $0xc] sm:$0xe]
        %v5479 = vld [vmem:[%s4336 + $0x18] sm:$0xe]
        %v5480 = vld [vmem:[%s4336 + $0x24] sm:$0xe]
        %v5481 = vld [vmem:[%s4336 + $0x30] sm:$0xe]
        %v5482 = vld [vmem:[%s4336 + $0x3c] sm:$0xe]
        %v5483 = vld [vmem:[%s4336 + $0x48] sm:$0xe]
        %v5484 = vld [vmem:[%s4336 + $0x54] sm:$0xe]
        %v5485 = vld [vmem:[%s4336 + $0x60] sm:$0xe]
        %v5486 = vld [vmem:[%s4336 + $0x6c] sm:$0xe]
        %v5487 = vld [vmem:[%s4336 + $0x78] sm:$0xe]
        %v5488 = vld [vmem:[%s4336 + $0x84] sm:$0xe]
        %v5489 = vld [vmem:[%s4336 + $0x90] sm:$0xe]
        %v5490 = vld [vmem:[%s4336 + $0x9c] sm:$0xe]
        %v5491 = vld [vmem:[%s4336 + $0xa8] sm:$0xe]
        %v5492 = vld [vmem:[%s4336 + $0xb4] sm:$0xe]
        %v5541 = vrot.slane %v5477, 5
        %v5542 = vrot.slane %v5541, 4
        %v5543 = vrot.slane %v4724, 5
        %v5544 = vsel %vm2262, %v5542, %v5543
        %v5545 = vrot.slane %v5543, 4
        %v5546 = vrot.slane %v4725, 5
        %v5547 = vsel %vm2262, %v5545, %v5546
        %v5548 = vrot.slane %v5478, 5
        %v5549 = vrot.slane %v5548, 4
        %v5550 = vrot.slane %v4727, 5
        %v5551 = vsel %vm2262, %v5549, %v5550
        %v5552 = vrot.slane %v5550, 4
        %v5553 = vrot.slane %v4728, 5
        %v5554 = vsel %vm2262, %v5552, %v5553
        %v5555 = vrot.slane %v5479, 5
        %v5556 = vrot.slane %v5555, 4
        %v5557 = vrot.slane %v4730, 5
        %v5558 = vsel %vm2262, %v5556, %v5557
        %v5559 = vrot.slane %v5557, 4
        %v5560 = vrot.slane %v4731, 5
        %v5561 = vsel %vm2262, %v5559, %v5560
        %v5562 = vrot.slane %v5480, 5
        %v5563 = vrot.slane %v5562, 4
        %v5564 = vrot.slane %v4733, 5
        %v5565 = vsel %vm2262, %v5563, %v5564
        %v5566 = vrot.slane %v5564, 4
        %v5567 = vrot.slane %v4734, 5
        %v5568 = vsel %vm2262, %v5566, %v5567
        %v5569 = vrot.slane %v5481, 5
        %v5570 = vrot.slane %v5569, 4
        %v5571 = vrot.slane %v4736, 5
        %v5572 = vsel %vm2262, %v5570, %v5571
        %v5573 = vrot.slane %v5571, 4
        %v5574 = vrot.slane %v4737, 5
        %v5575 = vsel %vm2262, %v5573, %v5574
        %v5576 = vrot.slane %v5482, 5
        %v5577 = vrot.slane %v5576, 4
        %v5578 = vrot.slane %v4739, 5
        %v5579 = vsel %vm2262, %v5577, %v5578
        %v5580 = vrot.slane %v5578, 4
        %v5581 = vrot.slane %v4740, 5
        %v5582 = vsel %vm2262, %v5580, %v5581
        %v5583 = vrot.slane %v5483, 5
        %v5584 = vrot.slane %v5583, 4
        %v5585 = vrot.slane %v4742, 5
        %v5586 = vsel %vm2262, %v5584, %v5585
        %v5587 = vrot.slane %v5585, 4
        %v5588 = vrot.slane %v4743, 5
        %v5589 = vsel %vm2262, %v5587, %v5588
        %v5590 = vrot.slane %v5484, 5
        %v5591 = vrot.slane %v5590, 4
        %v5592 = vrot.slane %v4745, 5
        %v5593 = vsel %vm2262, %v5591, %v5592
        %v5594 = vrot.slane %v5592, 4
        %v5595 = vrot.slane %v4746, 5
        %v5596 = vsel %vm2262, %v5594, %v5595
        %v5597 = vrot.slane %v5485, 5
        %v5598 = vrot.slane %v5597, 4
        %v5599 = vrot.slane %v4748, 5
        %v5600 = vsel %vm2262, %v5598, %v5599
        %v5601 = vrot.slane %v5599, 4
        %v5602 = vrot.slane %v4749, 5
        %v5603 = vsel %vm2262, %v5601, %v5602
        %v5604 = vrot.slane %v5486, 5
        %v5605 = vrot.slane %v5604, 4
        %v5606 = vrot.slane %v4751, 5
        %v5607 = vsel %vm2262, %v5605, %v5606
        %v5608 = vrot.slane %v5606, 4
        %v5609 = vrot.slane %v4752, 5
        %v5610 = vsel %vm2262, %v5608, %v5609
        %v5611 = vrot.slane %v5487, 5
        %v5612 = vrot.slane %v5611, 4
        %v5613 = vrot.slane %v4754, 5
        %v5614 = vsel %vm2262, %v5612, %v5613
        %v5615 = vrot.slane %v5613, 4
        %v5616 = vrot.slane %v4755, 5
        %v5617 = vsel %vm2262, %v5615, %v5616
        %v5618 = vrot.slane %v5488, 5
        %v5619 = vrot.slane %v5618, 4
        %v5620 = vrot.slane %v4757, 5
        %v5621 = vsel %vm2262, %v5619, %v5620
        %v5622 = vrot.slane %v5620, 4
        %v5623 = vrot.slane %v4758, 5
        %v5624 = vsel %vm2262, %v5622, %v5623
        %v5625 = vrot.slane %v5489, 5
        %v5626 = vrot.slane %v5625, 4
        %v5627 = vrot.slane %v4760, 5
        %v5628 = vsel %vm2262, %v5626, %v5627
        %v5629 = vrot.slane %v5627, 4
        %v5630 = vrot.slane %v4761, 5
        %v5631 = vsel %vm2262, %v5629, %v5630
        %v5632 = vrot.slane %v5490, 5
        %v5633 = vrot.slane %v5632, 4
        %v5634 = vrot.slane %v4763, 5
        %v5635 = vsel %vm2262, %v5633, %v5634
        %v5636 = vrot.slane %v5634, 4
        %v5637 = vrot.slane %v4764, 5
        %v5638 = vsel %vm2262, %v5636, %v5637
        %v5639 = vrot.slane %v5491, 5
        %v5640 = vrot.slane %v5639, 4
        %v5641 = vrot.slane %v4766, 5
        %v5642 = vsel %vm2262, %v5640, %v5641
        %v5643 = vrot.slane %v5641, 4
        %v5644 = vrot.slane %v4767, 5
        %v5645 = vsel %vm2262, %v5643, %v5644
        %v5646 = vrot.slane %v5492, 5
        %v5647 = vrot.slane %v5646, 4
        %v5648 = vrot.slane %v4769, 5
        %v5649 = vsel %vm2262, %v5647, %v5648
        %v5650 = vrot.slane %v5648, 4
        %v5651 = vrot.slane %v4770, 5
        %v5652 = vsel %vm2262, %v5650, %v5651
        %s5653 = scalar_lea.vmem [#allocation8], 512
        %v5654 = vld [vmem:[%s5653] sm:$0xf]
        %v5655 = vld [vmem:[%s5653 + $0x4] sm:$0xf]
        %v5656 = vld [vmem:[%s5653 + $0x8] sm:$0xf]
        %v5657 = vld [vmem:[%s5653 + $0xc] sm:$0xf]
        %v5658 = vld [vmem:[%s5653 + $0x10] sm:$0xf]
        %v5659 = vld [vmem:[%s5653 + $0x14] sm:$0xf]
        %v5660 = vld [vmem:[%s5653 + $0x18] sm:$0xf]
        %v5661 = vld [vmem:[%s5653 + $0x1c] sm:$0xf]
        %v5662 = vld [vmem:[%s5653 + $0x20] sm:$0xf]
        %v5663 = vld [vmem:[%s5653 + $0x24] sm:$0xf]
        %v5664 = vld [vmem:[%s5653 + $0x28] sm:$0xf]
        %v5665 = vld [vmem:[%s5653 + $0x2c] sm:$0xf]
        %v5666 = vld [vmem:[%s5653 + $0x30] sm:$0xf]
        %v5667 = vld [vmem:[%s5653 + $0x34] sm:$0xf]
        %v5668 = vld [vmem:[%s5653 + $0x38] sm:$0xf]
        %v5669 = vld [vmem:[%s5653 + $0x3c] sm:$0xf]
        %v5670 = vunpack.c.l.b16 %v5544
        %v5671 = vunpack.c.l.b16 %v5547
        %v5672 = vunpack.c.l.b16 %v5551
        %v5673 = vunpack.c.l.b16 %v5554
        %v5674 = vunpack.c.l.b16 %v5558
        %v5675 = vunpack.c.l.b16 %v5561
        %v5676 = vunpack.c.l.b16 %v5565
        %v5677 = vunpack.c.l.b16 %v5568
        %v5678 = vunpack.c.l.b16 %v5572
        %v5679 = vunpack.c.l.b16 %v5575
        %v5680 = vunpack.c.l.b16 %v5579
        %v5681 = vunpack.c.l.b16 %v5582
        %v5682 = vunpack.c.l.b16 %v5586
        %v5683 = vunpack.c.l.b16 %v5589
        %v5684 = vunpack.c.l.b16 %v5593
        %v5685 = vunpack.c.l.b16 %v5596
        %v5686 = vunpack.c.l.b16 %v5600
        %v5687 = vunpack.c.l.b16 %v5603
        %v5688 = vunpack.c.l.b16 %v5607
        %v5689 = vunpack.c.l.b16 %v5610
        %v5690 = vunpack.c.l.b16 %v5614
        %v5691 = vunpack.c.l.b16 %v5617
        %v5692 = vunpack.c.l.b16 %v5621
        %v5693 = vunpack.c.l.b16 %v5624
        %v5694 = vunpack.c.l.b16 %v5628
        %v5695 = vunpack.c.l.b16 %v5631
        %v5696 = vunpack.c.l.b16 %v5635
        %v5697 = vunpack.c.l.b16 %v5638
        %v5698 = vunpack.c.l.b16 %v5642
        %v5699 = vunpack.c.l.b16 %v5645
        %v5700 = vunpack.c.l.b16 %v5649
        %v5701 = vunpack.c.l.b16 %v5652
        %v5702 = vpack.c.b16 %v5671, %v5670
        %v5703 = vpack.c.b16 %v5673, %v5672
        %v5704 = vpack.c.b16 %v5675, %v5674
        %v5705 = vpack.c.b16 %v5677, %v5676
        %v5706 = vpack.c.b16 %v5679, %v5678
        %v5707 = vpack.c.b16 %v5681, %v5680
        %v5708 = vpack.c.b16 %v5683, %v5682
        %v5709 = vpack.c.b16 %v5685, %v5684
        %v5710 = vpack.c.b16 %v5687, %v5686
        %v5711 = vpack.c.b16 %v5689, %v5688
        %v5712 = vpack.c.b16 %v5691, %v5690
        %v5713 = vpack.c.b16 %v5693, %v5692
        %v5714 = vpack.c.b16 %v5695, %v5694
        %v5715 = vpack.c.b16 %v5697, %v5696
        %v5716 = vpack.c.b16 %v5699, %v5698
        %v5717 = vpack.c.b16 %v5701, %v5700
        %v5750 = vunpack.c.l.b16 %v5654
        %v5751 = vunpack.c.l.b16 %v5655
        %v5752 = vunpack.c.l.b16 %v5656
        %v5753 = vunpack.c.l.b16 %v5657
        %v5754 = vunpack.c.l.b16 %v5658
        %v5755 = vunpack.c.l.b16 %v5659
        %v5756 = vunpack.c.l.b16 %v5660
        %v5757 = vunpack.c.l.b16 %v5661
        %v5758 = vunpack.c.l.b16 %v5662
        %v5759 = vunpack.c.l.b16 %v5663
        %v5760 = vunpack.c.l.b16 %v5664
        %v5761 = vunpack.c.l.b16 %v5665
        %v5762 = vunpack.c.l.b16 %v5666
        %v5763 = vunpack.c.l.b16 %v5667
        %v5764 = vunpack.c.l.b16 %v5668
        %v5765 = vunpack.c.l.b16 %v5669
        %v5766 = vpack.c.b16 %v5751, %v5750
        %v5767 = vpack.c.b16 %v5753, %v5752
        %v5768 = vpack.c.b16 %v5755, %v5754
        %v5769 = vpack.c.b16 %v5757, %v5756
        %v5770 = vpack.c.b16 %v5759, %v5758
        %v5771 = vpack.c.b16 %v5761, %v5760
        %v5772 = vpack.c.b16 %v5763, %v5762
        %v5773 = vpack.c.b16 %v5765, %v5764
        %5782 = vmatprep.subr.bf16.mxu0 0
        %5783 = vmatpush1.bf16.msra.mxu0 %v5773
        %5784 = vmatprep.subr.bf16.mxu0 0
        %5785 = vmatpush1.bf16.msra.mxu0 %v5772
        %5786 = vmatprep.subr.bf16.mxu0 0
        %5787 = vmatpush1.bf16.msra.mxu0 %v5771
        %5788 = vmatprep.subr.bf16.mxu0 0
        %5789 = vmatpush1.bf16.msra.mxu0 %v5770
        %5790 = vmatprep.subr.bf16.mxu0 0
        %5791 = vmatpush1.bf16.msra.mxu0 %v5769
        %5792 = vmatprep.subr.bf16.mxu0 0
        %5793 = vmatpush1.bf16.msra.mxu0 %v5768
        %5794 = vmatprep.subr.bf16.mxu0 0
        %5795 = vmatpush1.bf16.msra.mxu0 %v5767
        %5796 = vmatprep.subr.bf16.mxu0 0
        %5797 = vmatpush1.bf16.msra.mxu0 %v5766
        %5798 = vmatprep.subr.bf16.mxu0 0
        %5799 = vmatpush2.bf16.msra.mxu0 0
        %5800 = vmatprep.subr.bf16.mxu0 0
        %5801 = vmatpush2.bf16.msra.mxu0 0
        %5802 = vmatprep.subr.bf16.mxu0 0
        %5803 = vmatpush2.bf16.msra.mxu0 0
        %5804 = vmatprep.subr.bf16.mxu0 0
        %5805 = vmatpush2.bf16.msra.mxu0 0
        %5806 = vmatprep.subr.bf16.mxu0 0
        %5807 = vmatpush2.bf16.msra.mxu0 0
        %5808 = vmatprep.subr.bf16.mxu0 0
        %5809 = vmatpush2.bf16.msra.mxu0 0
        %5810 = vmatprep.subr.bf16.mxu0 0
        %5811 = vmatpush2.bf16.msra.mxu0 0
        %5812 = vmatprep.subr.bf16.mxu0 0
        %5813 = vmatpush2.bf16.msra.mxu0 0
        %5814 = vmatprep.mubr.bf16.mxu0 0
        %5815 = vmatmul.mubr.bf16.gmra.mxu0 %v5702
        %v5816 = vpop.f32.mrf.mxu0
        %v5817 = vadd.f32 0.0, %v5816
        %v5818 = vpop.f32.mrf.mxu0
        %v5819 = vpop.f32.mrf.mxu0
        %v5820 = vadd.f32 0.0, %v5819
        %v5821 = vpop.f32.mrf.mxu0
        %5822 = vmatprep.mubr.bf16.mxu0 0
        %5823 = vmatmul.mubr.bf16.gmra.mxu0 %v5703
        %v5824 = vpop.f32.mrf.mxu0
        %v5825 = vadd.f32 0.0, %v5824
        %v5826 = vpop.f32.mrf.mxu0
        %v5827 = vpop.f32.mrf.mxu0
        %v5828 = vadd.f32 0.0, %v5827
        %v5829 = vpop.f32.mrf.mxu0
        %5830 = vmatprep.mubr.bf16.mxu0 0
        %5831 = vmatmul.mubr.bf16.gmra.mxu0 %v5704
        %v5832 = vpop.f32.mrf.mxu0
        %v5833 = vadd.f32 0.0, %v5832
        %v5834 = vpop.f32.mrf.mxu0
        %v5835 = vpop.f32.mrf.mxu0
        %v5836 = vadd.f32 0.0, %v5835
        %v5837 = vpop.f32.mrf.mxu0
        %5838 = vmatprep.mubr.bf16.mxu0 0
        %5839 = vmatmul.mubr.bf16.gmra.mxu0 %v5705
        %v5840 = vpop.f32.mrf.mxu0
        %v5841 = vadd.f32 0.0, %v5840
        %v5842 = vpop.f32.mrf.mxu0
        %v5843 = vpop.f32.mrf.mxu0
        %v5844 = vadd.f32 0.0, %v5843
        %v5845 = vpop.f32.mrf.mxu0
        %5846 = vmatprep.mubr.bf16.mxu0 0
        %5847 = vmatmul.mubr.bf16.gmra.mxu0 %v5706
        %v5848 = vpop.f32.mrf.mxu0
        %v5849 = vadd.f32 0.0, %v5848
        %v5850 = vpop.f32.mrf.mxu0
        %v5851 = vpop.f32.mrf.mxu0
        %v5852 = vadd.f32 0.0, %v5851
        %v5853 = vpop.f32.mrf.mxu0
        %5854 = vmatprep.mubr.bf16.mxu0 0
        %5855 = vmatmul.mubr.bf16.gmra.mxu0 %v5707
        %v5856 = vpop.f32.mrf.mxu0
        %v5857 = vadd.f32 0.0, %v5856
        %v5858 = vpop.f32.mrf.mxu0
        %v5859 = vpop.f32.mrf.mxu0
        %v5860 = vadd.f32 0.0, %v5859
        %v5861 = vpop.f32.mrf.mxu0
        %5862 = vmatprep.mubr.bf16.mxu0 0
        %5863 = vmatmul.mubr.bf16.gmra.mxu0 %v5708
        %v5864 = vpop.f32.mrf.mxu0
        %v5865 = vadd.f32 0.0, %v5864
        %v5866 = vpop.f32.mrf.mxu0
        %v5867 = vpop.f32.mrf.mxu0
        %v5868 = vadd.f32 0.0, %v5867
        %v5869 = vpop.f32.mrf.mxu0
        %5870 = vmatprep.mubr.bf16.mxu0 0
        %5871 = vmatmul.mubr.bf16.gmra.mxu0 %v5709
        %v5872 = vpop.f32.mrf.mxu0
        %v5873 = vadd.f32 0.0, %v5872
        %v5874 = vpop.f32.mrf.mxu0
        %v5875 = vpop.f32.mrf.mxu0
        %v5876 = vadd.f32 0.0, %v5875
        %v5877 = vpop.f32.mrf.mxu0
        %5878 = vmatprep.mubr.bf16.mxu0 0
        %5879 = vmatmul.mubr.bf16.gmra.mxu0 %v5710
        %v5880 = vpop.f32.mrf.mxu0
        %v5881 = vadd.f32 0.0, %v5880
        %v5882 = vpop.f32.mrf.mxu0
        %v5883 = vpop.f32.mrf.mxu0
        %v5884 = vadd.f32 0.0, %v5883
        %v5885 = vpop.f32.mrf.mxu0
        %5886 = vmatprep.mubr.bf16.mxu0 0
        %5887 = vmatmul.mubr.bf16.gmra.mxu0 %v5711
        %v5888 = vpop.f32.mrf.mxu0
        %v5889 = vadd.f32 0.0, %v5888
        %v5890 = vpop.f32.mrf.mxu0
        %v5891 = vpop.f32.mrf.mxu0
        %v5892 = vadd.f32 0.0, %v5891
        %v5893 = vpop.f32.mrf.mxu0
        %5894 = vmatprep.mubr.bf16.mxu0 0
        %5895 = vmatmul.mubr.bf16.gmra.mxu0 %v5712
        %v5896 = vpop.f32.mrf.mxu0
        %v5897 = vadd.f32 0.0, %v5896
        %v5898 = vpop.f32.mrf.mxu0
        %v5899 = vpop.f32.mrf.mxu0
        %v5900 = vadd.f32 0.0, %v5899
        %v5901 = vpop.f32.mrf.mxu0
        %5902 = vmatprep.mubr.bf16.mxu0 0
        %5903 = vmatmul.mubr.bf16.gmra.mxu0 %v5713
        %v5904 = vpop.f32.mrf.mxu0
        %v5905 = vadd.f32 0.0, %v5904
        %v5906 = vpop.f32.mrf.mxu0
        %v5907 = vpop.f32.mrf.mxu0
        %v5908 = vadd.f32 0.0, %v5907
        %v5909 = vpop.f32.mrf.mxu0
        %5910 = vmatprep.mubr.bf16.mxu0 0
        %5911 = vmatmul.mubr.bf16.gmra.mxu0 %v5714
        %v5912 = vpop.f32.mrf.mxu0
        %v5913 = vadd.f32 0.0, %v5912
        %v5914 = vpop.f32.mrf.mxu0
        %v5915 = vpop.f32.mrf.mxu0
        %v5916 = vadd.f32 0.0, %v5915
        %v5917 = vpop.f32.mrf.mxu0
        %5918 = vmatprep.mubr.bf16.mxu0 0
        %5919 = vmatmul.mubr.bf16.gmra.mxu0 %v5715
        %v5920 = vpop.f32.mrf.mxu0
        %v5921 = vadd.f32 0.0, %v5920
        %v5922 = vpop.f32.mrf.mxu0
        %v5923 = vpop.f32.mrf.mxu0
        %v5924 = vadd.f32 0.0, %v5923
        %v5925 = vpop.f32.mrf.mxu0
        %5926 = vmatprep.mubr.bf16.mxu0 0
        %5927 = vmatmul.mubr.bf16.gmra.mxu0 %v5716
        %v5928 = vpop.f32.mrf.mxu0
        %v5929 = vadd.f32 0.0, %v5928
        %v5930 = vpop.f32.mrf.mxu0
        %v5931 = vpop.f32.mrf.mxu0
        %v5932 = vadd.f32 0.0, %v5931
        %v5933 = vpop.f32.mrf.mxu0
        %5934 = vmatprep.mubr.bf16.mxu0 0
        %5935 = vmatmul.mubr.bf16.gmra.mxu0 %v5717
        %v5936 = vpop.f32.mrf.mxu0
        %v5937 = vadd.f32 0.0, %v5936
        %v5938 = vpop.f32.mrf.mxu0
        %v5939 = vpop.f32.mrf.mxu0
        %v5940 = vadd.f32 0.0, %v5939
        %v5941 = vpop.f32.mrf.mxu0
        %5942 = vdwg.mxu0
        %v5943 = vadd.f32 %v5445, %v5817
        %v5944 = vadd.f32 %v5446, %v5820
        %v5945 = vadd.f32 %v5447, %v5825
        %v5946 = vadd.f32 %v5448, %v5828
        %v5947 = vadd.f32 %v5449, %v5833
        %v5948 = vadd.f32 %v5450, %v5836
        %v5949 = vadd.f32 %v5451, %v5841
        %v5950 = vadd.f32 %v5452, %v5844
        %v5951 = vadd.f32 %v5453, %v5849
        %v5952 = vadd.f32 %v5454, %v5852
        %v5953 = vadd.f32 %v5455, %v5857
        %v5954 = vadd.f32 %v5456, %v5860
        %v5955 = vadd.f32 %v5457, %v5865
        %v5956 = vadd.f32 %v5458, %v5868
        %v5957 = vadd.f32 %v5459, %v5873
        %v5958 = vadd.f32 %v5460, %v5876
        %v5959 = vadd.f32 %v5461, %v5881
        %v5960 = vadd.f32 %v5462, %v5884
        %v5961 = vadd.f32 %v5463, %v5889
        %v5962 = vadd.f32 %v5464, %v5892
        %v5963 = vadd.f32 %v5465, %v5897
        %v5964 = vadd.f32 %v5466, %v5900
        %v5965 = vadd.f32 %v5467, %v5905
        %v5966 = vadd.f32 %v5468, %v5908
        %v5967 = vadd.f32 %v5469, %v5913
        %v5968 = vadd.f32 %v5470, %v5916
        %v5969 = vadd.f32 %v5471, %v5921
        %v5970 = vadd.f32 %v5472, %v5924
        %v5971 = vadd.f32 %v5473, %v5929
        %v5972 = vadd.f32 %v5474, %v5932
        %v5973 = vadd.f32 %v5475, %v5937
        %v5974 = vadd.f32 %v5476, %v5940
        %v5975 = vld [vmem:[%s4] sm:$0x1]
        %v5977 = vlaneseq
        %v5978 = vshrl.u32 %v5977, 7
        %v5979 = vsub.s32 0, %v5978
        %v5980 = vrot.slane %v5975, %v5979
        %v5982 = vadd.f32 %v5943, %v5980
        %v5983 = vadd.f32 %v5944, %v5980
        %v5984 = vadd.f32 %v5945, %v5980
        %v5985 = vadd.f32 %v5946, %v5980
        %v5986 = vadd.f32 %v5947, %v5980
        %v5987 = vadd.f32 %v5948, %v5980
        %v5988 = vadd.f32 %v5949, %v5980
        %v5989 = vadd.f32 %v5950, %v5980
        %v5990 = vadd.f32 %v5951, %v5980
        %v5991 = vadd.f32 %v5952, %v5980
        %v5992 = vadd.f32 %v5953, %v5980
        %v5993 = vadd.f32 %v5954, %v5980
        %v5994 = vadd.f32 %v5955, %v5980
        %v5995 = vadd.f32 %v5956, %v5980
        %v5996 = vadd.f32 %v5957, %v5980
        %v5997 = vadd.f32 %v5958, %v5980
        %v5998 = vadd.f32 %v5959, %v5980
        %v5999 = vadd.f32 %v5960, %v5980
        %v6000 = vadd.f32 %v5961, %v5980
        %v6001 = vadd.f32 %v5962, %v5980
        %v6002 = vadd.f32 %v5963, %v5980
        %v6003 = vadd.f32 %v5964, %v5980
        %v6004 = vadd.f32 %v5965, %v5980
        %v6005 = vadd.f32 %v5966, %v5980
        %v6006 = vadd.f32 %v5967, %v5980
        %v6007 = vadd.f32 %v5968, %v5980
        %v6008 = vadd.f32 %v5969, %v5980
        %v6009 = vadd.f32 %v5970, %v5980
        %v6010 = vadd.f32 %v5971, %v5980
        %v6011 = vadd.f32 %v5972, %v5980
        %v6012 = vadd.f32 %v5973, %v5980
        %v6013 = vadd.f32 %v5974, %v5980
        %v6014 = vmax.f32 %v5982, 0.0
        %v6015 = vmax.f32 %v5983, 0.0
        %v6016 = vmax.f32 %v5984, 0.0
        %v6017 = vmax.f32 %v5985, 0.0
        %v6018 = vmax.f32 %v5986, 0.0
        %v6019 = vmax.f32 %v5987, 0.0
        %v6020 = vmax.f32 %v5988, 0.0
        %v6021 = vmax.f32 %v5989, 0.0
        %v6022 = vmax.f32 %v5990, 0.0
        %v6023 = vmax.f32 %v5991, 0.0
        %v6024 = vmax.f32 %v5992, 0.0
        %v6025 = vmax.f32 %v5993, 0.0
        %v6026 = vmax.f32 %v5994, 0.0
        %v6027 = vmax.f32 %v5995, 0.0
        %v6028 = vmax.f32 %v5996, 0.0
        %v6029 = vmax.f32 %v5997, 0.0
        %v6030 = vmax.f32 %v5998, 0.0
        %v6031 = vmax.f32 %v5999, 0.0
        %v6032 = vmax.f32 %v6000, 0.0
        %v6033 = vmax.f32 %v6001, 0.0
        %v6034 = vmax.f32 %v6002, 0.0
        %v6035 = vmax.f32 %v6003, 0.0
        %v6036 = vmax.f32 %v6004, 0.0
        %v6037 = vmax.f32 %v6005, 0.0
        %v6038 = vmax.f32 %v6006, 0.0
        %v6039 = vmax.f32 %v6007, 0.0
        %v6040 = vmax.f32 %v6008, 0.0
        %v6041 = vmax.f32 %v6009, 0.0
        %v6042 = vmax.f32 %v6010, 0.0
        %v6043 = vmax.f32 %v6011, 0.0
        %v6044 = vmax.f32 %v6012, 0.0
        %v6045 = vmax.f32 %v6013, 0.0
        %v6046 = vpack.c.bf16 %v6015, %v6014
        %v6047 = vpack.c.bf16 %v6017, %v6016
        %v6048 = vpack.c.bf16 %v6019, %v6018
        %v6049 = vpack.c.bf16 %v6021, %v6020
        %v6050 = vpack.c.bf16 %v6023, %v6022
        %v6051 = vpack.c.bf16 %v6025, %v6024
        %v6052 = vpack.c.bf16 %v6027, %v6026
        %v6053 = vpack.c.bf16 %v6029, %v6028
        %v6054 = vpack.c.bf16 %v6031, %v6030
        %v6055 = vpack.c.bf16 %v6033, %v6032
        %v6056 = vpack.c.bf16 %v6035, %v6034
        %v6057 = vpack.c.bf16 %v6037, %v6036
        %v6058 = vpack.c.bf16 %v6039, %v6038
        %v6059 = vpack.c.bf16 %v6041, %v6040
        %v6060 = vpack.c.bf16 %v6043, %v6042
        %v6061 = vpack.c.bf16 %v6045, %v6044
        %v6062 = vld [vmem:[#allocation9] sm:$0xf]
        %v6063 = vld [vmem:[#allocation9 + $0x4] sm:$0xf]
        %v6064 = vld [vmem:[#allocation9 + $0x8] sm:$0xf]
        %v6065 = vld [vmem:[#allocation9 + $0xc] sm:$0xf]
        %v6066 = vld [vmem:[#allocation9 + $0x10] sm:$0xf]
        %v6067 = vld [vmem:[#allocation9 + $0x14] sm:$0xf]
        %v6068 = vld [vmem:[#allocation9 + $0x18] sm:$0xf]
        %v6069 = vld [vmem:[#allocation9 + $0x1c] sm:$0xf]
        %v6070 = vld [vmem:[#allocation9 + $0x20] sm:$0xf]
        %v6071 = vld [vmem:[#allocation9 + $0x24] sm:$0xf]
        %v6072 = vld [vmem:[#allocation9 + $0x28] sm:$0xf]
        %v6073 = vld [vmem:[#allocation9 + $0x2c] sm:$0xf]
        %v6074 = vld [vmem:[#allocation9 + $0x30] sm:$0xf]
        %v6075 = vld [vmem:[#allocation9 + $0x34] sm:$0xf]
        %v6076 = vld [vmem:[#allocation9 + $0x38] sm:$0xf]
        %v6077 = vld [vmem:[#allocation9 + $0x3c] sm:$0xf]
        %v6078 = vld [vmem:[%s6] sm:$0x1]
        %v6080 = vlaneseq
        %v6081 = vshrl.u32 %v6080, 7
        %v6082 = vsub.s32 0, %v6081
        %v6083 = vrot.slane %v6078, %v6082
        %v6101 = vunpack.c.l.b16 %v6062
        %v6102 = vunpack.c.l.b16 %v6063
        %v6103 = vunpack.c.l.b16 %v6064
        %v6104 = vunpack.c.l.b16 %v6065
        %v6105 = vunpack.c.l.b16 %v6066
        %v6106 = vunpack.c.l.b16 %v6067
        %v6107 = vunpack.c.l.b16 %v6068
        %v6108 = vunpack.c.l.b16 %v6069
        %v6109 = vunpack.c.l.b16 %v6070
        %v6110 = vunpack.c.l.b16 %v6071
        %v6111 = vunpack.c.l.b16 %v6072
        %v6112 = vunpack.c.l.b16 %v6073
        %v6113 = vunpack.c.l.b16 %v6074
        %v6114 = vunpack.c.l.b16 %v6075
        %v6115 = vunpack.c.l.b16 %v6076
        %v6116 = vunpack.c.l.b16 %v6077
        %v6117 = vpack.c.b16 %v6102, %v6101
        %v6118 = vpack.c.b16 %v6104, %v6103
        %v6119 = vpack.c.b16 %v6106, %v6105
        %v6120 = vpack.c.b16 %v6108, %v6107
        %v6121 = vpack.c.b16 %v6110, %v6109
        %v6122 = vpack.c.b16 %v6112, %v6111
        %v6123 = vpack.c.b16 %v6114, %v6113
        %v6124 = vpack.c.b16 %v6116, %v6115
        %6133 = vmatprep.subr.bf16.mxu0 0
        %6134 = vmatpush1.bf16.msra.mxu0 %v6124
        %6135 = vmatprep.subr.bf16.mxu0 0
        %6136 = vmatpush1.bf16.msra.mxu0 %v6123
        %6137 = vmatprep.subr.bf16.mxu0 0
        %6138 = vmatpush1.bf16.msra.mxu0 %v6122
        %6139 = vmatprep.subr.bf16.mxu0 0
        %6140 = vmatpush1.bf16.msra.mxu0 %v6121
        %6141 = vmatprep.subr.bf16.mxu0 0
        %6142 = vmatpush1.bf16.msra.mxu0 %v6120
        %6143 = vmatprep.subr.bf16.mxu0 0
        %6144 = vmatpush1.bf16.msra.mxu0 %v6119
        %6145 = vmatprep.subr.bf16.mxu0 0
        %6146 = vmatpush1.bf16.msra.mxu0 %v6118
        %6147 = vmatprep.subr.bf16.mxu0 0
        %6148 = vmatpush1.bf16.msra.mxu0 %v6117
        %6149 = vmatprep.subr.bf16.mxu0 0
        %6150 = vmatpush2.bf16.msra.mxu0 0
        %6151 = vmatprep.subr.bf16.mxu0 0
        %6152 = vmatpush2.bf16.msra.mxu0 0
        %6153 = vmatprep.subr.bf16.mxu0 0
        %6154 = vmatpush2.bf16.msra.mxu0 0
        %6155 = vmatprep.subr.bf16.mxu0 0
        %6156 = vmatpush2.bf16.msra.mxu0 0
        %6157 = vmatprep.subr.bf16.mxu0 0
        %6158 = vmatpush2.bf16.msra.mxu0 0
        %6159 = vmatprep.subr.bf16.mxu0 0
        %6160 = vmatpush2.bf16.msra.mxu0 0
        %6161 = vmatprep.subr.bf16.mxu0 0
        %6162 = vmatpush2.bf16.msra.mxu0 0
        %6163 = vmatprep.subr.bf16.mxu0 0
        %6164 = vmatpush2.bf16.msra.mxu0 0
        %6165 = vmatprep.mubr.bf16.mxu0 0
        %6166 = vmatmul.mubr.bf16.gmra.mxu0 %v6046
        %v6167 = vpop.f32.mrf.mxu0
        %v6168 = vadd.f32 %v6083, %v6167
        %v6169 = vpop.f32.mrf.mxu0
        %v6170 = vpop.f32.mrf.mxu0
        %v6171 = vadd.f32 %v6083, %v6170
        %v6172 = vpop.f32.mrf.mxu0
        %6173 = vmatprep.mubr.bf16.mxu0 0
        %6174 = vmatmul.mubr.bf16.gmra.mxu0 %v6047
        %v6175 = vpop.f32.mrf.mxu0
        %v6176 = vadd.f32 %v6083, %v6175
        %v6177 = vpop.f32.mrf.mxu0
        %v6178 = vpop.f32.mrf.mxu0
        %v6179 = vadd.f32 %v6083, %v6178
        %v6180 = vpop.f32.mrf.mxu0
        %6181 = vmatprep.mubr.bf16.mxu0 0
        %6182 = vmatmul.mubr.bf16.gmra.mxu0 %v6048
        %v6183 = vpop.f32.mrf.mxu0
        %v6184 = vadd.f32 %v6083, %v6183
        %v6185 = vpop.f32.mrf.mxu0
        %v6186 = vpop.f32.mrf.mxu0
        %v6187 = vadd.f32 %v6083, %v6186
        %v6188 = vpop.f32.mrf.mxu0
        %6189 = vmatprep.mubr.bf16.mxu0 0
        %6190 = vmatmul.mubr.bf16.gmra.mxu0 %v6049
        %v6191 = vpop.f32.mrf.mxu0
        %v6192 = vadd.f32 %v6083, %v6191
        %v6193 = vpop.f32.mrf.mxu0
        %v6194 = vpop.f32.mrf.mxu0
        %v6195 = vadd.f32 %v6083, %v6194
        %v6196 = vpop.f32.mrf.mxu0
        %6197 = vmatprep.mubr.bf16.mxu0 0
        %6198 = vmatmul.mubr.bf16.gmra.mxu0 %v6050
        %v6199 = vpop.f32.mrf.mxu0
        %v6200 = vadd.f32 %v6083, %v6199
        %v6201 = vpop.f32.mrf.mxu0
        %v6202 = vpop.f32.mrf.mxu0
        %v6203 = vadd.f32 %v6083, %v6202
        %v6204 = vpop.f32.mrf.mxu0
        %6205 = vmatprep.mubr.bf16.mxu0 0
        %6206 = vmatmul.mubr.bf16.gmra.mxu0 %v6051
        %v6207 = vpop.f32.mrf.mxu0
        %v6208 = vadd.f32 %v6083, %v6207
        %v6209 = vpop.f32.mrf.mxu0
        %v6210 = vpop.f32.mrf.mxu0
        %v6211 = vadd.f32 %v6083, %v6210
        %v6212 = vpop.f32.mrf.mxu0
        %6213 = vmatprep.mubr.bf16.mxu0 0
        %6214 = vmatmul.mubr.bf16.gmra.mxu0 %v6052
        %v6215 = vpop.f32.mrf.mxu0
        %v6216 = vadd.f32 %v6083, %v6215
        %v6217 = vpop.f32.mrf.mxu0
        %v6218 = vpop.f32.mrf.mxu0
        %v6219 = vadd.f32 %v6083, %v6218
        %v6220 = vpop.f32.mrf.mxu0
        %6221 = vmatprep.mubr.bf16.mxu0 0
        %6222 = vmatmul.mubr.bf16.gmra.mxu0 %v6053
        %v6223 = vpop.f32.mrf.mxu0
        %v6224 = vadd.f32 %v6083, %v6223
        %v6225 = vpop.f32.mrf.mxu0
        %v6226 = vpop.f32.mrf.mxu0
        %v6227 = vadd.f32 %v6083, %v6226
        %v6228 = vpop.f32.mrf.mxu0
        %6229 = vmatprep.mubr.bf16.mxu0 0
        %6230 = vmatmul.mubr.bf16.gmra.mxu0 %v6054
        %v6231 = vpop.f32.mrf.mxu0
        %v6232 = vadd.f32 %v6083, %v6231
        %v6233 = vpop.f32.mrf.mxu0
        %v6234 = vpop.f32.mrf.mxu0
        %v6235 = vadd.f32 %v6083, %v6234
        %v6236 = vpop.f32.mrf.mxu0
        %6237 = vmatprep.mubr.bf16.mxu0 0
        %6238 = vmatmul.mubr.bf16.gmra.mxu0 %v6055
        %v6239 = vpop.f32.mrf.mxu0
        %v6240 = vadd.f32 %v6083, %v6239
        %v6241 = vpop.f32.mrf.mxu0
        %v6242 = vpop.f32.mrf.mxu0
        %v6243 = vadd.f32 %v6083, %v6242
        %v6244 = vpop.f32.mrf.mxu0
        %6245 = vmatprep.mubr.bf16.mxu0 0
        %6246 = vmatmul.mubr.bf16.gmra.mxu0 %v6056
        %v6247 = vpop.f32.mrf.mxu0
        %v6248 = vadd.f32 %v6083, %v6247
        %v6249 = vpop.f32.mrf.mxu0
        %v6250 = vpop.f32.mrf.mxu0
        %v6251 = vadd.f32 %v6083, %v6250
        %v6252 = vpop.f32.mrf.mxu0
        %6253 = vmatprep.mubr.bf16.mxu0 0
        %6254 = vmatmul.mubr.bf16.gmra.mxu0 %v6057
        %v6255 = vpop.f32.mrf.mxu0
        %v6256 = vadd.f32 %v6083, %v6255
        %v6257 = vpop.f32.mrf.mxu0
        %v6258 = vpop.f32.mrf.mxu0
        %v6259 = vadd.f32 %v6083, %v6258
        %v6260 = vpop.f32.mrf.mxu0
        %6261 = vmatprep.mubr.bf16.mxu0 0
        %6262 = vmatmul.mubr.bf16.gmra.mxu0 %v6058
        %v6263 = vpop.f32.mrf.mxu0
        %v6264 = vadd.f32 %v6083, %v6263
        %v6265 = vpop.f32.mrf.mxu0
        %v6266 = vpop.f32.mrf.mxu0
        %v6267 = vadd.f32 %v6083, %v6266
        %v6268 = vpop.f32.mrf.mxu0
        %6269 = vmatprep.mubr.bf16.mxu0 0
        %6270 = vmatmul.mubr.bf16.gmra.mxu0 %v6059
        %v6271 = vpop.f32.mrf.mxu0
        %v6272 = vadd.f32 %v6083, %v6271
        %v6273 = vpop.f32.mrf.mxu0
        %v6274 = vpop.f32.mrf.mxu0
        %v6275 = vadd.f32 %v6083, %v6274
        %v6276 = vpop.f32.mrf.mxu0
        %6277 = vmatprep.mubr.bf16.mxu0 0
        %6278 = vmatmul.mubr.bf16.gmra.mxu0 %v6060
        %v6279 = vpop.f32.mrf.mxu0
        %v6280 = vadd.f32 %v6083, %v6279
        %v6281 = vpop.f32.mrf.mxu0
        %v6282 = vpop.f32.mrf.mxu0
        %v6283 = vadd.f32 %v6083, %v6282
        %v6284 = vpop.f32.mrf.mxu0
        %6285 = vmatprep.mubr.bf16.mxu0 0
        %6286 = vmatmul.mubr.bf16.gmra.mxu0 %v6061
        %v6287 = vpop.f32.mrf.mxu0
        %v6288 = vadd.f32 %v6083, %v6287
        %v6289 = vpop.f32.mrf.mxu0
        %v6290 = vpop.f32.mrf.mxu0
        %v6291 = vadd.f32 %v6083, %v6290
        %v6292 = vpop.f32.mrf.mxu0
        %6293 = vdwg.mxu0
        %v6294 = vunpack.c.l.bf16 %v342
        %v6295 = vunpack.c.l.bf16 %v343
        %v6296 = vunpack.c.l.bf16 %v344
        %v6297 = vunpack.c.l.bf16 %v345
        %v6298 = vunpack.c.l.bf16 %v346
        %v6299 = vunpack.c.l.bf16 %v347
        %v6300 = vunpack.c.l.bf16 %v348
        %v6301 = vunpack.c.l.bf16 %v349
        %v6302 = vunpack.c.l.bf16 %v350
        %v6303 = vunpack.c.l.bf16 %v351
        %v6304 = vunpack.c.l.bf16 %v352
        %v6305 = vunpack.c.l.bf16 %v353
        %v6306 = vunpack.c.l.bf16 %v354
        %v6307 = vunpack.c.l.bf16 %v355
        %v6308 = vunpack.c.l.bf16 %v356
        %v6309 = vunpack.c.l.bf16 %v357
        %v6310 = vunpack.c.l.bf16 %v358
        %v6311 = vunpack.c.l.bf16 %v359
        %v6312 = vunpack.c.l.bf16 %v360
        %v6313 = vunpack.c.l.bf16 %v361
        %v6314 = vunpack.c.l.bf16 %v362
        %v6315 = vunpack.c.l.bf16 %v363
        %v6316 = vunpack.c.l.bf16 %v364
        %v6317 = vunpack.c.l.bf16 %v365
        %v6318 = vunpack.c.l.bf16 %v366
        %v6319 = vunpack.c.l.bf16 %v367
        %v6320 = vunpack.c.l.bf16 %v368
        %v6321 = vunpack.c.l.bf16 %v369
        %v6322 = vunpack.c.l.bf16 %v370
        %v6323 = vunpack.c.l.bf16 %v371
        %v6324 = vunpack.c.l.bf16 %v372
        %v6325 = vunpack.c.l.bf16 %v373
        %v6326 = vadd.f32 %v6168, %v6294
        %v6327 = vadd.f32 %v6171, %v6295
        %v6328 = vadd.f32 %v6176, %v6296
        %v6329 = vadd.f32 %v6179, %v6297
        %v6330 = vadd.f32 %v6184, %v6298
        %v6331 = vadd.f32 %v6187, %v6299
        %v6332 = vadd.f32 %v6192, %v6300
        %v6333 = vadd.f32 %v6195, %v6301
        %v6334 = vadd.f32 %v6200, %v6302
        %v6335 = vadd.f32 %v6203, %v6303
        %v6336 = vadd.f32 %v6208, %v6304
        %v6337 = vadd.f32 %v6211, %v6305
        %v6338 = vadd.f32 %v6216, %v6306
        %v6339 = vadd.f32 %v6219, %v6307
        %v6340 = vadd.f32 %v6224, %v6308
        %v6341 = vadd.f32 %v6227, %v6309
        %v6342 = vadd.f32 %v6232, %v6310
        %v6343 = vadd.f32 %v6235, %v6311
        %v6344 = vadd.f32 %v6240, %v6312
        %v6345 = vadd.f32 %v6243, %v6313
        %v6346 = vadd.f32 %v6248, %v6314
        %v6347 = vadd.f32 %v6251, %v6315
        %v6348 = vadd.f32 %v6256, %v6316
        %v6349 = vadd.f32 %v6259, %v6317
        %v6350 = vadd.f32 %v6264, %v6318
        %v6351 = vadd.f32 %v6267, %v6319
        %v6352 = vadd.f32 %v6272, %v6320
        %v6353 = vadd.f32 %v6275, %v6321
        %v6354 = vadd.f32 %v6280, %v6322
        %v6355 = vadd.f32 %v6283, %v6323
        %v6356 = vadd.f32 %v6288, %v6324
        %v6357 = vadd.f32 %v6291, %v6325
        %v6358 = vmax.f32 %v6326, 0.0
        %v6359 = vmax.f32 %v6327, 0.0
        %v6360 = vmax.f32 %v6328, 0.0
        %v6361 = vmax.f32 %v6329, 0.0
        %v6362 = vmax.f32 %v6330, 0.0
        %v6363 = vmax.f32 %v6331, 0.0
        %v6364 = vmax.f32 %v6332, 0.0
        %v6365 = vmax.f32 %v6333, 0.0
        %v6366 = vmax.f32 %v6334, 0.0
        %v6367 = vmax.f32 %v6335, 0.0
        %v6368 = vmax.f32 %v6336, 0.0
        %v6369 = vmax.f32 %v6337, 0.0
        %v6370 = vmax.f32 %v6338, 0.0
        %v6371 = vmax.f32 %v6339, 0.0
        %v6372 = vmax.f32 %v6340, 0.0
        %v6373 = vmax.f32 %v6341, 0.0
        %v6374 = vmax.f32 %v6342, 0.0
        %v6375 = vmax.f32 %v6343, 0.0
        %v6376 = vmax.f32 %v6344, 0.0
        %v6377 = vmax.f32 %v6345, 0.0
        %v6378 = vmax.f32 %v6346, 0.0
        %v6379 = vmax.f32 %v6347, 0.0
        %v6380 = vmax.f32 %v6348, 0.0
        %v6381 = vmax.f32 %v6349, 0.0
        %v6382 = vmax.f32 %v6350, 0.0
        %v6383 = vmax.f32 %v6351, 0.0
        %v6384 = vmax.f32 %v6352, 0.0
        %v6385 = vmax.f32 %v6353, 0.0
        %v6386 = vmax.f32 %v6354, 0.0
        %v6387 = vmax.f32 %v6355, 0.0
        %v6388 = vmax.f32 %v6356, 0.0
        %v6389 = vmax.f32 %v6357, 0.0
        %v6390 = vpack.c.bf16 %v6359, %v6358
        %v6391 = vpack.c.bf16 %v6361, %v6360
        %v6392 = vpack.c.bf16 %v6363, %v6362
        %v6393 = vpack.c.bf16 %v6365, %v6364
        %v6394 = vpack.c.bf16 %v6367, %v6366
        %v6395 = vpack.c.bf16 %v6369, %v6368
        %v6396 = vpack.c.bf16 %v6371, %v6370
        %v6397 = vpack.c.bf16 %v6373, %v6372
        %v6398 = vpack.c.bf16 %v6375, %v6374
        %v6399 = vpack.c.bf16 %v6377, %v6376
        %v6400 = vpack.c.bf16 %v6379, %v6378
        %v6401 = vpack.c.bf16 %v6381, %v6380
        %v6402 = vpack.c.bf16 %v6383, %v6382
        %v6403 = vpack.c.bf16 %v6385, %v6384
        %v6404 = vpack.c.bf16 %v6387, %v6386
        %v6405 = vpack.c.bf16 %v6389, %v6388
        %v6422 = vunpack.c.l.b16 %v6390
        %v6423 = vunpack.c.h.b16 %v6390
        %v6424 = vunpack.c.l.b16 %v6391
        %v6425 = vunpack.c.h.b16 %v6391
        %v6426 = vunpack.c.l.b16 %v6392
        %v6427 = vunpack.c.h.b16 %v6392
        %v6428 = vunpack.c.l.b16 %v6393
        %v6429 = vunpack.c.h.b16 %v6393
        %v6430 = vunpack.c.l.b16 %v6394
        %v6431 = vunpack.c.h.b16 %v6394
        %v6432 = vunpack.c.l.b16 %v6395
        %v6433 = vunpack.c.h.b16 %v6395
        %v6434 = vunpack.c.l.b16 %v6396
        %v6435 = vunpack.c.h.b16 %v6396
        %v6436 = vunpack.c.l.b16 %v6397
        %v6437 = vunpack.c.h.b16 %v6397
        %v6438 = vunpack.c.l.b16 %v6398
        %v6439 = vunpack.c.h.b16 %v6398
        %v6440 = vunpack.c.l.b16 %v6399
        %v6441 = vunpack.c.h.b16 %v6399
        %v6442 = vunpack.c.l.b16 %v6400
        %v6443 = vunpack.c.h.b16 %v6400
        %v6444 = vunpack.c.l.b16 %v6401
        %v6445 = vunpack.c.h.b16 %v6401
        %v6446 = vunpack.c.l.b16 %v6402
        %v6447 = vunpack.c.h.b16 %v6402
        %v6448 = vunpack.c.l.b16 %v6403
        %v6449 = vunpack.c.h.b16 %v6403
        %v6450 = vunpack.c.l.b16 %v6404
        %v6451 = vunpack.c.h.b16 %v6404
        %v6452 = vunpack.c.l.b16 %v6405
        %v6453 = vunpack.c.h.b16 %v6405
        %v6454 = vpack.c.b16 %v6422, %v6422
        %v6455 = vpack.c.b16 %v6423, %v6423
        %v6456 = vpack.c.b16 %v6424, %v6424
        %v6457 = vpack.c.b16 %v6425, %v6425
        %v6458 = vpack.c.b16 %v6426, %v6426
        %v6459 = vpack.c.b16 %v6427, %v6427
        %v6460 = vpack.c.b16 %v6428, %v6428
        %v6461 = vpack.c.b16 %v6429, %v6429
        %v6462 = vpack.c.b16 %v6430, %v6430
        %v6463 = vpack.c.b16 %v6431, %v6431
        %v6464 = vpack.c.b16 %v6432, %v6432
        %v6465 = vpack.c.b16 %v6433, %v6433
        %v6466 = vpack.c.b16 %v6434, %v6434
        %v6467 = vpack.c.b16 %v6435, %v6435
        %v6468 = vpack.c.b16 %v6436, %v6436
        %v6469 = vpack.c.b16 %v6437, %v6437
        %v6470 = vpack.c.b16 %v6438, %v6438
        %v6471 = vpack.c.b16 %v6439, %v6439
        %v6472 = vpack.c.b16 %v6440, %v6440
        %v6473 = vpack.c.b16 %v6441, %v6441
        %v6474 = vpack.c.b16 %v6442, %v6442
        %v6475 = vpack.c.b16 %v6443, %v6443
        %v6476 = vpack.c.b16 %v6444, %v6444
        %v6477 = vpack.c.b16 %v6445, %v6445
        %v6478 = vpack.c.b16 %v6446, %v6446
        %v6479 = vpack.c.b16 %v6447, %v6447
        %v6480 = vpack.c.b16 %v6448, %v6448
        %v6481 = vpack.c.b16 %v6449, %v6449
        %v6482 = vpack.c.b16 %v6450, %v6450
        %v6483 = vpack.c.b16 %v6451, %v6451
        %v6484 = vpack.c.b16 %v6452, %v6452
        %v6485 = vpack.c.b16 %v6453, %v6453
        %6518 = vst [vmem:[%s340] sm:$0xf] %v6454
        %6519 = vst [vmem:[%s340 + $0x4] sm:$0xf] %v6455
        %6520 = vst [vmem:[%s340 + $0x8] sm:$0xf] %v6456
        %6521 = vst [vmem:[%s340 + $0xc] sm:$0xf] %v6457
        %6522 = vst [vmem:[%s340 + $0x10] sm:$0xf] %v6458
        %6523 = vst [vmem:[%s340 + $0x14] sm:$0xf] %v6459
        %6524 = vst [vmem:[%s340 + $0x18] sm:$0xf] %v6460
        %6525 = vst [vmem:[%s340 + $0x1c] sm:$0xf] %v6461
        %6526 = vst [vmem:[%s340 + $0x20] sm:$0xf] %v6462
        %6527 = vst [vmem:[%s340 + $0x24] sm:$0xf] %v6463
        %6528 = vst [vmem:[%s340 + $0x28] sm:$0xf] %v6464
        %6529 = vst [vmem:[%s340 + $0x2c] sm:$0xf] %v6465
        %6530 = vst [vmem:[%s340 + $0x30] sm:$0xf] %v6466
        %6531 = vst [vmem:[%s340 + $0x34] sm:$0xf] %v6467
        %6532 = vst [vmem:[%s340 + $0x38] sm:$0xf] %v6468
        %6533 = vst [vmem:[%s340 + $0x3c] sm:$0xf] %v6469
        %6534 = vst [vmem:[%s340 + $0x40] sm:$0xf] %v6470
        %6535 = vst [vmem:[%s340 + $0x44] sm:$0xf] %v6471
        %6536 = vst [vmem:[%s340 + $0x48] sm:$0xf] %v6472
        %6537 = vst [vmem:[%s340 + $0x4c] sm:$0xf] %v6473
        %6538 = vst [vmem:[%s340 + $0x50] sm:$0xf] %v6474
        %6539 = vst [vmem:[%s340 + $0x54] sm:$0xf] %v6475
        %6540 = vst [vmem:[%s340 + $0x58] sm:$0xf] %v6476
        %6541 = vst [vmem:[%s340 + $0x5c] sm:$0xf] %v6477
        %6542 = vst [vmem:[%s340 + $0x60] sm:$0xf] %v6478
        %6543 = vst [vmem:[%s340 + $0x64] sm:$0xf] %v6479
        %6544 = vst [vmem:[%s340 + $0x68] sm:$0xf] %v6480
        %6545 = vst [vmem:[%s340 + $0x6c] sm:$0xf] %v6481
        %6546 = vst [vmem:[%s340 + $0x70] sm:$0xf] %v6482
        %6547 = vst [vmem:[%s340 + $0x74] sm:$0xf] %v6483
        %6548 = vst [vmem:[%s340 + $0x78] sm:$0xf] %v6484
        %6549 = vst [vmem:[%s340 + $0x7c] sm:$0xf] %v6485
        %s6550 = sand.u32 %s186, 1
        %s6551 = scalar_lea.sflag [#allocation5], %s6550
        %s6552 = sand.u32 %s186, 1
        %s6553 = smul.addr %s6552, 128
        %s6554 = scalar_lea.vmem [#allocation11], %s6553
        // Predicated region
        $region65: #{tpu_custom_call.1} parent=47 // pred_check
          %p6555 = pneg %p196
        $region66: #{tpu_custom_call.1} parent=47 // pred_check_branch
          %6557 = sbr.rel (%p6555) target = $region68
        $region67: #{tpu_custom_call.1} parent=47 // pred_region
          %s6559 = ssub.s32 2048, 2048
          %6560 = vsyncadd %s6551, %s6559
          %s6561 = smul.addr %s26, 32
          %s6562 = smul.addr %s6561, 64
          %s6563 = scalar_lea.hbm %s7, %s6562
          %s6564 = sshll.u32 %s6554, 4
          %s6565 = int_to_ptr.vmem [resolvable:$true] %s6564
          %6570 = dma.vmem_to_hbm [thread:$0]  %s6565, 2048, %s6563, %s6551, 64, 64, 4
        $region68: #{tpu_custom_call.1} parent=47 // pred_fallthru
          _
      $region48: #{tpu_custom_call.1} parent=5 // pred_fallthru
        _
      %p6571 = scmp.le.s32.totalorder 2, %s21
      // Predicated region
      $region69: #{tpu_custom_call.1} parent=5 // pred_check
        %p6572 = pneg %p6571
      $region70: #{tpu_custom_call.1} parent=5 // pred_check_branch
        %6574 = sbr.rel (%p6572) target = $region72
      $region71: #{tpu_custom_call.1} parent=5 // pred_region
        %s6575 = ssub.s32 %s21, 2
        // Predicated region
        $region73: #{tpu_custom_call.1} parent=71 // pred_check
          %p6576 = pneg %p202
        $region74: #{tpu_custom_call.1} parent=71 // pred_check_branch
          %6578 = sbr.rel (%p6576) target = $region76
        $region75: #{tpu_custom_call.1} parent=71 // pred_region
          %s6579 = sand.u32 %s187, 1
          %s6580 = scalar_lea.sflag [#allocation5], %s6579
          %s6581 = sand.u32 %s187, 1
          %s6582 = smul.addr %s6581, 128
          %s6583 = scalar_lea.vmem [#allocation11], %s6582
          %6584 = dma.done %s6580, 2048
        $region76: #{tpu_custom_call.1} parent=71 // pred_fallthru
          _
      $region72: #{tpu_custom_call.1} parent=5 // pred_fallthru
        _
    $region6: #{tpu_custom_call.1} parent=1 // loop_footer
      %s25 = sadd.s32 1, %s21
    $region7: #{tpu_custom_call.1} parent=1 // loop_footer_branch
      %20 = sbr.rel target = $region3
    $region8: #{tpu_custom_call.1} parent=1 // loop_exit
      _
    %6585 = vsyncpa [#allocation4], 1
    %s6586 = scalar_lea.sflag [#allocation4], 1
    %6587 = vsyncpa %s6586, 1
    %6588 = vsyncpa [#allocation7], 1
    %6589 = vsyncpa [#allocation10], 1
    %6590 = vsyncpa [#allocation5], 1
    %s6591 = scalar_lea.sflag [#allocation5], 1
    %6592 = vsyncpa %s6591, 1

</llo_original>
